<compile_context>
chip_gen: v7x
topology: tpu7x:2x2x1
jax: 0.10.0
libtpu: 0.0.40
codegen_flags: <defaults>
</compile_context>

<pallas_src>
import functools

import jax
import jax.numpy as jnp
from jax.experimental import pallas as pl
from jax.experimental.pallas import tpu as pltpu

DILATIONS = (1, 2, 4, 8, 16, 32, 64, 128, 256)


# -----------------------------------------------------------------------------
# Fused forward kernel (built per static shape, cached)
# -----------------------------------------------------------------------------
@functools.lru_cache(maxsize=None)
def _build_fused_kernel(B, T, FC, C, PADL, dilations):
    """Refs (in order):
      x_ref   : (B*(PADL+T), FC)  left-zero-padded input, time-major rows per batch
      w0m_ref : (2, FC, C)        layer-0 main conv taps  (tap, Cin, Cout)
      w0g_ref : (2, FC, C)        layer-0 gate conv taps
      wm_ref  : (2*(L-1), C, C)   layers 1..L-1 main taps, packed as [2*layer + tap]
      wg_ref  : (2*(L-1), C, C)   layers 1..L-1 gate taps
      bm_ref  : (L, C)            main biases
      bg_ref  : (L, C)            gate biases
      wj_ref  : (1, C)            judge weight
      bj_ref  : (1, 1)            judge bias
      out_ref : (B*T, 1)          judge(latent) for every timestep
      act_ref : (PADL+T, C)       VMEM scratch: running activation + causal zero pad
    """
    n_layers = len(dilations)
    span = PADL + T

    def kernel(x_ref, w0m_ref, w0g_ref, wm_ref, wg_ref, bm_ref, bg_ref,
               wj_ref, bj_ref, out_ref, act_ref):
        # Zero the scratch once: rows [0, PADL) stay zero forever (causal pad).
        act_ref[...] = jnp.zeros((span, C), jnp.float32)
        wj = wj_ref[...]            # (1, C)
        bj = bj_ref[...]            # (1, 1)

        for b in range(B):          # B is tiny -> fully unrolled, 2-D math only
            xbase = b * span
            latent = jnp.zeros((T, C), jnp.float32)

            for i, d in enumerate(dilations):
                if i == 0:
                    src_ref, src_base, cin = x_ref, xbase, FC
                    wm0, wm1 = w0m_ref[0, :, :], w0m_ref[1, :, :]
                    wg0, wg1 = w0g_ref[0, :, :], w0g_ref[1, :, :]
                else:
                    src_ref, src_base, cin = act_ref, 0, C
                    wm0, wm1 = wm_ref[2 * (i - 1), :, :], wm_ref[2 * (i - 1) + 1, :, :]
                    wg0, wg1 = wg_ref[2 * (i - 1), :, :], wg_ref[2 * (i - 1) + 1, :, :]
                b_m = bm_ref[pl.ds(i, 1), :]                      # (1, C)
                b_g = bg_ref[pl.ds(i, 1), :]

                # current tap (x[t]) and causal dilated tap (x[t-d]) as VMEM slices
                cur = src_ref[pl.ds(src_base + PADL, T), :]       # (T, cin)
                lin_m = jnp.dot(cur, wm1, preferred_element_type=jnp.float32) + b_m
                lin_g = jnp.dot(cur, wg1, preferred_element_type=jnp.float32) + b_g
                if d < T:
                    sh = src_ref[pl.ds(src_base + PADL - d, T), :]  # zeros for t < d
                    lin_m = lin_m + jnp.dot(sh, wm0, preferred_element_type=jnp.float32)
                    lin_g = lin_g + jnp.dot(sh, wg0, preferred_element_type=jnp.float32)
                # d >= T: the shifted tap reads only the zero pad -> skipped statically

                gate = 1.0 / (1.0 + jnp.exp(-lin_g))              # sigmoid (EUP)
                z = jnp.tanh(lin_m) * gate                        # gated activation
                latent = latent + z                               # features sum

                if i + 1 < n_layers:                              # residual iff channels match
                    new = z + cur if cin == C else z
                    act_ref[pl.ds(PADL, T), :] = new

            # judge: 1x1 conv with Cout=1 as multiply + lane reduction (no MXU pass)
            jr = jnp.sum(latent * wj, axis=1, keepdims=True) + bj  # (T, 1)
            out_ref[pl.ds(b * T, T), :] = jr

    return kernel


# -----------------------------------------------------------------------------
# Host-side packing (runs once inside the single jit)
# -----------------------------------------------------------------------------
def _pack_params(params):
    def taps(w):  # PyTorch (Cout, Cin, K) -> (K, Cin, Cout) so matmul is (T,Cin)@(Cin,Cout)
        return jnp.transpose(w, (2, 1, 0)).astype(jnp.float32)

    C = params["main_w"][0].shape[0]
    w0m = taps(params["main_w"][0])
    w0g = taps(params["gate_w"][0])
    wm = jnp.stack([taps(w) for w in params["main_w"][1:]]).reshape(-1, C, C)
    wg = jnp.stack([taps(w) for w in params["gate_w"][1:]]).reshape(-1, C, C)
    bm = jnp.stack(params["main_b"]).astype(jnp.float32)
    bg = jnp.stack(params["gate_b"]).astype(jnp.float32)
    wj = params["judge_w"].astype(jnp.float32).reshape(1, C)
    bj = params["judge_b"].astype(jnp.float32).reshape(1, 1)
    return w0m, w0g, wm, wg, bm, bg, wj, bj


# -----------------------------------------------------------------------------
# Forward pass (ARDiscriminator.forward)
# -----------------------------------------------------------------------------
def ar_discriminator_forward(params, x, conditioning=None, *, frames):
    """x: (B, feature_channels, time) NCW.  Returns ([], judgement)."""
    del conditioning  # unused by the reference forward
    B, FC, T = x.shape
    C = params["main_w"][0].shape[0]
    P = T - frames + 1
    PADL = max([d for d in DILATIONS if d < T] + [0])

    # one-time glue: NCW -> time-major rows per batch with a causal zero pad
    xt = jnp.transpose(x, (0, 2, 1)).astype(jnp.float32)              # (B, T, FC)
    xp = jnp.pad(xt, ((0, 0), (PADL, 0), (0, 0))).reshape(B * (PADL + T), FC)

    packed = _pack_params(params)
    kernel = _build_fused_kernel(B, T, FC, C, PADL, DILATIONS)

    vmem = pl.BlockSpec(memory_space=pltpu.MemorySpace.VMEM)
    out = pl.pallas_call(
        kernel,
        out_shape=jax.ShapeDtypeStruct((B * T, 1), jnp.float32),
        in_specs=[vmem] * 9,
        out_specs=vmem,
        scratch_shapes=[pltpu.VMEM((PADL + T, C), jnp.float32)],
        # TODO(synk): at realistic batch/time sizes, add a grid over batch with
        # dimension_semantics=("parallel",) to use both TensorCores on v7x.
    )(xp, *packed)

    judgement = out.reshape(B, 1, T)[:, :, T - P:]                    # last `predictions`
    return [], judgement


# -----------------------------------------------------------------------------
# Deterministic parameter construction
# -----------------------------------------------------------------------------
def init_params(key, feature_channels, channels):
    C, FC = channels, feature_channels
    n = len(DILATIONS)
    keys = jax.random.split(key, 4 * n + 2)
    ki = iter(range(len(keys)))
    main_w, main_b, gate_w, gate_b = [], [], [], []
    for i in range(n):
        cin = FC if i == 0 else C
        std = 1.0 / (cin * 2) ** 0.5
        main_w.append(std * jax.random.normal(keys[next(ki)], (C, cin, 2), jnp.float32))
        main_b.append(0.1 * jax.random.normal(keys[next(ki)], (C,), jnp.float32))
        gate_w.append(std * jax.random.normal(keys[next(ki)], (C, cin, 2), jnp.float32))
        gate_b.append(0.1 * jax.random.normal(keys[next(ki)], (C,), jnp.float32))
    judge_w = (1.0 / C ** 0.5) * jax.random.normal(keys[next(ki)], (1, C, 1), jnp.float32)
    judge_b = 0.1 * jax.random.normal(keys[next(ki)], (1,), jnp.float32)
    return dict(main_w=main_w, main_b=main_b, gate_w=gate_w, gate_b=gate_b,
                judge_w=judge_w, judge_b=judge_b)


# -----------------------------------------------------------------------------
# Pure-JAX reference (mirrors the PyTorch forward with lax.conv_general_dilated)
# -----------------------------------------------------------------------------
def reference_forward(params, x, frames):
    B, FC, T = x.shape
    P = T - frames + 1
    h = x.astype(jnp.float32)
    latent = 0.0
    for i, d in enumerate(DILATIONS):
        padded = jnp.pad(h, ((0, 0), (0, 0), (d, 0)))

        def conv(inp, w, b):
            y = jax.lax.conv_general_dilated(
                inp, w.astype(jnp.float32), window_strides=(1,), padding="VALID",
                rhs_dilation=(d,), dimension_numbers=("NCH", "OIH", "NCH"),
                precision=jax.lax.Precision.HIGHEST)
            return y + b[None, :, None]

        z = jnp.tanh(conv(padded, params["main_w"][i], params["main_b"][i])) * \
            jax.nn.sigmoid(conv(padded, params["gate_w"][i], params["gate_b"][i]))
        latent = latent + z
        h = z + h if h.shape[1] == z.shape[1] else z
    j = jnp.einsum("oc,bct->bot", params["judge_w"][:, :, 0], latent,
                   precision=jax.lax.Precision.HIGHEST) + params["judge_b"][None, :, None]
    return j[:, :, -P:]


# -----------------------------------------------------------------------------
if __name__ == "__main__":
    B = 2
    FEATURE_CHANNELS = 8
    CHANNELS = 32
    TIME = 16
    FRAMES = 4                       # predictions = TIME - FRAMES + 1 = 13

    key = jax.random.PRNGKey(0)
    pkey, xkey, ckey = jax.random.split(key, 3)
    params = init_params(pkey, FEATURE_CHANNELS, CHANNELS)
    x = jax.random.normal(xkey, (B, FEATURE_CHANNELS, TIME), jnp.float32)
    conditioning = jax.random.normal(ckey, (B, FEATURE_CHANNELS, TIME), jnp.float32)  # unused

    fwd = jax.jit(functools.partial(ar_discriminator_forward, frames=FRAMES))
    features, judgement = fwd(params, x, conditioning)
    jax.block_until_ready(judgement)

    P = TIME - FRAMES + 1
    assert features == []
    assert judgement.shape == (B, 1, P), judgement.shape
    assert judgement.dtype == jnp.float32

    ref = reference_forward(params, x, FRAMES)
    assert jnp.allclose(judgement, ref, atol=1e-2, rtol=1e-2), \
        float(jnp.max(jnp.abs(judgement - ref)))

    print("KERNEL_OK")
</pallas_src>

<mosaic_0001>
module attributes {stable_mosaic.version = 11 : i64} {
  func.func @kernel(%arg0: memref<48x8xf32, #tpu.memory_space<vmem>>, %arg1: memref<2x8x32xf32, #tpu.memory_space<vmem>>, %arg2: memref<2x8x32xf32, #tpu.memory_space<vmem>>, %arg3: memref<16x32x32xf32, #tpu.memory_space<vmem>>, %arg4: memref<16x32x32xf32, #tpu.memory_space<vmem>>, %arg5: memref<9x32xf32, #tpu.memory_space<vmem>>, %arg6: memref<9x32xf32, #tpu.memory_space<vmem>>, %arg7: memref<1x32xf32, #tpu.memory_space<vmem>>, %arg8: memref<1x1xf32, #tpu.memory_space<vmem>>, %arg9: memref<32x1xf32, #tpu.memory_space<vmem>>, %arg10: memref<24x32xf32, #tpu.memory_space<vmem>>) attributes {dimension_semantics = [], scalar_prefetch = 0 : i64, scratch_operands = 1 : i64, tpu.core_type = #tpu.core_type<tc>} {
    %cst = arith.constant 0.000000e+00 : f32
    %0 = vector.broadcast %cst : f32 to vector<24x32xf32>
    %c0 = arith.constant 0 : index
    %c0_0 = arith.constant 0 : index
    %1 = vector.load %arg10[%c0, %c0_0] : memref<24x32xf32, #tpu.memory_space<vmem>>, vector<24x32xf32>
    tpu.vector_store %arg10[%c0, %c0_0], %0 {strides = array<i32>} : memref<24x32xf32, #tpu.memory_space<vmem>>, vector<24x32xf32>,
    %c0_1 = arith.constant 0 : index
    %c0_2 = arith.constant 0 : index
    %2 = vector.load %arg7[%c0_1, %c0_2] : memref<1x32xf32, #tpu.memory_space<vmem>>, vector<1x32xf32>
    %c0_3 = arith.constant 0 : index
    %c0_4 = arith.constant 0 : index
    %3 = vector.load %arg8[%c0_3, %c0_4] : memref<1x1xf32, #tpu.memory_space<vmem>>, vector<1x1xf32>
    %cst_5 = arith.constant 0.000000e+00 : f32
    %4 = vector.broadcast %cst_5 : f32 to vector<16x32xf32>
    %c0_6 = arith.constant 0 : index
    %c0_7 = arith.constant 0 : index
    %c0_8 = arith.constant 0 : index
    %5 = vector.load %arg1[%c0_6, %c0_7, %c0_8] : memref<2x8x32xf32, #tpu.memory_space<vmem>>, vector<1x8x32xf32>
    %6 = vector.shape_cast %5 : vector<1x8x32xf32> to vector<8x32xf32>
    %c1 = arith.constant 1 : index
    %c0_9 = arith.constant 0 : index
    %c0_10 = arith.constant 0 : index
    %7 = vector.load %arg1[%c1, %c0_9, %c0_10] : memref<2x8x32xf32, #tpu.memory_space<vmem>>, vector<1x8x32xf32>
    %8 = vector.shape_cast %7 : vector<1x8x32xf32> to vector<8x32xf32>
    %c0_11 = arith.constant 0 : index
    %c0_12 = arith.constant 0 : index
    %c0_13 = arith.constant 0 : index
    %9 = vector.load %arg2[%c0_11, %c0_12, %c0_13] : memref<2x8x32xf32, #tpu.memory_space<vmem>>, vector<1x8x32xf32>
    %10 = vector.shape_cast %9 : vector<1x8x32xf32> to vector<8x32xf32>
    %c1_14 = arith.constant 1 : index
    %c0_15 = arith.constant 0 : index
    %c0_16 = arith.constant 0 : index
    %11 = vector.load %arg2[%c1_14, %c0_15, %c0_16] : memref<2x8x32xf32, #tpu.memory_space<vmem>>, vector<1x8x32xf32>
    %12 = vector.shape_cast %11 : vector<1x8x32xf32> to vector<8x32xf32>
    %c0_17 = arith.constant 0 : index
    %c0_18 = arith.constant 0 : index
    %13 = vector.load %arg5[%c0_17, %c0_18] : memref<9x32xf32, #tpu.memory_space<vmem>>, vector<1x32xf32>
    %c0_19 = arith.constant 0 : index
    %c0_20 = arith.constant 0 : index
    %14 = vector.load %arg6[%c0_19, %c0_20] : memref<9x32xf32, #tpu.memory_space<vmem>>, vector<1x32xf32>
    %c8 = arith.constant 8 : index
    %c0_21 = arith.constant 0 : index
    %15 = vector.load %arg0[%c8, %c0_21] : memref<48x8xf32, #tpu.memory_space<vmem>>, vector<16x8xf32>
    %cst_22 = arith.constant dense<0.000000e+00> : vector<16x32xf32>
    %16 = tpu.matmul %15, %8, %cst_22 {dimension_numbers = #tpu.dot_dimension_numbers<[1], [0], [0], [1], [0, 0, 1, 1], [], []>} : vector<16x8xf32>, vector<8x32xf32>, vector<16x32xf32> -> vector<16x32xf32>
    %17 = vector.broadcast %13 : vector<1x32xf32> to vector<16x32xf32>
    %18 = arith.addf %16, %17 : vector<16x32xf32>
    %cst_23 = arith.constant dense<0.000000e+00> : vector<16x32xf32>
    %19 = tpu.matmul %15, %12, %cst_23 {dimension_numbers = #tpu.dot_dimension_numbers<[1], [0], [0], [1], [0, 0, 1, 1], [], []>} : vector<16x8xf32>, vector<8x32xf32>, vector<16x32xf32> -> vector<16x32xf32>
    %20 = vector.broadcast %14 : vector<1x32xf32> to vector<16x32xf32>
    %21 = arith.addf %19, %20 : vector<16x32xf32>
    %c7 = arith.constant 7 : index
    %c0_24 = arith.constant 0 : index
    %22 = vector.load %arg0[%c7, %c0_24] : memref<48x8xf32, #tpu.memory_space<vmem>>, vector<16x8xf32>
    %cst_25 = arith.constant dense<0.000000e+00> : vector<16x32xf32>
    %23 = tpu.matmul %22, %6, %cst_25 {dimension_numbers = #tpu.dot_dimension_numbers<[1], [0], [0], [1], [0, 0, 1, 1], [], []>} : vector<16x8xf32>, vector<8x32xf32>, vector<16x32xf32> -> vector<16x32xf32>
    %24 = arith.addf %18, %23 : vector<16x32xf32>
    %cst_26 = arith.constant dense<0.000000e+00> : vector<16x32xf32>
    %25 = tpu.matmul %22, %10, %cst_26 {dimension_numbers = #tpu.dot_dimension_numbers<[1], [0], [0], [1], [0, 0, 1, 1], [], []>} : vector<16x8xf32>, vector<8x32xf32>, vector<16x32xf32> -> vector<16x32xf32>
    %26 = arith.addf %21, %25 : vector<16x32xf32>
    %cst_27 = arith.constant 0.000000e+00 : f32
    %27 = vector.broadcast %cst_27 : f32 to vector<16x32xf32>
    %28 = arith.subf %27, %26 : vector<16x32xf32>
    %29 = math.exp %28 : vector<16x32xf32>
    %cst_28 = arith.constant 1.000000e+00 : f32
    %30 = vector.broadcast %cst_28 : f32 to vector<16x32xf32>
    %31 = arith.addf %30, %29 : vector<16x32xf32>
    %cst_29 = arith.constant 1.000000e+00 : f32
    %32 = vector.broadcast %cst_29 : f32 to vector<16x32xf32>
    %33 = arith.divf %32, %31 : vector<16x32xf32>
    %34 = math.tanh %24 : vector<16x32xf32>
    %35 = arith.mulf %34, %33 : vector<16x32xf32>
    %36 = arith.addf %4, %35 : vector<16x32xf32>
    %c8_30 = arith.constant 8 : index
    %c0_31 = arith.constant 0 : index
    %37 = vector.load %arg10[%c8_30, %c0_31] : memref<24x32xf32, #tpu.memory_space<vmem>>, vector<16x32xf32>
    tpu.vector_store %arg10[%c8_30, %c0_31], %35 {strides = array<i32>} : memref<24x32xf32, #tpu.memory_space<vmem>>, vector<16x32xf32>,
    %c0_32 = arith.constant 0 : index
    %c0_33 = arith.constant 0 : index
    %c0_34 = arith.constant 0 : index
    %38 = vector.load %arg3[%c0_32, %c0_33, %c0_34] : memref<16x32x32xf32, #tpu.memory_space<vmem>>, vector<1x32x32xf32>
    %39 = vector.shape_cast %38 : vector<1x32x32xf32> to vector<32x32xf32>
    %c1_35 = arith.constant 1 : index
    %c0_36 = arith.constant 0 : index
    %c0_37 = arith.constant 0 : index
    %40 = vector.load %arg3[%c1_35, %c0_36, %c0_37] : memref<16x32x32xf32, #tpu.memory_space<vmem>>, vector<1x32x32xf32>
    %41 = vector.shape_cast %40 : vector<1x32x32xf32> to vector<32x32xf32>
    %c0_38 = arith.constant 0 : index
    %c0_39 = arith.constant 0 : index
    %c0_40 = arith.constant 0 : index
    %42 = vector.load %arg4[%c0_38, %c0_39, %c0_40] : memref<16x32x32xf32, #tpu.memory_space<vmem>>, vector<1x32x32xf32>
    %43 = vector.shape_cast %42 : vector<1x32x32xf32> to vector<32x32xf32>
    %c1_41 = arith.constant 1 : index
    %c0_42 = arith.constant 0 : index
    %c0_43 = arith.constant 0 : index
    %44 = vector.load %arg4[%c1_41, %c0_42, %c0_43] : memref<16x32x32xf32, #tpu.memory_space<vmem>>, vector<1x32x32xf32>
    %45 = vector.shape_cast %44 : vector<1x32x32xf32> to vector<32x32xf32>
    %c1_44 = arith.constant 1 : index
    %c0_45 = arith.constant 0 : index
    %46 = vector.load %arg5[%c1_44, %c0_45] : memref<9x32xf32, #tpu.memory_space<vmem>>, vector<1x32xf32>
    %c1_46 = arith.constant 1 : index
    %c0_47 = arith.constant 0 : index
    %47 = vector.load %arg6[%c1_46, %c0_47] : memref<9x32xf32, #tpu.memory_space<vmem>>, vector<1x32xf32>
    %c8_48 = arith.constant 8 : index
    %c0_49 = arith.constant 0 : index
    %48 = vector.load %arg10[%c8_48, %c0_49] : memref<24x32xf32, #tpu.memory_space<vmem>>, vector<16x32xf32>
    %cst_50 = arith.constant dense<0.000000e+00> : vector<16x32xf32>
    %49 = tpu.matmul %48, %41, %cst_50 {dimension_numbers = #tpu.dot_dimension_numbers<[1], [0], [0], [1], [0, 0, 1, 1], [], []>} : vector<16x32xf32>, vector<32x32xf32>, vector<16x32xf32> -> vector<16x32xf32>
    %50 = vector.broadcast %46 : vector<1x32xf32> to vector<16x32xf32>
    %51 = arith.addf %49, %50 : vector<16x32xf32>
    %cst_51 = arith.constant dense<0.000000e+00> : vector<16x32xf32>
    %52 = tpu.matmul %48, %45, %cst_51 {dimension_numbers = #tpu.dot_dimension_numbers<[1], [0], [0], [1], [0, 0, 1, 1], [], []>} : vector<16x32xf32>, vector<32x32xf32>, vector<16x32xf32> -> vector<16x32xf32>
    %53 = vector.broadcast %47 : vector<1x32xf32> to vector<16x32xf32>
    %54 = arith.addf %52, %53 : vector<16x32xf32>
    %c6 = arith.constant 6 : index
    %c0_52 = arith.constant 0 : index
    %55 = vector.load %arg10[%c6, %c0_52] : memref<24x32xf32, #tpu.memory_space<vmem>>, vector<16x32xf32>
    %cst_53 = arith.constant dense<0.000000e+00> : vector<16x32xf32>
    %56 = tpu.matmul %55, %39, %cst_53 {dimension_numbers = #tpu.dot_dimension_numbers<[1], [0], [0], [1], [0, 0, 1, 1], [], []>} : vector<16x32xf32>, vector<32x32xf32>, vector<16x32xf32> -> vector<16x32xf32>
    %57 = arith.addf %51, %56 : vector<16x32xf32>
    %cst_54 = arith.constant dense<0.000000e+00> : vector<16x32xf32>
    %58 = tpu.matmul %55, %43, %cst_54 {dimension_numbers = #tpu.dot_dimension_numbers<[1], [0], [0], [1], [0, 0, 1, 1], [], []>} : vector<16x32xf32>, vector<32x32xf32>, vector<16x32xf32> -> vector<16x32xf32>
    %59 = arith.addf %54, %58 : vector<16x32xf32>
    %cst_55 = arith.constant 0.000000e+00 : f32
    %60 = vector.broadcast %cst_55 : f32 to vector<16x32xf32>
    %61 = arith.subf %60, %59 : vector<16x32xf32>
    %62 = math.exp %61 : vector<16x32xf32>
    %cst_56 = arith.constant 1.000000e+00 : f32
    %63 = vector.broadcast %cst_56 : f32 to vector<16x32xf32>
    %64 = arith.addf %63, %62 : vector<16x32xf32>
    %cst_57 = arith.constant 1.000000e+00 : f32
    %65 = vector.broadcast %cst_57 : f32 to vector<16x32xf32>
    %66 = arith.divf %65, %64 : vector<16x32xf32>
    %67 = math.tanh %57 : vector<16x32xf32>
    %68 = arith.mulf %67, %66 : vector<16x32xf32>
    %69 = arith.addf %36, %68 : vector<16x32xf32>
    %70 = arith.addf %68, %48 : vector<16x32xf32>
    %c8_58 = arith.constant 8 : index
    %c0_59 = arith.constant 0 : index
    %71 = vector.load %arg10[%c8_58, %c0_59] : memref<24x32xf32, #tpu.memory_space<vmem>>, vector<16x32xf32>
    tpu.vector_store %arg10[%c8_58, %c0_59], %70 {strides = array<i32>} : memref<24x32xf32, #tpu.memory_space<vmem>>, vector<16x32xf32>,
    %c2 = arith.constant 2 : index
    %c0_60 = arith.constant 0 : index
    %c0_61 = arith.constant 0 : index
    %72 = vector.load %arg3[%c2, %c0_60, %c0_61] : memref<16x32x32xf32, #tpu.memory_space<vmem>>, vector<1x32x32xf32>
    %73 = vector.shape_cast %72 : vector<1x32x32xf32> to vector<32x32xf32>
    %c3 = arith.constant 3 : index
    %c0_62 = arith.constant 0 : index
    %c0_63 = arith.constant 0 : index
    %74 = vector.load %arg3[%c3, %c0_62, %c0_63] : memref<16x32x32xf32, #tpu.memory_space<vmem>>, vector<1x32x32xf32>
    %75 = vector.shape_cast %74 : vector<1x32x32xf32> to vector<32x32xf32>
    %c2_64 = arith.constant 2 : index
    %c0_65 = arith.constant 0 : index
    %c0_66 = arith.constant 0 : index
    %76 = vector.load %arg4[%c2_64, %c0_65, %c0_66] : memref<16x32x32xf32, #tpu.memory_space<vmem>>, vector<1x32x32xf32>
    %77 = vector.shape_cast %76 : vector<1x32x32xf32> to vector<32x32xf32>
    %c3_67 = arith.constant 3 : index
    %c0_68 = arith.constant 0 : index
    %c0_69 = arith.constant 0 : index
    %78 = vector.load %arg4[%c3_67, %c0_68, %c0_69] : memref<16x32x32xf32, #tpu.memory_space<vmem>>, vector<1x32x32xf32>
    %79 = vector.shape_cast %78 : vector<1x32x32xf32> to vector<32x32xf32>
    %c2_70 = arith.constant 2 : index
    %c0_71 = arith.constant 0 : index
    %80 = vector.load %arg5[%c2_70, %c0_71] : memref<9x32xf32, #tpu.memory_space<vmem>>, vector<1x32xf32>
    %c2_72 = arith.constant 2 : index
    %c0_73 = arith.constant 0 : index
    %81 = vector.load %arg6[%c2_72, %c0_73] : memref<9x32xf32, #tpu.memory_space<vmem>>, vector<1x32xf32>
    %c8_74 = arith.constant 8 : index
    %c0_75 = arith.constant 0 : index
    %82 = vector.load %arg10[%c8_74, %c0_75] : memref<24x32xf32, #tpu.memory_space<vmem>>, vector<16x32xf32>
    %cst_76 = arith.constant dense<0.000000e+00> : vector<16x32xf32>
    %83 = tpu.matmul %82, %75, %cst_76 {dimension_numbers = #tpu.dot_dimension_numbers<[1], [0], [0], [1], [0, 0, 1, 1], [], []>} : vector<16x32xf32>, vector<32x32xf32>, vector<16x32xf32> -> vector<16x32xf32>
    %84 = vector.broadcast %80 : vector<1x32xf32> to vector<16x32xf32>
    %85 = arith.addf %83, %84 : vector<16x32xf32>
    %cst_77 = arith.constant dense<0.000000e+00> : vector<16x32xf32>
    %86 = tpu.matmul %82, %79, %cst_77 {dimension_numbers = #tpu.dot_dimension_numbers<[1], [0], [0], [1], [0, 0, 1, 1], [], []>} : vector<16x32xf32>, vector<32x32xf32>, vector<16x32xf32> -> vector<16x32xf32>
    %87 = vector.broadcast %81 : vector<1x32xf32> to vector<16x32xf32>
    %88 = arith.addf %86, %87 : vector<16x32xf32>
    %c4 = arith.constant 4 : index
    %c0_78 = arith.constant 0 : index
    %89 = vector.load %arg10[%c4, %c0_78] : memref<24x32xf32, #tpu.memory_space<vmem>>, vector<16x32xf32>
    %cst_79 = arith.constant dense<0.000000e+00> : vector<16x32xf32>
    %90 = tpu.matmul %89, %73, %cst_79 {dimension_numbers = #tpu.dot_dimension_numbers<[1], [0], [0], [1], [0, 0, 1, 1], [], []>} : vector<16x32xf32>, vector<32x32xf32>, vector<16x32xf32> -> vector<16x32xf32>
    %91 = arith.addf %85, %90 : vector<16x32xf32>
    %cst_80 = arith.constant dense<0.000000e+00> : vector<16x32xf32>
    %92 = tpu.matmul %89, %77, %cst_80 {dimension_numbers = #tpu.dot_dimension_numbers<[1], [0], [0], [1], [0, 0, 1, 1], [], []>} : vector<16x32xf32>, vector<32x32xf32>, vector<16x32xf32> -> vector<16x32xf32>
    %93 = arith.addf %88, %92 : vector<16x32xf32>
    %cst_81 = arith.constant 0.000000e+00 : f32
    %94 = vector.broadcast %cst_81 : f32 to vector<16x32xf32>
    %95 = arith.subf %94, %93 : vector<16x32xf32>
    %96 = math.exp %95 : vector<16x32xf32>
    %cst_82 = arith.constant 1.000000e+00 : f32
    %97 = vector.broadcast %cst_82 : f32 to vector<16x32xf32>
    %98 = arith.addf %97, %96 : vector<16x32xf32>
    %cst_83 = arith.constant 1.000000e+00 : f32
    %99 = vector.broadcast %cst_83 : f32 to vector<16x32xf32>
    %100 = arith.divf %99, %98 : vector<16x32xf32>
    %101 = math.tanh %91 : vector<16x32xf32>
    %102 = arith.mulf %101, %100 : vector<16x32xf32>
    %103 = arith.addf %69, %102 : vector<16x32xf32>
    %104 = arith.addf %102, %82 : vector<16x32xf32>
    %c8_84 = arith.constant 8 : index
    %c0_85 = arith.constant 0 : index
    %105 = vector.load %arg10[%c8_84, %c0_85] : memref<24x32xf32, #tpu.memory_space<vmem>>, vector<16x32xf32>
    tpu.vector_store %arg10[%c8_84, %c0_85], %104 {strides = array<i32>} : memref<24x32xf32, #tpu.memory_space<vmem>>, vector<16x32xf32>,
    %c4_86 = arith.constant 4 : index
    %c0_87 = arith.constant 0 : index
    %c0_88 = arith.constant 0 : index
    %106 = vector.load %arg3[%c4_86, %c0_87, %c0_88] : memref<16x32x32xf32, #tpu.memory_space<vmem>>, vector<1x32x32xf32>
    %107 = vector.shape_cast %106 : vector<1x32x32xf32> to vector<32x32xf32>
    %c5 = arith.constant 5 : index
    %c0_89 = arith.constant 0 : index
    %c0_90 = arith.constant 0 : index
    %108 = vector.load %arg3[%c5, %c0_89, %c0_90] : memref<16x32x32xf32, #tpu.memory_space<vmem>>, vector<1x32x32xf32>
    %109 = vector.shape_cast %108 : vector<1x32x32xf32> to vector<32x32xf32>
    %c4_91 = arith.constant 4 : index
    %c0_92 = arith.constant 0 : index
    %c0_93 = arith.constant 0 : index
    %110 = vector.load %arg4[%c4_91, %c0_92, %c0_93] : memref<16x32x32xf32, #tpu.memory_space<vmem>>, vector<1x32x32xf32>
    %111 = vector.shape_cast %110 : vector<1x32x32xf32> to vector<32x32xf32>
    %c5_94 = arith.constant 5 : index
    %c0_95 = arith.constant 0 : index
    %c0_96 = arith.constant 0 : index
    %112 = vector.load %arg4[%c5_94, %c0_95, %c0_96] : memref<16x32x32xf32, #tpu.memory_space<vmem>>, vector<1x32x32xf32>
    %113 = vector.shape_cast %112 : vector<1x32x32xf32> to vector<32x32xf32>
    %c3_97 = arith.constant 3 : index
    %c0_98 = arith.constant 0 : index
    %114 = vector.load %arg5[%c3_97, %c0_98] : memref<9x32xf32, #tpu.memory_space<vmem>>, vector<1x32xf32>
    %c3_99 = arith.constant 3 : index
    %c0_100 = arith.constant 0 : index
    %115 = vector.load %arg6[%c3_99, %c0_100] : memref<9x32xf32, #tpu.memory_space<vmem>>, vector<1x32xf32>
    %c8_101 = arith.constant 8 : index
    %c0_102 = arith.constant 0 : index
    %116 = vector.load %arg10[%c8_101, %c0_102] : memref<24x32xf32, #tpu.memory_space<vmem>>, vector<16x32xf32>
    %cst_103 = arith.constant dense<0.000000e+00> : vector<16x32xf32>
    %117 = tpu.matmul %116, %109, %cst_103 {dimension_numbers = #tpu.dot_dimension_numbers<[1], [0], [0], [1], [0, 0, 1, 1], [], []>} : vector<16x32xf32>, vector<32x32xf32>, vector<16x32xf32> -> vector<16x32xf32>
    %118 = vector.broadcast %114 : vector<1x32xf32> to vector<16x32xf32>
    %119 = arith.addf %117, %118 : vector<16x32xf32>
    %cst_104 = arith.constant dense<0.000000e+00> : vector<16x32xf32>
    %120 = tpu.matmul %116, %113, %cst_104 {dimension_numbers = #tpu.dot_dimension_numbers<[1], [0], [0], [1], [0, 0, 1, 1], [], []>} : vector<16x32xf32>, vector<32x32xf32>, vector<16x32xf32> -> vector<16x32xf32>
    %121 = vector.broadcast %115 : vector<1x32xf32> to vector<16x32xf32>
    %122 = arith.addf %120, %121 : vector<16x32xf32>
    %c0_105 = arith.constant 0 : index
    %c0_106 = arith.constant 0 : index
    %123 = vector.load %arg10[%c0_105, %c0_106] : memref<24x32xf32, #tpu.memory_space<vmem>>, vector<16x32xf32>
    %cst_107 = arith.constant dense<0.000000e+00> : vector<16x32xf32>
    %124 = tpu.matmul %123, %107, %cst_107 {dimension_numbers = #tpu.dot_dimension_numbers<[1], [0], [0], [1], [0, 0, 1, 1], [], []>} : vector<16x32xf32>, vector<32x32xf32>, vector<16x32xf32> -> vector<16x32xf32>
    %125 = arith.addf %119, %124 : vector<16x32xf32>
    %cst_108 = arith.constant dense<0.000000e+00> : vector<16x32xf32>
    %126 = tpu.matmul %123, %111, %cst_108 {dimension_numbers = #tpu.dot_dimension_numbers<[1], [0], [0], [1], [0, 0, 1, 1], [], []>} : vector<16x32xf32>, vector<32x32xf32>, vector<16x32xf32> -> vector<16x32xf32>
    %127 = arith.addf %122, %126 : vector<16x32xf32>
    %cst_109 = arith.constant 0.000000e+00 : f32
    %128 = vector.broadcast %cst_109 : f32 to vector<16x32xf32>
    %129 = arith.subf %128, %127 : vector<16x32xf32>
    %130 = math.exp %129 : vector<16x32xf32>
    %cst_110 = arith.constant 1.000000e+00 : f32
    %131 = vector.broadcast %cst_110 : f32 to vector<16x32xf32>
    %132 = arith.addf %131, %130 : vector<16x32xf32>
    %cst_111 = arith.constant 1.000000e+00 : f32
    %133 = vector.broadcast %cst_111 : f32 to vector<16x32xf32>
    %134 = arith.divf %133, %132 : vector<16x32xf32>
    %135 = math.tanh %125 : vector<16x32xf32>
    %136 = arith.mulf %135, %134 : vector<16x32xf32>
    %137 = arith.addf %103, %136 : vector<16x32xf32>
    %138 = arith.addf %136, %116 : vector<16x32xf32>
    %c8_112 = arith.constant 8 : index
    %c0_113 = arith.constant 0 : index
    %139 = vector.load %arg10[%c8_112, %c0_113] : memref<24x32xf32, #tpu.memory_space<vmem>>, vector<16x32xf32>
    tpu.vector_store %arg10[%c8_112, %c0_113], %138 {strides = array<i32>} : memref<24x32xf32, #tpu.memory_space<vmem>>, vector<16x32xf32>,
    %c7_114 = arith.constant 7 : index
    %c0_115 = arith.constant 0 : index
    %c0_116 = arith.constant 0 : index
    %140 = vector.load %arg3[%c7_114, %c0_115, %c0_116] : memref<16x32x32xf32, #tpu.memory_space<vmem>>, vector<1x32x32xf32>
    %141 = vector.shape_cast %140 : vector<1x32x32xf32> to vector<32x32xf32>
    %c7_117 = arith.constant 7 : index
    %c0_118 = arith.constant 0 : index
    %c0_119 = arith.constant 0 : index
    %142 = vector.load %arg4[%c7_117, %c0_118, %c0_119] : memref<16x32x32xf32, #tpu.memory_space<vmem>>, vector<1x32x32xf32>
    %143 = vector.shape_cast %142 : vector<1x32x32xf32> to vector<32x32xf32>
    %c4_120 = arith.constant 4 : index
    %c0_121 = arith.constant 0 : index
    %144 = vector.load %arg5[%c4_120, %c0_121] : memref<9x32xf32, #tpu.memory_space<vmem>>, vector<1x32xf32>
    %c4_122 = arith.constant 4 : index
    %c0_123 = arith.constant 0 : index
    %145 = vector.load %arg6[%c4_122, %c0_123] : memref<9x32xf32, #tpu.memory_space<vmem>>, vector<1x32xf32>
    %c8_124 = arith.constant 8 : index
    %c0_125 = arith.constant 0 : index
    %146 = vector.load %arg10[%c8_124, %c0_125] : memref<24x32xf32, #tpu.memory_space<vmem>>, vector<16x32xf32>
    %cst_126 = arith.constant dense<0.000000e+00> : vector<16x32xf32>
    %147 = tpu.matmul %146, %141, %cst_126 {dimension_numbers = #tpu.dot_dimension_numbers<[1], [0], [0], [1], [0, 0, 1, 1], [], []>} : vector<16x32xf32>, vector<32x32xf32>, vector<16x32xf32> -> vector<16x32xf32>
    %148 = vector.broadcast %144 : vector<1x32xf32> to vector<16x32xf32>
    %149 = arith.addf %147, %148 : vector<16x32xf32>
    %cst_127 = arith.constant dense<0.000000e+00> : vector<16x32xf32>
    %150 = tpu.matmul %146, %143, %cst_127 {dimension_numbers = #tpu.dot_dimension_numbers<[1], [0], [0], [1], [0, 0, 1, 1], [], []>} : vector<16x32xf32>, vector<32x32xf32>, vector<16x32xf32> -> vector<16x32xf32>
    %151 = vector.broadcast %145 : vector<1x32xf32> to vector<16x32xf32>
    %152 = arith.addf %150, %151 : vector<16x32xf32>
    %cst_128 = arith.constant 0.000000e+00 : f32
    %153 = vector.broadcast %cst_128 : f32 to vector<16x32xf32>
    %154 = arith.subf %153, %152 : vector<16x32xf32>
    %155 = math.exp %154 : vector<16x32xf32>
    %cst_129 = arith.constant 1.000000e+00 : f32
    %156 = vector.broadcast %cst_129 : f32 to vector<16x32xf32>
    %157 = arith.addf %156, %155 : vector<16x32xf32>
    %cst_130 = arith.constant 1.000000e+00 : f32
    %158 = vector.broadcast %cst_130 : f32 to vector<16x32xf32>
    %159 = arith.divf %158, %157 : vector<16x32xf32>
    %160 = math.tanh %149 : vector<16x32xf32>
    %161 = arith.mulf %160, %159 : vector<16x32xf32>
    %162 = arith.addf %137, %161 : vector<16x32xf32>
    %163 = arith.addf %161, %146 : vector<16x32xf32>
    %c8_131 = arith.constant 8 : index
    %c0_132 = arith.constant 0 : index
    %164 = vector.load %arg10[%c8_131, %c0_132] : memref<24x32xf32, #tpu.memory_space<vmem>>, vector<16x32xf32>
    tpu.vector_store %arg10[%c8_131, %c0_132], %163 {strides = array<i32>} : memref<24x32xf32, #tpu.memory_space<vmem>>, vector<16x32xf32>,
    %c9 = arith.constant 9 : index
    %c0_133 = arith.constant 0 : index
    %c0_134 = arith.constant 0 : index
    %165 = vector.load %arg3[%c9, %c0_133, %c0_134] : memref<16x32x32xf32, #tpu.memory_space<vmem>>, vector<1x32x32xf32>
    %166 = vector.shape_cast %165 : vector<1x32x32xf32> to vector<32x32xf32>
    %c9_135 = arith.constant 9 : index
    %c0_136 = arith.constant 0 : index
    %c0_137 = arith.constant 0 : index
    %167 = vector.load %arg4[%c9_135, %c0_136, %c0_137] : memref<16x32x32xf32, #tpu.memory_space<vmem>>, vector<1x32x32xf32>
    %168 = vector.shape_cast %167 : vector<1x32x32xf32> to vector<32x32xf32>
    %c5_138 = arith.constant 5 : index
    %c0_139 = arith.constant 0 : index
    %169 = vector.load %arg5[%c5_138, %c0_139] : memref<9x32xf32, #tpu.memory_space<vmem>>, vector<1x32xf32>
    %c5_140 = arith.constant 5 : index
    %c0_141 = arith.constant 0 : index
    %170 = vector.load %arg6[%c5_140, %c0_141] : memref<9x32xf32, #tpu.memory_space<vmem>>, vector<1x32xf32>
    %c8_142 = arith.constant 8 : index
    %c0_143 = arith.constant 0 : index
    %171 = vector.load %arg10[%c8_142, %c0_143] : memref<24x32xf32, #tpu.memory_space<vmem>>, vector<16x32xf32>
    %cst_144 = arith.constant dense<0.000000e+00> : vector<16x32xf32>
    %172 = tpu.matmul %171, %166, %cst_144 {dimension_numbers = #tpu.dot_dimension_numbers<[1], [0], [0], [1], [0, 0, 1, 1], [], []>} : vector<16x32xf32>, vector<32x32xf32>, vector<16x32xf32> -> vector<16x32xf32>
    %173 = vector.broadcast %169 : vector<1x32xf32> to vector<16x32xf32>
    %174 = arith.addf %172, %173 : vector<16x32xf32>
    %cst_145 = arith.constant dense<0.000000e+00> : vector<16x32xf32>
    %175 = tpu.matmul %171, %168, %cst_145 {dimension_numbers = #tpu.dot_dimension_numbers<[1], [0], [0], [1], [0, 0, 1, 1], [], []>} : vector<16x32xf32>, vector<32x32xf32>, vector<16x32xf32> -> vector<16x32xf32>
    %176 = vector.broadcast %170 : vector<1x32xf32> to vector<16x32xf32>
    %177 = arith.addf %175, %176 : vector<16x32xf32>
    %cst_146 = arith.constant 0.000000e+00 : f32
    %178 = vector.broadcast %cst_146 : f32 to vector<16x32xf32>
    %179 = arith.subf %178, %177 : vector<16x32xf32>
    %180 = math.exp %179 : vector<16x32xf32>
    %cst_147 = arith.constant 1.000000e+00 : f32
    %181 = vector.broadcast %cst_147 : f32 to vector<16x32xf32>
    %182 = arith.addf %181, %180 : vector<16x32xf32>
    %cst_148 = arith.constant 1.000000e+00 : f32
    %183 = vector.broadcast %cst_148 : f32 to vector<16x32xf32>
    %184 = arith.divf %183, %182 : vector<16x32xf32>
    %185 = math.tanh %174 : vector<16x32xf32>
    %186 = arith.mulf %185, %184 : vector<16x32xf32>
    %187 = arith.addf %162, %186 : vector<16x32xf32>
    %188 = arith.addf %186, %171 : vector<16x32xf32>
    %c8_149 = arith.constant 8 : index
    %c0_150 = arith.constant 0 : index
    %189 = vector.load %arg10[%c8_149, %c0_150] : memref<24x32xf32, #tpu.memory_space<vmem>>, vector<16x32xf32>
    tpu.vector_store %arg10[%c8_149, %c0_150], %188 {strides = array<i32>} : memref<24x32xf32, #tpu.memory_space<vmem>>, vector<16x32xf32>,
    %c11 = arith.constant 11 : index
    %c0_151 = arith.constant 0 : index
    %c0_152 = arith.constant 0 : index
    %190 = vector.load %arg3[%c11, %c0_151, %c0_152] : memref<16x32x32xf32, #tpu.memory_space<vmem>>, vector<1x32x32xf32>
    %191 = vector.shape_cast %190 : vector<1x32x32xf32> to vector<32x32xf32>
    %c11_153 = arith.constant 11 : index
    %c0_154 = arith.constant 0 : index
    %c0_155 = arith.constant 0 : index
    %192 = vector.load %arg4[%c11_153, %c0_154, %c0_155] : memref<16x32x32xf32, #tpu.memory_space<vmem>>, vector<1x32x32xf32>
    %193 = vector.shape_cast %192 : vector<1x32x32xf32> to vector<32x32xf32>
    %c6_156 = arith.constant 6 : index
    %c0_157 = arith.constant 0 : index
    %194 = vector.load %arg5[%c6_156, %c0_157] : memref<9x32xf32, #tpu.memory_space<vmem>>, vector<1x32xf32>
    %c6_158 = arith.constant 6 : index
    %c0_159 = arith.constant 0 : index
    %195 = vector.load %arg6[%c6_158, %c0_159] : memref<9x32xf32, #tpu.memory_space<vmem>>, vector<1x32xf32>
    %c8_160 = arith.constant 8 : index
    %c0_161 = arith.constant 0 : index
    %196 = vector.load %arg10[%c8_160, %c0_161] : memref<24x32xf32, #tpu.memory_space<vmem>>, vector<16x32xf32>
    %cst_162 = arith.constant dense<0.000000e+00> : vector<16x32xf32>
    %197 = tpu.matmul %196, %191, %cst_162 {dimension_numbers = #tpu.dot_dimension_numbers<[1], [0], [0], [1], [0, 0, 1, 1], [], []>} : vector<16x32xf32>, vector<32x32xf32>, vector<16x32xf32> -> vector<16x32xf32>
    %198 = vector.broadcast %194 : vector<1x32xf32> to vector<16x32xf32>
    %199 = arith.addf %197, %198 : vector<16x32xf32>
    %cst_163 = arith.constant dense<0.000000e+00> : vector<16x32xf32>
    %200 = tpu.matmul %196, %193, %cst_163 {dimension_numbers = #tpu.dot_dimension_numbers<[1], [0], [0], [1], [0, 0, 1, 1], [], []>} : vector<16x32xf32>, vector<32x32xf32>, vector<16x32xf32> -> vector<16x32xf32>
    %201 = vector.broadcast %195 : vector<1x32xf32> to vector<16x32xf32>
    %202 = arith.addf %200, %201 : vector<16x32xf32>
    %cst_164 = arith.constant 0.000000e+00 : f32
    %203 = vector.broadcast %cst_164 : f32 to vector<16x32xf32>
    %204 = arith.subf %203, %202 : vector<16x32xf32>
    %205 = math.exp %204 : vector<16x32xf32>
    %cst_165 = arith.constant 1.000000e+00 : f32
    %206 = vector.broadcast %cst_165 : f32 to vector<16x32xf32>
    %207 = arith.addf %206, %205 : vector<16x32xf32>
    %cst_166 = arith.constant 1.000000e+00 : f32
    %208 = vector.broadcast %cst_166 : f32 to vector<16x32xf32>
    %209 = arith.divf %208, %207 : vector<16x32xf32>
    %210 = math.tanh %199 : vector<16x32xf32>
    %211 = arith.mulf %210, %209 : vector<16x32xf32>
    %212 = arith.addf %187, %211 : vector<16x32xf32>
    %213 = arith.addf %211, %196 : vector<16x32xf32>
    %c8_167 = arith.constant 8 : index
    %c0_168 = arith.constant 0 : index
    %214 = vector.load %arg10[%c8_167, %c0_168] : memref<24x32xf32, #tpu.memory_space<vmem>>, vector<16x32xf32>
    tpu.vector_store %arg10[%c8_167, %c0_168], %213 {strides = array<i32>} : memref<24x32xf32, #tpu.memory_space<vmem>>, vector<16x32xf32>,
    %c13 = arith.constant 13 : index
    %c0_169 = arith.constant 0 : index
    %c0_170 = arith.constant 0 : index
    %215 = vector.load %arg3[%c13, %c0_169, %c0_170] : memref<16x32x32xf32, #tpu.memory_space<vmem>>, vector<1x32x32xf32>
    %216 = vector.shape_cast %215 : vector<1x32x32xf32> to vector<32x32xf32>
    %c13_171 = arith.constant 13 : index
    %c0_172 = arith.constant 0 : index
    %c0_173 = arith.constant 0 : index
    %217 = vector.load %arg4[%c13_171, %c0_172, %c0_173] : memref<16x32x32xf32, #tpu.memory_space<vmem>>, vector<1x32x32xf32>
    %218 = vector.shape_cast %217 : vector<1x32x32xf32> to vector<32x32xf32>
    %c7_174 = arith.constant 7 : index
    %c0_175 = arith.constant 0 : index
    %219 = vector.load %arg5[%c7_174, %c0_175] : memref<9x32xf32, #tpu.memory_space<vmem>>, vector<1x32xf32>
    %c7_176 = arith.constant 7 : index
    %c0_177 = arith.constant 0 : index
    %220 = vector.load %arg6[%c7_176, %c0_177] : memref<9x32xf32, #tpu.memory_space<vmem>>, vector<1x32xf32>
    %c8_178 = arith.constant 8 : index
    %c0_179 = arith.constant 0 : index
    %221 = vector.load %arg10[%c8_178, %c0_179] : memref<24x32xf32, #tpu.memory_space<vmem>>, vector<16x32xf32>
    %cst_180 = arith.constant dense<0.000000e+00> : vector<16x32xf32>
    %222 = tpu.matmul %221, %216, %cst_180 {dimension_numbers = #tpu.dot_dimension_numbers<[1], [0], [0], [1], [0, 0, 1, 1], [], []>} : vector<16x32xf32>, vector<32x32xf32>, vector<16x32xf32> -> vector<16x32xf32>
    %223 = vector.broadcast %219 : vector<1x32xf32> to vector<16x32xf32>
    %224 = arith.addf %222, %223 : vector<16x32xf32>
    %cst_181 = arith.constant dense<0.000000e+00> : vector<16x32xf32>
    %225 = tpu.matmul %221, %218, %cst_181 {dimension_numbers = #tpu.dot_dimension_numbers<[1], [0], [0], [1], [0, 0, 1, 1], [], []>} : vector<16x32xf32>, vector<32x32xf32>, vector<16x32xf32> -> vector<16x32xf32>
    %226 = vector.broadcast %220 : vector<1x32xf32> to vector<16x32xf32>
    %227 = arith.addf %225, %226 : vector<16x32xf32>
    %cst_182 = arith.constant 0.000000e+00 : f32
    %228 = vector.broadcast %cst_182 : f32 to vector<16x32xf32>
    %229 = arith.subf %228, %227 : vector<16x32xf32>
    %230 = math.exp %229 : vector<16x32xf32>
    %cst_183 = arith.constant 1.000000e+00 : f32
    %231 = vector.broadcast %cst_183 : f32 to vector<16x32xf32>
    %232 = arith.addf %231, %230 : vector<16x32xf32>
    %cst_184 = arith.constant 1.000000e+00 : f32
    %233 = vector.broadcast %cst_184 : f32 to vector<16x32xf32>
    %234 = arith.divf %233, %232 : vector<16x32xf32>
    %235 = math.tanh %224 : vector<16x32xf32>
    %236 = arith.mulf %235, %234 : vector<16x32xf32>
    %237 = arith.addf %212, %236 : vector<16x32xf32>
    %238 = arith.addf %236, %221 : vector<16x32xf32>
    %c8_185 = arith.constant 8 : index
    %c0_186 = arith.constant 0 : index
    %239 = vector.load %arg10[%c8_185, %c0_186] : memref<24x32xf32, #tpu.memory_space<vmem>>, vector<16x32xf32>
    tpu.vector_store %arg10[%c8_185, %c0_186], %238 {strides = array<i32>} : memref<24x32xf32, #tpu.memory_space<vmem>>, vector<16x32xf32>,
    %c15 = arith.constant 15 : index
    %c0_187 = arith.constant 0 : index
    %c0_188 = arith.constant 0 : index
    %240 = vector.load %arg3[%c15, %c0_187, %c0_188] : memref<16x32x32xf32, #tpu.memory_space<vmem>>, vector<1x32x32xf32>
    %241 = vector.shape_cast %240 : vector<1x32x32xf32> to vector<32x32xf32>
    %c15_189 = arith.constant 15 : index
    %c0_190 = arith.constant 0 : index
    %c0_191 = arith.constant 0 : index
    %242 = vector.load %arg4[%c15_189, %c0_190, %c0_191] : memref<16x32x32xf32, #tpu.memory_space<vmem>>, vector<1x32x32xf32>
    %243 = vector.shape_cast %242 : vector<1x32x32xf32> to vector<32x32xf32>
    %c8_192 = arith.constant 8 : index
    %c0_193 = arith.constant 0 : index
    %244 = vector.load %arg5[%c8_192, %c0_193] : memref<9x32xf32, #tpu.memory_space<vmem>>, vector<1x32xf32>
    %c8_194 = arith.constant 8 : index
    %c0_195 = arith.constant 0 : index
    %245 = vector.load %arg6[%c8_194, %c0_195] : memref<9x32xf32, #tpu.memory_space<vmem>>, vector<1x32xf32>
    %c8_196 = arith.constant 8 : index
    %c0_197 = arith.constant 0 : index
    %246 = vector.load %arg10[%c8_196, %c0_197] : memref<24x32xf32, #tpu.memory_space<vmem>>, vector<16x32xf32>
    %cst_198 = arith.constant dense<0.000000e+00> : vector<16x32xf32>
    %247 = tpu.matmul %246, %241, %cst_198 {dimension_numbers = #tpu.dot_dimension_numbers<[1], [0], [0], [1], [0, 0, 1, 1], [], []>} : vector<16x32xf32>, vector<32x32xf32>, vector<16x32xf32> -> vector<16x32xf32>
    %248 = vector.broadcast %244 : vector<1x32xf32> to vector<16x32xf32>
    %249 = arith.addf %247, %248 : vector<16x32xf32>
    %cst_199 = arith.constant dense<0.000000e+00> : vector<16x32xf32>
    %250 = tpu.matmul %246, %243, %cst_199 {dimension_numbers = #tpu.dot_dimension_numbers<[1], [0], [0], [1], [0, 0, 1, 1], [], []>} : vector<16x32xf32>, vector<32x32xf32>, vector<16x32xf32> -> vector<16x32xf32>
    %251 = vector.broadcast %245 : vector<1x32xf32> to vector<16x32xf32>
    %252 = arith.addf %250, %251 : vector<16x32xf32>
    %cst_200 = arith.constant 0.000000e+00 : f32
    %253 = vector.broadcast %cst_200 : f32 to vector<16x32xf32>
    %254 = arith.subf %253, %252 : vector<16x32xf32>
    %255 = math.exp %254 : vector<16x32xf32>
    %cst_201 = arith.constant 1.000000e+00 : f32
    %256 = vector.broadcast %cst_201 : f32 to vector<16x32xf32>
    %257 = arith.addf %256, %255 : vector<16x32xf32>
    %cst_202 = arith.constant 1.000000e+00 : f32
    %258 = vector.broadcast %cst_202 : f32 to vector<16x32xf32>
    %259 = arith.divf %258, %257 : vector<16x32xf32>
    %260 = math.tanh %249 : vector<16x32xf32>
    %261 = arith.mulf %260, %259 : vector<16x32xf32>
    %262 = arith.addf %237, %261 : vector<16x32xf32>
    %263 = vector.broadcast %2 : vector<1x32xf32> to vector<16x32xf32>
    %264 = arith.mulf %262, %263 : vector<16x32xf32>
    %cst_203 = arith.constant dense<0.000000e+00> : vector<16xf32>
    %265 = vector.multi_reduction <add>, %264, %cst_203 [1] : vector<16x32xf32> to vector<16xf32>
    %266 = vector.shape_cast %265 : vector<16xf32> to vector<16x1xf32>
    %267 = vector.broadcast %3 : vector<1x1xf32> to vector<16x1xf32>
    %268 = arith.addf %266, %267 : vector<16x1xf32>
    %c0_204 = arith.constant 0 : index
    %c0_205 = arith.constant 0 : index
    %269 = vector.load %arg9[%c0_204, %c0_205] : memref<32x1xf32, #tpu.memory_space<vmem>>, vector<16x1xf32>
    tpu.vector_store %arg9[%c0_204, %c0_205], %268 {strides = array<i32>} : memref<32x1xf32, #tpu.memory_space<vmem>>, vector<16x1xf32>,
    %cst_206 = arith.constant 0.000000e+00 : f32
    %270 = vector.broadcast %cst_206 : f32 to vector<16x32xf32>
    %c0_207 = arith.constant 0 : index
    %c0_208 = arith.constant 0 : index
    %c0_209 = arith.constant 0 : index
    %271 = vector.load %arg1[%c0_207, %c0_208, %c0_209] : memref<2x8x32xf32, #tpu.memory_space<vmem>>, vector<1x8x32xf32>
    %272 = vector.shape_cast %271 : vector<1x8x32xf32> to vector<8x32xf32>
    %c1_210 = arith.constant 1 : index
    %c0_211 = arith.constant 0 : index
    %c0_212 = arith.constant 0 : index
    %273 = vector.load %arg1[%c1_210, %c0_211, %c0_212] : memref<2x8x32xf32, #tpu.memory_space<vmem>>, vector<1x8x32xf32>
    %274 = vector.shape_cast %273 : vector<1x8x32xf32> to vector<8x32xf32>
    %c0_213 = arith.constant 0 : index
    %c0_214 = arith.constant 0 : index
    %c0_215 = arith.constant 0 : index
    %275 = vector.load %arg2[%c0_213, %c0_214, %c0_215] : memref<2x8x32xf32, #tpu.memory_space<vmem>>, vector<1x8x32xf32>
    %276 = vector.shape_cast %275 : vector<1x8x32xf32> to vector<8x32xf32>
    %c1_216 = arith.constant 1 : index
    %c0_217 = arith.constant 0 : index
    %c0_218 = arith.constant 0 : index
    %277 = vector.load %arg2[%c1_216, %c0_217, %c0_218] : memref<2x8x32xf32, #tpu.memory_space<vmem>>, vector<1x8x32xf32>
    %278 = vector.shape_cast %277 : vector<1x8x32xf32> to vector<8x32xf32>
    %c0_219 = arith.constant 0 : index
    %c0_220 = arith.constant 0 : index
    %279 = vector.load %arg5[%c0_219, %c0_220] : memref<9x32xf32, #tpu.memory_space<vmem>>, vector<1x32xf32>
    %c0_221 = arith.constant 0 : index
    %c0_222 = arith.constant 0 : index
    %280 = vector.load %arg6[%c0_221, %c0_222] : memref<9x32xf32, #tpu.memory_space<vmem>>, vector<1x32xf32>
    %c32 = arith.constant 32 : index
    %c0_223 = arith.constant 0 : index
    %281 = vector.load %arg0[%c32, %c0_223] : memref<48x8xf32, #tpu.memory_space<vmem>>, vector<16x8xf32>
    %cst_224 = arith.constant dense<0.000000e+00> : vector<16x32xf32>
    %282 = tpu.matmul %281, %274, %cst_224 {dimension_numbers = #tpu.dot_dimension_numbers<[1], [0], [0], [1], [0, 0, 1, 1], [], []>} : vector<16x8xf32>, vector<8x32xf32>, vector<16x32xf32> -> vector<16x32xf32>
    %283 = vector.broadcast %279 : vector<1x32xf32> to vector<16x32xf32>
    %284 = arith.addf %282, %283 : vector<16x32xf32>
    %cst_225 = arith.constant dense<0.000000e+00> : vector<16x32xf32>
    %285 = tpu.matmul %281, %278, %cst_225 {dimension_numbers = #tpu.dot_dimension_numbers<[1], [0], [0], [1], [0, 0, 1, 1], [], []>} : vector<16x8xf32>, vector<8x32xf32>, vector<16x32xf32> -> vector<16x32xf32>
    %286 = vector.broadcast %280 : vector<1x32xf32> to vector<16x32xf32>
    %287 = arith.addf %285, %286 : vector<16x32xf32>
    %c31 = arith.constant 31 : index
    %c0_226 = arith.constant 0 : index
    %288 = vector.load %arg0[%c31, %c0_226] : memref<48x8xf32, #tpu.memory_space<vmem>>, vector<16x8xf32>
    %cst_227 = arith.constant dense<0.000000e+00> : vector<16x32xf32>
    %289 = tpu.matmul %288, %272, %cst_227 {dimension_numbers = #tpu.dot_dimension_numbers<[1], [0], [0], [1], [0, 0, 1, 1], [], []>} : vector<16x8xf32>, vector<8x32xf32>, vector<16x32xf32> -> vector<16x32xf32>
    %290 = arith.addf %284, %289 : vector<16x32xf32>
    %cst_228 = arith.constant dense<0.000000e+00> : vector<16x32xf32>
    %291 = tpu.matmul %288, %276, %cst_228 {dimension_numbers = #tpu.dot_dimension_numbers<[1], [0], [0], [1], [0, 0, 1, 1], [], []>} : vector<16x8xf32>, vector<8x32xf32>, vector<16x32xf32> -> vector<16x32xf32>
    %292 = arith.addf %287, %291 : vector<16x32xf32>
    %cst_229 = arith.constant 0.000000e+00 : f32
    %293 = vector.broadcast %cst_229 : f32 to vector<16x32xf32>
    %294 = arith.subf %293, %292 : vector<16x32xf32>
    %295 = math.exp %294 : vector<16x32xf32>
    %cst_230 = arith.constant 1.000000e+00 : f32
    %296 = vector.broadcast %cst_230 : f32 to vector<16x32xf32>
    %297 = arith.addf %296, %295 : vector<16x32xf32>
    %cst_231 = arith.constant 1.000000e+00 : f32
    %298 = vector.broadcast %cst_231 : f32 to vector<16x32xf32>
    %299 = arith.divf %298, %297 : vector<16x32xf32>
    %300 = math.tanh %290 : vector<16x32xf32>
    %301 = arith.mulf %300, %299 : vector<16x32xf32>
    %302 = arith.addf %270, %301 : vector<16x32xf32>
    %c8_232 = arith.constant 8 : index
    %c0_233 = arith.constant 0 : index
    %303 = vector.load %arg10[%c8_232, %c0_233] : memref<24x32xf32, #tpu.memory_space<vmem>>, vector<16x32xf32>
    tpu.vector_store %arg10[%c8_232, %c0_233], %301 {strides = array<i32>} : memref<24x32xf32, #tpu.memory_space<vmem>>, vector<16x32xf32>,
    %c0_234 = arith.constant 0 : index
    %c0_235 = arith.constant 0 : index
    %c0_236 = arith.constant 0 : index
    %304 = vector.load %arg3[%c0_234, %c0_235, %c0_236] : memref<16x32x32xf32, #tpu.memory_space<vmem>>, vector<1x32x32xf32>
    %305 = vector.shape_cast %304 : vector<1x32x32xf32> to vector<32x32xf32>
    %c1_237 = arith.constant 1 : index
    %c0_238 = arith.constant 0 : index
    %c0_239 = arith.constant 0 : index
    %306 = vector.load %arg3[%c1_237, %c0_238, %c0_239] : memref<16x32x32xf32, #tpu.memory_space<vmem>>, vector<1x32x32xf32>
    %307 = vector.shape_cast %306 : vector<1x32x32xf32> to vector<32x32xf32>
    %c0_240 = arith.constant 0 : index
    %c0_241 = arith.constant 0 : index
    %c0_242 = arith.constant 0 : index
    %308 = vector.load %arg4[%c0_240, %c0_241, %c0_242] : memref<16x32x32xf32, #tpu.memory_space<vmem>>, vector<1x32x32xf32>
    %309 = vector.shape_cast %308 : vector<1x32x32xf32> to vector<32x32xf32>
    %c1_243 = arith.constant 1 : index
    %c0_244 = arith.constant 0 : index
    %c0_245 = arith.constant 0 : index
    %310 = vector.load %arg4[%c1_243, %c0_244, %c0_245] : memref<16x32x32xf32, #tpu.memory_space<vmem>>, vector<1x32x32xf32>
    %311 = vector.shape_cast %310 : vector<1x32x32xf32> to vector<32x32xf32>
    %c1_246 = arith.constant 1 : index
    %c0_247 = arith.constant 0 : index
    %312 = vector.load %arg5[%c1_246, %c0_247] : memref<9x32xf32, #tpu.memory_space<vmem>>, vector<1x32xf32>
    %c1_248 = arith.constant 1 : index
    %c0_249 = arith.constant 0 : index
    %313 = vector.load %arg6[%c1_248, %c0_249] : memref<9x32xf32, #tpu.memory_space<vmem>>, vector<1x32xf32>
    %c8_250 = arith.constant 8 : index
    %c0_251 = arith.constant 0 : index
    %314 = vector.load %arg10[%c8_250, %c0_251] : memref<24x32xf32, #tpu.memory_space<vmem>>, vector<16x32xf32>
    %cst_252 = arith.constant dense<0.000000e+00> : vector<16x32xf32>
    %315 = tpu.matmul %314, %307, %cst_252 {dimension_numbers = #tpu.dot_dimension_numbers<[1], [0], [0], [1], [0, 0, 1, 1], [], []>} : vector<16x32xf32>, vector<32x32xf32>, vector<16x32xf32> -> vector<16x32xf32>
    %316 = vector.broadcast %312 : vector<1x32xf32> to vector<16x32xf32>
    %317 = arith.addf %315, %316 : vector<16x32xf32>
    %cst_253 = arith.constant dense<0.000000e+00> : vector<16x32xf32>
    %318 = tpu.matmul %314, %311, %cst_253 {dimension_numbers = #tpu.dot_dimension_numbers<[1], [0], [0], [1], [0, 0, 1, 1], [], []>} : vector<16x32xf32>, vector<32x32xf32>, vector<16x32xf32> -> vector<16x32xf32>
    %319 = vector.broadcast %313 : vector<1x32xf32> to vector<16x32xf32>
    %320 = arith.addf %318, %319 : vector<16x32xf32>
    %c6_254 = arith.constant 6 : index
    %c0_255 = arith.constant 0 : index
    %321 = vector.load %arg10[%c6_254, %c0_255] : memref<24x32xf32, #tpu.memory_space<vmem>>, vector<16x32xf32>
    %cst_256 = arith.constant dense<0.000000e+00> : vector<16x32xf32>
    %322 = tpu.matmul %321, %305, %cst_256 {dimension_numbers = #tpu.dot_dimension_numbers<[1], [0], [0], [1], [0, 0, 1, 1], [], []>} : vector<16x32xf32>, vector<32x32xf32>, vector<16x32xf32> -> vector<16x32xf32>
    %323 = arith.addf %317, %322 : vector<16x32xf32>
    %cst_257 = arith.constant dense<0.000000e+00> : vector<16x32xf32>
    %324 = tpu.matmul %321, %309, %cst_257 {dimension_numbers = #tpu.dot_dimension_numbers<[1], [0], [0], [1], [0, 0, 1, 1], [], []>} : vector<16x32xf32>, vector<32x32xf32>, vector<16x32xf32> -> vector<16x32xf32>
    %325 = arith.addf %320, %324 : vector<16x32xf32>
    %cst_258 = arith.constant 0.000000e+00 : f32
    %326 = vector.broadcast %cst_258 : f32 to vector<16x32xf32>
    %327 = arith.subf %326, %325 : vector<16x32xf32>
    %328 = math.exp %327 : vector<16x32xf32>
    %cst_259 = arith.constant 1.000000e+00 : f32
    %329 = vector.broadcast %cst_259 : f32 to vector<16x32xf32>
    %330 = arith.addf %329, %328 : vector<16x32xf32>
    %cst_260 = arith.constant 1.000000e+00 : f32
    %331 = vector.broadcast %cst_260 : f32 to vector<16x32xf32>
    %332 = arith.divf %331, %330 : vector<16x32xf32>
    %333 = math.tanh %323 : vector<16x32xf32>
    %334 = arith.mulf %333, %332 : vector<16x32xf32>
    %335 = arith.addf %302, %334 : vector<16x32xf32>
    %336 = arith.addf %334, %314 : vector<16x32xf32>
    %c8_261 = arith.constant 8 : index
    %c0_262 = arith.constant 0 : index
    %337 = vector.load %arg10[%c8_261, %c0_262] : memref<24x32xf32, #tpu.memory_space<vmem>>, vector<16x32xf32>
    tpu.vector_store %arg10[%c8_261, %c0_262], %336 {strides = array<i32>} : memref<24x32xf32, #tpu.memory_space<vmem>>, vector<16x32xf32>,
    %c2_263 = arith.constant 2 : index
    %c0_264 = arith.constant 0 : index
    %c0_265 = arith.constant 0 : index
    %338 = vector.load %arg3[%c2_263, %c0_264, %c0_265] : memref<16x32x32xf32, #tpu.memory_space<vmem>>, vector<1x32x32xf32>
    %339 = vector.shape_cast %338 : vector<1x32x32xf32> to vector<32x32xf32>
    %c3_266 = arith.constant 3 : index
    %c0_267 = arith.constant 0 : index
    %c0_268 = arith.constant 0 : index
    %340 = vector.load %arg3[%c3_266, %c0_267, %c0_268] : memref<16x32x32xf32, #tpu.memory_space<vmem>>, vector<1x32x32xf32>
    %341 = vector.shape_cast %340 : vector<1x32x32xf32> to vector<32x32xf32>
    %c2_269 = arith.constant 2 : index
    %c0_270 = arith.constant 0 : index
    %c0_271 = arith.constant 0 : index
    %342 = vector.load %arg4[%c2_269, %c0_270, %c0_271] : memref<16x32x32xf32, #tpu.memory_space<vmem>>, vector<1x32x32xf32>
    %343 = vector.shape_cast %342 : vector<1x32x32xf32> to vector<32x32xf32>
    %c3_272 = arith.constant 3 : index
    %c0_273 = arith.constant 0 : index
    %c0_274 = arith.constant 0 : index
    %344 = vector.load %arg4[%c3_272, %c0_273, %c0_274] : memref<16x32x32xf32, #tpu.memory_space<vmem>>, vector<1x32x32xf32>
    %345 = vector.shape_cast %344 : vector<1x32x32xf32> to vector<32x32xf32>
    %c2_275 = arith.constant 2 : index
    %c0_276 = arith.constant 0 : index
    %346 = vector.load %arg5[%c2_275, %c0_276] : memref<9x32xf32, #tpu.memory_space<vmem>>, vector<1x32xf32>
    %c2_277 = arith.constant 2 : index
    %c0_278 = arith.constant 0 : index
    %347 = vector.load %arg6[%c2_277, %c0_278] : memref<9x32xf32, #tpu.memory_space<vmem>>, vector<1x32xf32>
    %c8_279 = arith.constant 8 : index
    %c0_280 = arith.constant 0 : index
    %348 = vector.load %arg10[%c8_279, %c0_280] : memref<24x32xf32, #tpu.memory_space<vmem>>, vector<16x32xf32>
    %cst_281 = arith.constant dense<0.000000e+00> : vector<16x32xf32>
    %349 = tpu.matmul %348, %341, %cst_281 {dimension_numbers = #tpu.dot_dimension_numbers<[1], [0], [0], [1], [0, 0, 1, 1], [], []>} : vector<16x32xf32>, vector<32x32xf32>, vector<16x32xf32> -> vector<16x32xf32>
    %350 = vector.broadcast %346 : vector<1x32xf32> to vector<16x32xf32>
    %351 = arith.addf %349, %350 : vector<16x32xf32>
    %cst_282 = arith.constant dense<0.000000e+00> : vector<16x32xf32>
    %352 = tpu.matmul %348, %345, %cst_282 {dimension_numbers = #tpu.dot_dimension_numbers<[1], [0], [0], [1], [0, 0, 1, 1], [], []>} : vector<16x32xf32>, vector<32x32xf32>, vector<16x32xf32> -> vector<16x32xf32>
    %353 = vector.broadcast %347 : vector<1x32xf32> to vector<16x32xf32>
    %354 = arith.addf %352, %353 : vector<16x32xf32>
    %c4_283 = arith.constant 4 : index
    %c0_284 = arith.constant 0 : index
    %355 = vector.load %arg10[%c4_283, %c0_284] : memref<24x32xf32, #tpu.memory_space<vmem>>, vector<16x32xf32>
    %cst_285 = arith.constant dense<0.000000e+00> : vector<16x32xf32>
    %356 = tpu.matmul %355, %339, %cst_285 {dimension_numbers = #tpu.dot_dimension_numbers<[1], [0], [0], [1], [0, 0, 1, 1], [], []>} : vector<16x32xf32>, vector<32x32xf32>, vector<16x32xf32> -> vector<16x32xf32>
    %357 = arith.addf %351, %356 : vector<16x32xf32>
    %cst_286 = arith.constant dense<0.000000e+00> : vector<16x32xf32>
    %358 = tpu.matmul %355, %343, %cst_286 {dimension_numbers = #tpu.dot_dimension_numbers<[1], [0], [0], [1], [0, 0, 1, 1], [], []>} : vector<16x32xf32>, vector<32x32xf32>, vector<16x32xf32> -> vector<16x32xf32>
    %359 = arith.addf %354, %358 : vector<16x32xf32>
    %cst_287 = arith.constant 0.000000e+00 : f32
    %360 = vector.broadcast %cst_287 : f32 to vector<16x32xf32>
    %361 = arith.subf %360, %359 : vector<16x32xf32>
    %362 = math.exp %361 : vector<16x32xf32>
    %cst_288 = arith.constant 1.000000e+00 : f32
    %363 = vector.broadcast %cst_288 : f32 to vector<16x32xf32>
    %364 = arith.addf %363, %362 : vector<16x32xf32>
    %cst_289 = arith.constant 1.000000e+00 : f32
    %365 = vector.broadcast %cst_289 : f32 to vector<16x32xf32>
    %366 = arith.divf %365, %364 : vector<16x32xf32>
    %367 = math.tanh %357 : vector<16x32xf32>
    %368 = arith.mulf %367, %366 : vector<16x32xf32>
    %369 = arith.addf %335, %368 : vector<16x32xf32>
    %370 = arith.addf %368, %348 : vector<16x32xf32>
    %c8_290 = arith.constant 8 : index
    %c0_291 = arith.constant 0 : index
    %371 = vector.load %arg10[%c8_290, %c0_291] : memref<24x32xf32, #tpu.memory_space<vmem>>, vector<16x32xf32>
    tpu.vector_store %arg10[%c8_290, %c0_291], %370 {strides = array<i32>} : memref<24x32xf32, #tpu.memory_space<vmem>>, vector<16x32xf32>,
    %c4_292 = arith.constant 4 : index
    %c0_293 = arith.constant 0 : index
    %c0_294 = arith.constant 0 : index
    %372 = vector.load %arg3[%c4_292, %c0_293, %c0_294] : memref<16x32x32xf32, #tpu.memory_space<vmem>>, vector<1x32x32xf32>
    %373 = vector.shape_cast %372 : vector<1x32x32xf32> to vector<32x32xf32>
    %c5_295 = arith.constant 5 : index
    %c0_296 = arith.constant 0 : index
    %c0_297 = arith.constant 0 : index
    %374 = vector.load %arg3[%c5_295, %c0_296, %c0_297] : memref<16x32x32xf32, #tpu.memory_space<vmem>>, vector<1x32x32xf32>
    %375 = vector.shape_cast %374 : vector<1x32x32xf32> to vector<32x32xf32>
    %c4_298 = arith.constant 4 : index
    %c0_299 = arith.constant 0 : index
    %c0_300 = arith.constant 0 : index
    %376 = vector.load %arg4[%c4_298, %c0_299, %c0_300] : memref<16x32x32xf32, #tpu.memory_space<vmem>>, vector<1x32x32xf32>
    %377 = vector.shape_cast %376 : vector<1x32x32xf32> to vector<32x32xf32>
    %c5_301 = arith.constant 5 : index
    %c0_302 = arith.constant 0 : index
    %c0_303 = arith.constant 0 : index
    %378 = vector.load %arg4[%c5_301, %c0_302, %c0_303] : memref<16x32x32xf32, #tpu.memory_space<vmem>>, vector<1x32x32xf32>
    %379 = vector.shape_cast %378 : vector<1x32x32xf32> to vector<32x32xf32>
    %c3_304 = arith.constant 3 : index
    %c0_305 = arith.constant 0 : index
    %380 = vector.load %arg5[%c3_304, %c0_305] : memref<9x32xf32, #tpu.memory_space<vmem>>, vector<1x32xf32>
    %c3_306 = arith.constant 3 : index
    %c0_307 = arith.constant 0 : index
    %381 = vector.load %arg6[%c3_306, %c0_307] : memref<9x32xf32, #tpu.memory_space<vmem>>, vector<1x32xf32>
    %c8_308 = arith.constant 8 : index
    %c0_309 = arith.constant 0 : index
    %382 = vector.load %arg10[%c8_308, %c0_309] : memref<24x32xf32, #tpu.memory_space<vmem>>, vector<16x32xf32>
    %cst_310 = arith.constant dense<0.000000e+00> : vector<16x32xf32>
    %383 = tpu.matmul %382, %375, %cst_310 {dimension_numbers = #tpu.dot_dimension_numbers<[1], [0], [0], [1], [0, 0, 1, 1], [], []>} : vector<16x32xf32>, vector<32x32xf32>, vector<16x32xf32> -> vector<16x32xf32>
    %384 = vector.broadcast %380 : vector<1x32xf32> to vector<16x32xf32>
    %385 = arith.addf %383, %384 : vector<16x32xf32>
    %cst_311 = arith.constant dense<0.000000e+00> : vector<16x32xf32>
    %386 = tpu.matmul %382, %379, %cst_311 {dimension_numbers = #tpu.dot_dimension_numbers<[1], [0], [0], [1], [0, 0, 1, 1], [], []>} : vector<16x32xf32>, vector<32x32xf32>, vector<16x32xf32> -> vector<16x32xf32>
    %387 = vector.broadcast %381 : vector<1x32xf32> to vector<16x32xf32>
    %388 = arith.addf %386, %387 : vector<16x32xf32>
    %c0_312 = arith.constant 0 : index
    %c0_313 = arith.constant 0 : index
    %389 = vector.load %arg10[%c0_312, %c0_313] : memref<24x32xf32, #tpu.memory_space<vmem>>, vector<16x32xf32>
    %cst_314 = arith.constant dense<0.000000e+00> : vector<16x32xf32>
    %390 = tpu.matmul %389, %373, %cst_314 {dimension_numbers = #tpu.dot_dimension_numbers<[1], [0], [0], [1], [0, 0, 1, 1], [], []>} : vector<16x32xf32>, vector<32x32xf32>, vector<16x32xf32> -> vector<16x32xf32>
    %391 = arith.addf %385, %390 : vector<16x32xf32>
    %cst_315 = arith.constant dense<0.000000e+00> : vector<16x32xf32>
    %392 = tpu.matmul %389, %377, %cst_315 {dimension_numbers = #tpu.dot_dimension_numbers<[1], [0], [0], [1], [0, 0, 1, 1], [], []>} : vector<16x32xf32>, vector<32x32xf32>, vector<16x32xf32> -> vector<16x32xf32>
    %393 = arith.addf %388, %392 : vector<16x32xf32>
    %cst_316 = arith.constant 0.000000e+00 : f32
    %394 = vector.broadcast %cst_316 : f32 to vector<16x32xf32>
    %395 = arith.subf %394, %393 : vector<16x32xf32>
    %396 = math.exp %395 : vector<16x32xf32>
    %cst_317 = arith.constant 1.000000e+00 : f32
    %397 = vector.broadcast %cst_317 : f32 to vector<16x32xf32>
    %398 = arith.addf %397, %396 : vector<16x32xf32>
    %cst_318 = arith.constant 1.000000e+00 : f32
    %399 = vector.broadcast %cst_318 : f32 to vector<16x32xf32>
    %400 = arith.divf %399, %398 : vector<16x32xf32>
    %401 = math.tanh %391 : vector<16x32xf32>
    %402 = arith.mulf %401, %400 : vector<16x32xf32>
    %403 = arith.addf %369, %402 : vector<16x32xf32>
    %404 = arith.addf %402, %382 : vector<16x32xf32>
    %c8_319 = arith.constant 8 : index
    %c0_320 = arith.constant 0 : index
    %405 = vector.load %arg10[%c8_319, %c0_320] : memref<24x32xf32, #tpu.memory_space<vmem>>, vector<16x32xf32>
    tpu.vector_store %arg10[%c8_319, %c0_320], %404 {strides = array<i32>} : memref<24x32xf32, #tpu.memory_space<vmem>>, vector<16x32xf32>,
    %c7_321 = arith.constant 7 : index
    %c0_322 = arith.constant 0 : index
    %c0_323 = arith.constant 0 : index
    %406 = vector.load %arg3[%c7_321, %c0_322, %c0_323] : memref<16x32x32xf32, #tpu.memory_space<vmem>>, vector<1x32x32xf32>
    %407 = vector.shape_cast %406 : vector<1x32x32xf32> to vector<32x32xf32>
    %c7_324 = arith.constant 7 : index
    %c0_325 = arith.constant 0 : index
    %c0_326 = arith.constant 0 : index
    %408 = vector.load %arg4[%c7_324, %c0_325, %c0_326] : memref<16x32x32xf32, #tpu.memory_space<vmem>>, vector<1x32x32xf32>
    %409 = vector.shape_cast %408 : vector<1x32x32xf32> to vector<32x32xf32>
    %c4_327 = arith.constant 4 : index
    %c0_328 = arith.constant 0 : index
    %410 = vector.load %arg5[%c4_327, %c0_328] : memref<9x32xf32, #tpu.memory_space<vmem>>, vector<1x32xf32>
    %c4_329 = arith.constant 4 : index
    %c0_330 = arith.constant 0 : index
    %411 = vector.load %arg6[%c4_329, %c0_330] : memref<9x32xf32, #tpu.memory_space<vmem>>, vector<1x32xf32>
    %c8_331 = arith.constant 8 : index
    %c0_332 = arith.constant 0 : index
    %412 = vector.load %arg10[%c8_331, %c0_332] : memref<24x32xf32, #tpu.memory_space<vmem>>, vector<16x32xf32>
    %cst_333 = arith.constant dense<0.000000e+00> : vector<16x32xf32>
    %413 = tpu.matmul %412, %407, %cst_333 {dimension_numbers = #tpu.dot_dimension_numbers<[1], [0], [0], [1], [0, 0, 1, 1], [], []>} : vector<16x32xf32>, vector<32x32xf32>, vector<16x32xf32> -> vector<16x32xf32>
    %414 = vector.broadcast %410 : vector<1x32xf32> to vector<16x32xf32>
    %415 = arith.addf %413, %414 : vector<16x32xf32>
    %cst_334 = arith.constant dense<0.000000e+00> : vector<16x32xf32>
    %416 = tpu.matmul %412, %409, %cst_334 {dimension_numbers = #tpu.dot_dimension_numbers<[1], [0], [0], [1], [0, 0, 1, 1], [], []>} : vector<16x32xf32>, vector<32x32xf32>, vector<16x32xf32> -> vector<16x32xf32>
    %417 = vector.broadcast %411 : vector<1x32xf32> to vector<16x32xf32>
    %418 = arith.addf %416, %417 : vector<16x32xf32>
    %cst_335 = arith.constant 0.000000e+00 : f32
    %419 = vector.broadcast %cst_335 : f32 to vector<16x32xf32>
    %420 = arith.subf %419, %418 : vector<16x32xf32>
    %421 = math.exp %420 : vector<16x32xf32>
    %cst_336 = arith.constant 1.000000e+00 : f32
    %422 = vector.broadcast %cst_336 : f32 to vector<16x32xf32>
    %423 = arith.addf %422, %421 : vector<16x32xf32>
    %cst_337 = arith.constant 1.000000e+00 : f32
    %424 = vector.broadcast %cst_337 : f32 to vector<16x32xf32>
    %425 = arith.divf %424, %423 : vector<16x32xf32>
    %426 = math.tanh %415 : vector<16x32xf32>
    %427 = arith.mulf %426, %425 : vector<16x32xf32>
    %428 = arith.addf %403, %427 : vector<16x32xf32>
    %429 = arith.addf %427, %412 : vector<16x32xf32>
    %c8_338 = arith.constant 8 : index
    %c0_339 = arith.constant 0 : index
    %430 = vector.load %arg10[%c8_338, %c0_339] : memref<24x32xf32, #tpu.memory_space<vmem>>, vector<16x32xf32>
    tpu.vector_store %arg10[%c8_338, %c0_339], %429 {strides = array<i32>} : memref<24x32xf32, #tpu.memory_space<vmem>>, vector<16x32xf32>,
    %c9_340 = arith.constant 9 : index
    %c0_341 = arith.constant 0 : index
    %c0_342 = arith.constant 0 : index
    %431 = vector.load %arg3[%c9_340, %c0_341, %c0_342] : memref<16x32x32xf32, #tpu.memory_space<vmem>>, vector<1x32x32xf32>
    %432 = vector.shape_cast %431 : vector<1x32x32xf32> to vector<32x32xf32>
    %c9_343 = arith.constant 9 : index
    %c0_344 = arith.constant 0 : index
    %c0_345 = arith.constant 0 : index
    %433 = vector.load %arg4[%c9_343, %c0_344, %c0_345] : memref<16x32x32xf32, #tpu.memory_space<vmem>>, vector<1x32x32xf32>
    %434 = vector.shape_cast %433 : vector<1x32x32xf32> to vector<32x32xf32>
    %c5_346 = arith.constant 5 : index
    %c0_347 = arith.constant 0 : index
    %435 = vector.load %arg5[%c5_346, %c0_347] : memref<9x32xf32, #tpu.memory_space<vmem>>, vector<1x32xf32>
    %c5_348 = arith.constant 5 : index
    %c0_349 = arith.constant 0 : index
    %436 = vector.load %arg6[%c5_348, %c0_349] : memref<9x32xf32, #tpu.memory_space<vmem>>, vector<1x32xf32>
    %c8_350 = arith.constant 8 : index
    %c0_351 = arith.constant 0 : index
    %437 = vector.load %arg10[%c8_350, %c0_351] : memref<24x32xf32, #tpu.memory_space<vmem>>, vector<16x32xf32>
    %cst_352 = arith.constant dense<0.000000e+00> : vector<16x32xf32>
    %438 = tpu.matmul %437, %432, %cst_352 {dimension_numbers = #tpu.dot_dimension_numbers<[1], [0], [0], [1], [0, 0, 1, 1], [], []>} : vector<16x32xf32>, vector<32x32xf32>, vector<16x32xf32> -> vector<16x32xf32>
    %439 = vector.broadcast %435 : vector<1x32xf32> to vector<16x32xf32>
    %440 = arith.addf %438, %439 : vector<16x32xf32>
    %cst_353 = arith.constant dense<0.000000e+00> : vector<16x32xf32>
    %441 = tpu.matmul %437, %434, %cst_353 {dimension_numbers = #tpu.dot_dimension_numbers<[1], [0], [0], [1], [0, 0, 1, 1], [], []>} : vector<16x32xf32>, vector<32x32xf32>, vector<16x32xf32> -> vector<16x32xf32>
    %442 = vector.broadcast %436 : vector<1x32xf32> to vector<16x32xf32>
    %443 = arith.addf %441, %442 : vector<16x32xf32>
    %cst_354 = arith.constant 0.000000e+00 : f32
    %444 = vector.broadcast %cst_354 : f32 to vector<16x32xf32>
    %445 = arith.subf %444, %443 : vector<16x32xf32>
    %446 = math.exp %445 : vector<16x32xf32>
    %cst_355 = arith.constant 1.000000e+00 : f32
    %447 = vector.broadcast %cst_355 : f32 to vector<16x32xf32>
    %448 = arith.addf %447, %446 : vector<16x32xf32>
    %cst_356 = arith.constant 1.000000e+00 : f32
    %449 = vector.broadcast %cst_356 : f32 to vector<16x32xf32>
    %450 = arith.divf %449, %448 : vector<16x32xf32>
    %451 = math.tanh %440 : vector<16x32xf32>
    %452 = arith.mulf %451, %450 : vector<16x32xf32>
    %453 = arith.addf %428, %452 : vector<16x32xf32>
    %454 = arith.addf %452, %437 : vector<16x32xf32>
    %c8_357 = arith.constant 8 : index
    %c0_358 = arith.constant 0 : index
    %455 = vector.load %arg10[%c8_357, %c0_358] : memref<24x32xf32, #tpu.memory_space<vmem>>, vector<16x32xf32>
    tpu.vector_store %arg10[%c8_357, %c0_358], %454 {strides = array<i32>} : memref<24x32xf32, #tpu.memory_space<vmem>>, vector<16x32xf32>,
    %c11_359 = arith.constant 11 : index
    %c0_360 = arith.constant 0 : index
    %c0_361 = arith.constant 0 : index
    %456 = vector.load %arg3[%c11_359, %c0_360, %c0_361] : memref<16x32x32xf32, #tpu.memory_space<vmem>>, vector<1x32x32xf32>
    %457 = vector.shape_cast %456 : vector<1x32x32xf32> to vector<32x32xf32>
    %c11_362 = arith.constant 11 : index
    %c0_363 = arith.constant 0 : index
    %c0_364 = arith.constant 0 : index
    %458 = vector.load %arg4[%c11_362, %c0_363, %c0_364] : memref<16x32x32xf32, #tpu.memory_space<vmem>>, vector<1x32x32xf32>
    %459 = vector.shape_cast %458 : vector<1x32x32xf32> to vector<32x32xf32>
    %c6_365 = arith.constant 6 : index
    %c0_366 = arith.constant 0 : index
    %460 = vector.load %arg5[%c6_365, %c0_366] : memref<9x32xf32, #tpu.memory_space<vmem>>, vector<1x32xf32>
    %c6_367 = arith.constant 6 : index
    %c0_368 = arith.constant 0 : index
    %461 = vector.load %arg6[%c6_367, %c0_368] : memref<9x32xf32, #tpu.memory_space<vmem>>, vector<1x32xf32>
    %c8_369 = arith.constant 8 : index
    %c0_370 = arith.constant 0 : index
    %462 = vector.load %arg10[%c8_369, %c0_370] : memref<24x32xf32, #tpu.memory_space<vmem>>, vector<16x32xf32>
    %cst_371 = arith.constant dense<0.000000e+00> : vector<16x32xf32>
    %463 = tpu.matmul %462, %457, %cst_371 {dimension_numbers = #tpu.dot_dimension_numbers<[1], [0], [0], [1], [0, 0, 1, 1], [], []>} : vector<16x32xf32>, vector<32x32xf32>, vector<16x32xf32> -> vector<16x32xf32>
    %464 = vector.broadcast %460 : vector<1x32xf32> to vector<16x32xf32>
    %465 = arith.addf %463, %464 : vector<16x32xf32>
    %cst_372 = arith.constant dense<0.000000e+00> : vector<16x32xf32>
    %466 = tpu.matmul %462, %459, %cst_372 {dimension_numbers = #tpu.dot_dimension_numbers<[1], [0], [0], [1], [0, 0, 1, 1], [], []>} : vector<16x32xf32>, vector<32x32xf32>, vector<16x32xf32> -> vector<16x32xf32>
    %467 = vector.broadcast %461 : vector<1x32xf32> to vector<16x32xf32>
    %468 = arith.addf %466, %467 : vector<16x32xf32>
    %cst_373 = arith.constant 0.000000e+00 : f32
    %469 = vector.broadcast %cst_373 : f32 to vector<16x32xf32>
    %470 = arith.subf %469, %468 : vector<16x32xf32>
    %471 = math.exp %470 : vector<16x32xf32>
    %cst_374 = arith.constant 1.000000e+00 : f32
    %472 = vector.broadcast %cst_374 : f32 to vector<16x32xf32>
    %473 = arith.addf %472, %471 : vector<16x32xf32>
    %cst_375 = arith.constant 1.000000e+00 : f32
    %474 = vector.broadcast %cst_375 : f32 to vector<16x32xf32>
    %475 = arith.divf %474, %473 : vector<16x32xf32>
    %476 = math.tanh %465 : vector<16x32xf32>
    %477 = arith.mulf %476, %475 : vector<16x32xf32>
    %478 = arith.addf %453, %477 : vector<16x32xf32>
    %479 = arith.addf %477, %462 : vector<16x32xf32>
    %c8_376 = arith.constant 8 : index
    %c0_377 = arith.constant 0 : index
    %480 = vector.load %arg10[%c8_376, %c0_377] : memref<24x32xf32, #tpu.memory_space<vmem>>, vector<16x32xf32>
    tpu.vector_store %arg10[%c8_376, %c0_377], %479 {strides = array<i32>} : memref<24x32xf32, #tpu.memory_space<vmem>>, vector<16x32xf32>,
    %c13_378 = arith.constant 13 : index
    %c0_379 = arith.constant 0 : index
    %c0_380 = arith.constant 0 : index
    %481 = vector.load %arg3[%c13_378, %c0_379, %c0_380] : memref<16x32x32xf32, #tpu.memory_space<vmem>>, vector<1x32x32xf32>
    %482 = vector.shape_cast %481 : vector<1x32x32xf32> to vector<32x32xf32>
    %c13_381 = arith.constant 13 : index
    %c0_382 = arith.constant 0 : index
    %c0_383 = arith.constant 0 : index
    %483 = vector.load %arg4[%c13_381, %c0_382, %c0_383] : memref<16x32x32xf32, #tpu.memory_space<vmem>>, vector<1x32x32xf32>
    %484 = vector.shape_cast %483 : vector<1x32x32xf32> to vector<32x32xf32>
    %c7_384 = arith.constant 7 : index
    %c0_385 = arith.constant 0 : index
    %485 = vector.load %arg5[%c7_384, %c0_385] : memref<9x32xf32, #tpu.memory_space<vmem>>, vector<1x32xf32>
    %c7_386 = arith.constant 7 : index
    %c0_387 = arith.constant 0 : index
    %486 = vector.load %arg6[%c7_386, %c0_387] : memref<9x32xf32, #tpu.memory_space<vmem>>, vector<1x32xf32>
    %c8_388 = arith.constant 8 : index
    %c0_389 = arith.constant 0 : index
    %487 = vector.load %arg10[%c8_388, %c0_389] : memref<24x32xf32, #tpu.memory_space<vmem>>, vector<16x32xf32>
    %cst_390 = arith.constant dense<0.000000e+00> : vector<16x32xf32>
    %488 = tpu.matmul %487, %482, %cst_390 {dimension_numbers = #tpu.dot_dimension_numbers<[1], [0], [0], [1], [0, 0, 1, 1], [], []>} : vector<16x32xf32>, vector<32x32xf32>, vector<16x32xf32> -> vector<16x32xf32>
    %489 = vector.broadcast %485 : vector<1x32xf32> to vector<16x32xf32>
    %490 = arith.addf %488, %489 : vector<16x32xf32>
    %cst_391 = arith.constant dense<0.000000e+00> : vector<16x32xf32>
    %491 = tpu.matmul %487, %484, %cst_391 {dimension_numbers = #tpu.dot_dimension_numbers<[1], [0], [0], [1], [0, 0, 1, 1], [], []>} : vector<16x32xf32>, vector<32x32xf32>, vector<16x32xf32> -> vector<16x32xf32>
    %492 = vector.broadcast %486 : vector<1x32xf32> to vector<16x32xf32>
    %493 = arith.addf %491, %492 : vector<16x32xf32>
    %cst_392 = arith.constant 0.000000e+00 : f32
    %494 = vector.broadcast %cst_392 : f32 to vector<16x32xf32>
    %495 = arith.subf %494, %493 : vector<16x32xf32>
    %496 = math.exp %495 : vector<16x32xf32>
    %cst_393 = arith.constant 1.000000e+00 : f32
    %497 = vector.broadcast %cst_393 : f32 to vector<16x32xf32>
    %498 = arith.addf %497, %496 : vector<16x32xf32>
    %cst_394 = arith.constant 1.000000e+00 : f32
    %499 = vector.broadcast %cst_394 : f32 to vector<16x32xf32>
    %500 = arith.divf %499, %498 : vector<16x32xf32>
    %501 = math.tanh %490 : vector<16x32xf32>
    %502 = arith.mulf %501, %500 : vector<16x32xf32>
    %503 = arith.addf %478, %502 : vector<16x32xf32>
    %504 = arith.addf %502, %487 : vector<16x32xf32>
    %c8_395 = arith.constant 8 : index
    %c0_396 = arith.constant 0 : index
    %505 = vector.load %arg10[%c8_395, %c0_396] : memref<24x32xf32, #tpu.memory_space<vmem>>, vector<16x32xf32>
    tpu.vector_store %arg10[%c8_395, %c0_396], %504 {strides = array<i32>} : memref<24x32xf32, #tpu.memory_space<vmem>>, vector<16x32xf32>,
    %c15_397 = arith.constant 15 : index
    %c0_398 = arith.constant 0 : index
    %c0_399 = arith.constant 0 : index
    %506 = vector.load %arg3[%c15_397, %c0_398, %c0_399] : memref<16x32x32xf32, #tpu.memory_space<vmem>>, vector<1x32x32xf32>
    %507 = vector.shape_cast %506 : vector<1x32x32xf32> to vector<32x32xf32>
    %c15_400 = arith.constant 15 : index
    %c0_401 = arith.constant 0 : index
    %c0_402 = arith.constant 0 : index
    %508 = vector.load %arg4[%c15_400, %c0_401, %c0_402] : memref<16x32x32xf32, #tpu.memory_space<vmem>>, vector<1x32x32xf32>
    %509 = vector.shape_cast %508 : vector<1x32x32xf32> to vector<32x32xf32>
    %c8_403 = arith.constant 8 : index
    %c0_404 = arith.constant 0 : index
    %510 = vector.load %arg5[%c8_403, %c0_404] : memref<9x32xf32, #tpu.memory_space<vmem>>, vector<1x32xf32>
    %c8_405 = arith.constant 8 : index
    %c0_406 = arith.constant 0 : index
    %511 = vector.load %arg6[%c8_405, %c0_406] : memref<9x32xf32, #tpu.memory_space<vmem>>, vector<1x32xf32>
    %c8_407 = arith.constant 8 : index
    %c0_408 = arith.constant 0 : index
    %512 = vector.load %arg10[%c8_407, %c0_408] : memref<24x32xf32, #tpu.memory_space<vmem>>, vector<16x32xf32>
    %cst_409 = arith.constant dense<0.000000e+00> : vector<16x32xf32>
    %513 = tpu.matmul %512, %507, %cst_409 {dimension_numbers = #tpu.dot_dimension_numbers<[1], [0], [0], [1], [0, 0, 1, 1], [], []>} : vector<16x32xf32>, vector<32x32xf32>, vector<16x32xf32> -> vector<16x32xf32>
    %514 = vector.broadcast %510 : vector<1x32xf32> to vector<16x32xf32>
    %515 = arith.addf %513, %514 : vector<16x32xf32>
    %cst_410 = arith.constant dense<0.000000e+00> : vector<16x32xf32>
    %516 = tpu.matmul %512, %509, %cst_410 {dimension_numbers = #tpu.dot_dimension_numbers<[1], [0], [0], [1], [0, 0, 1, 1], [], []>} : vector<16x32xf32>, vector<32x32xf32>, vector<16x32xf32> -> vector<16x32xf32>
    %517 = vector.broadcast %511 : vector<1x32xf32> to vector<16x32xf32>
    %518 = arith.addf %516, %517 : vector<16x32xf32>
    %cst_411 = arith.constant 0.000000e+00 : f32
    %519 = vector.broadcast %cst_411 : f32 to vector<16x32xf32>
    %520 = arith.subf %519, %518 : vector<16x32xf32>
    %521 = math.exp %520 : vector<16x32xf32>
    %cst_412 = arith.constant 1.000000e+00 : f32
    %522 = vector.broadcast %cst_412 : f32 to vector<16x32xf32>
    %523 = arith.addf %522, %521 : vector<16x32xf32>
    %cst_413 = arith.constant 1.000000e+00 : f32
    %524 = vector.broadcast %cst_413 : f32 to vector<16x32xf32>
    %525 = arith.divf %524, %523 : vector<16x32xf32>
    %526 = math.tanh %515 : vector<16x32xf32>
    %527 = arith.mulf %526, %525 : vector<16x32xf32>
    %528 = arith.addf %503, %527 : vector<16x32xf32>
    %529 = vector.broadcast %2 : vector<1x32xf32> to vector<16x32xf32>
    %530 = arith.mulf %528, %529 : vector<16x32xf32>
    %cst_414 = arith.constant dense<0.000000e+00> : vector<16xf32>
    %531 = vector.multi_reduction <add>, %530, %cst_414 [1] : vector<16x32xf32> to vector<16xf32>
    %532 = vector.shape_cast %531 : vector<16xf32> to vector<16x1xf32>
    %533 = vector.broadcast %3 : vector<1x1xf32> to vector<16x1xf32>
    %534 = arith.addf %532, %533 : vector<16x1xf32>
    %c16 = arith.constant 16 : index
    %c0_415 = arith.constant 0 : index
    %535 = vector.load %arg9[%c16, %c0_415] : memref<32x1xf32, #tpu.memory_space<vmem>>, vector<16x1xf32>
    tpu.vector_store %arg9[%c16, %c0_415], %534 {strides = array<i32>} : memref<32x1xf32, #tpu.memory_space<vmem>>, vector<16x1xf32>,
    return
  }
}

</mosaic_0001>

<llo_original>
// kernel: ar_discriminator_forward.1
$region0: #{ar_discriminator_forward.1}
  #allocation0 [shape = 'u32[]', space=smem, size = 0x4, offset = 0x4, fixed_abs, tag = 'smem constant byte address 0x4 - core index']
  #allocation1 [shape = 'u32[144,128]{1,0:T(1,128)}', space=vmem, size = 0x12000, scoped, tag = 'internal scratch']
  #allocation2 [shape = 'f32[24,32]{1,0:T(8,128)}', space=vmem, size = 0x3000, scoped, tag = 'scratch operand']
  #allocation3 [shape = 'f32[1,1]{1,0:T(1,128)S(1)}', space=vmem, size = 0x200, scoped, tag = 'scoped memory for ar_discriminator_forward.1']
  %s0 = inlined_call_operand.vmem [shape: f32[48,8], index: 0, kind: input, shape index: {}]
  %s1 = inlined_call_operand.vmem [shape: f32[2,8,32], index: 1, kind: input, shape index: {}]
  %s2 = inlined_call_operand.vmem [shape: f32[2,8,32], index: 2, kind: input, shape index: {}]
  %s3 = inlined_call_operand.vmem [shape: f32[16,32,32], index: 3, kind: input, shape index: {}]
  %s4 = inlined_call_operand.vmem [shape: f32[16,32,32], index: 4, kind: input, shape index: {}]
  %s5 = inlined_call_operand.vmem [shape: f32[9,32], index: 5, kind: input, shape index: {}]
  %s6 = inlined_call_operand.vmem [shape: f32[9,32], index: 6, kind: input, shape index: {}]
  %s7 = inlined_call_operand.vmem [shape: f32[1,32], index: 7, kind: input, shape index: {}]
  %s8 = inlined_call_operand.<no memory space> [shape: f32[1,1], index: 8, kind: input, shape index: {}]
  %s9 = inlined_call_operand.vmem [shape: f32[32,1], index: 9, kind: output, shape index: {}]
  %s10 = sld [smem:[#allocation0]]
  $region46: #{ar_discriminator_forward.1} parent=0
    _
  %s12 = ssub.s32 1, %s10
  %s13 = scalar_select 0, %s12, %s10
  %v14 = vstv %s8
  %15 = vst [vmem:[#allocation3] sm:$0x1] %v14
  // Predicated region
  $region2: #{ar_discriminator_forward.1} parent=0 // pred_check
    _
  $region3: #{ar_discriminator_forward.1} parent=0 // pred_check_branch
    %17 = sbr.rel (0) target = $region5
  $region4: #{ar_discriminator_forward.1} parent=0 // pred_region
    _
  $region5: #{ar_discriminator_forward.1} parent=0 // pred_fallthru
    _
  // Predicated region
  $region6: #{ar_discriminator_forward.1} parent=0 // pred_check
    _
  $region7: #{ar_discriminator_forward.1} parent=0 // pred_check_branch
    %19 = sbr.rel (0) target = $region9
  $region8: #{ar_discriminator_forward.1} parent=0 // pred_region
    _
  $region9: #{ar_discriminator_forward.1} parent=0 // pred_fallthru
    _
  // Predicated region
  $region10: #{ar_discriminator_forward.1} parent=0 // pred_check
    _
  $region11: #{ar_discriminator_forward.1} parent=0 // pred_check_branch
    %21 = sbr.rel (0) target = $region13
  $region12: #{ar_discriminator_forward.1} parent=0 // pred_region
    _
  $region13: #{ar_discriminator_forward.1} parent=0 // pred_fallthru
    _
  // Predicated region
  $region14: #{ar_discriminator_forward.1} parent=0 // pred_check
    _
  $region15: #{ar_discriminator_forward.1} parent=0 // pred_check_branch
    %23 = sbr.rel (0) target = $region17
  $region16: #{ar_discriminator_forward.1} parent=0 // pred_region
    _
  $region17: #{ar_discriminator_forward.1} parent=0 // pred_fallthru
    _
  // Predicated region
  $region18: #{ar_discriminator_forward.1} parent=0 // pred_check
    _
  $region19: #{ar_discriminator_forward.1} parent=0 // pred_check_branch
    %25 = sbr.rel (0) target = $region21
  $region20: #{ar_discriminator_forward.1} parent=0 // pred_region
    _
  $region21: #{ar_discriminator_forward.1} parent=0 // pred_fallthru
    _
  // Predicated region
  $region22: #{ar_discriminator_forward.1} parent=0 // pred_check
    _
  $region23: #{ar_discriminator_forward.1} parent=0 // pred_check_branch
    %27 = sbr.rel (0) target = $region25
  $region24: #{ar_discriminator_forward.1} parent=0 // pred_region
    _
  $region25: #{ar_discriminator_forward.1} parent=0 // pred_fallthru
    _
  // Predicated region
  $region26: #{ar_discriminator_forward.1} parent=0 // pred_check
    _
  $region27: #{ar_discriminator_forward.1} parent=0 // pred_check_branch
    %29 = sbr.rel (0) target = $region29
  $region28: #{ar_discriminator_forward.1} parent=0 // pred_region
    _
  $region29: #{ar_discriminator_forward.1} parent=0 // pred_fallthru
    _
  // Predicated region
  $region30: #{ar_discriminator_forward.1} parent=0 // pred_check
    _
  $region31: #{ar_discriminator_forward.1} parent=0 // pred_check_branch
    %31 = sbr.rel (0) target = $region33
  $region32: #{ar_discriminator_forward.1} parent=0 // pred_region
    _
  $region33: #{ar_discriminator_forward.1} parent=0 // pred_fallthru
    _
  // Predicated region
  $region34: #{ar_discriminator_forward.1} parent=0 // pred_check
    _
  $region35: #{ar_discriminator_forward.1} parent=0 // pred_check_branch
    %33 = sbr.rel (0) target = $region37
  $region36: #{ar_discriminator_forward.1} parent=0 // pred_region
    _
  $region37: #{ar_discriminator_forward.1} parent=0 // pred_fallthru
    _
  %vm34 = vcmask 261120
  %35 = vst.msk [vmem:[#allocation2] sm:$0xff] %vm34, 0.0
  %36 = vst.msk [vmem:[#allocation2 + $0x8] sm:$0xff] %vm34, 0.0
  %37 = vst.msk [vmem:[#allocation2 + $0x10] sm:$0xff] %vm34, 0.0
  %v38 = vld [vmem:[%s7] sm:$0x1]
  %v39 = vld [vmem:[#allocation3] sm:$0x1]
  %v40 = vld [vmem:[%s1] sm:$0xff]
  %s41 = scalar_lea.vmem %s1, 8
  %v42 = vld [vmem:[%s41] sm:$0xff]
  %v43 = vld [vmem:[%s2] sm:$0xff]
  %s44 = scalar_lea.vmem %s2, 8
  %v45 = vld [vmem:[%s44] sm:$0xff]
  %v46 = vld [vmem:[%s5] sm:$0x1]
  %v47 = vld [vmem:[%s6] sm:$0x1]
  %v48 = vld [vmem:[%s0 + $0x8] sm:$0xff]
  %v49 = vld [vmem:[%s0 + $0x10] sm:$0xff]
  %v50 = vlaneseq
  %v51 = vshrl.u32 %v50, 7
  %v52 = vsub.s32 0, %v51
  %v53 = vrot.slane %v46, %v52
  %vm54 = vcmask 64512
  %v56 = vsel %vm54, %v48, 0
  %v59 = vsel %vm54, %v49, 0
  %61 = vmatprep.subr.mxu0 0.0
  %62 = vmatpush1.msra.mxu0 %v42
  %63 = vmatprep.subr.mxu0 0.0
  %64 = vmatpush1.msra.mxu0 0.0
  %65 = vmatprep.subr.mxu0 0.0
  %66 = vmatpush1.msra.mxu0 0.0
  %67 = vmatprep.subr.mxu0 0.0
  %68 = vmatpush1.msra.mxu0 0.0
  %69 = vmatprep.subr.mxu0 0.0
  %70 = vmatpush1.msra.mxu0 0.0
  %71 = vmatprep.subr.mxu0 0.0
  %72 = vmatpush1.msra.mxu0 0.0
  %73 = vmatprep.subr.mxu0 0.0
  %74 = vmatpush1.msra.mxu0 0.0
  %75 = vmatprep.subr.mxu0 0.0
  %76 = vmatpush1.msra.mxu0 0.0
  %77 = vmatprep.subr.mxu0 0.0
  %78 = vmatpush1.msra.mxu0 0.0
  %79 = vmatprep.subr.mxu0 0.0
  %80 = vmatpush1.msra.mxu0 0.0
  %81 = vmatprep.subr.mxu0 0.0
  %82 = vmatpush1.msra.mxu0 0.0
  %83 = vmatprep.subr.mxu0 0.0
  %84 = vmatpush1.msra.mxu0 0.0
  %85 = vmatprep.subr.mxu0 0.0
  %86 = vmatpush1.msra.mxu0 0.0
  %87 = vmatprep.subr.mxu0 0.0
  %88 = vmatpush1.msra.mxu0 0.0
  %89 = vmatprep.subr.mxu0 0.0
  %90 = vmatpush1.msra.mxu0 0.0
  %91 = vmatprep.subr.mxu0 0.0
  %92 = vmatpush1.msra.mxu0 0.0
  %93 = vmatprep.subr.mxu0 0.0
  %94 = vmatpush1.msra.mxu0 0.0
  %95 = vmatprep.subr.mxu0 0.0
  %96 = vmatpush1.msra.mxu0 0.0
  %97 = vmatprep.subr.mxu0 0.0
  %98 = vmatpush1.msra.mxu0 0.0
  %99 = vmatprep.subr.mxu0 0.0
  %100 = vmatpush1.msra.mxu0 0.0
  %101 = vmatprep.subr.mxu0 0.0
  %102 = vmatpush1.msra.mxu0 0.0
  %103 = vmatprep.subr.mxu0 0.0
  %104 = vmatpush1.msra.mxu0 0.0
  %105 = vmatprep.subr.mxu0 0.0
  %106 = vmatpush1.msra.mxu0 0.0
  %107 = vmatprep.subr.mxu0 0.0
  %108 = vmatpush1.msra.mxu0 0.0
  %109 = vmatprep.subr.mxu0 0.0
  %110 = vmatpush1.msra.mxu0 0.0
  %111 = vmatprep.subr.mxu0 0.0
  %112 = vmatpush1.msra.mxu0 0.0
  %113 = vmatprep.subr.mxu0 0.0
  %114 = vmatpush1.msra.mxu0 0.0
  %115 = vmatprep.subr.mxu0 0.0
  %116 = vmatpush1.msra.mxu0 0.0
  %117 = vmatprep.subr.mxu0 0.0
  %118 = vmatpush1.msra.mxu0 0.0
  %119 = vmatprep.subr.mxu0 0.0
  %120 = vmatpush1.msra.mxu0 0.0
  %121 = vmatprep.subr.mxu0 0.0
  %122 = vmatpush1.msra.mxu0 0.0
  %123 = vmatprep.subr.mxu0 0.0
  %124 = vmatpush1.msra.mxu0 0.0
  %125 = vmatprep.mubr.f32.mxu0 0.0
  %126 = vmatmul.mubr.f32.gmra.mrb[0].mxu0 %v56
  %v127 = vpop.f32.mrb[0].mxu0
  %v128 = vadd.f32 %v53, %v127
  %v129 = vpop.f32.mrb[0].mxu0
  %130 = vmatprep.mubr.f32.mxu0 0.0
  %131 = vmatmul.mubr.f32.gmra.mrb[0].mxu0 %v59
  %v132 = vpop.f32.mrb[0].mxu0
  %v133 = vadd.f32 %v53, %v132
  %v134 = vpop.f32.mrb[0].mxu0
  %135 = vdwg.mxu0
  %v136 = vlaneseq
  %v137 = vshrl.u32 %v136, 7
  %v138 = vsub.s32 0, %v137
  %v139 = vrot.slane %v47, %v138
  %140 = vmatprep.subr.mxu0 0.0
  %141 = vmatpush1.msra.mxu0 %v45
  %142 = vmatprep.subr.mxu0 0.0
  %143 = vmatpush1.msra.mxu0 0.0
  %144 = vmatprep.subr.mxu0 0.0
  %145 = vmatpush1.msra.mxu0 0.0
  %146 = vmatprep.subr.mxu0 0.0
  %147 = vmatpush1.msra.mxu0 0.0
  %148 = vmatprep.subr.mxu0 0.0
  %149 = vmatpush1.msra.mxu0 0.0
  %150 = vmatprep.subr.mxu0 0.0
  %151 = vmatpush1.msra.mxu0 0.0
  %152 = vmatprep.subr.mxu0 0.0
  %153 = vmatpush1.msra.mxu0 0.0
  %154 = vmatprep.subr.mxu0 0.0
  %155 = vmatpush1.msra.mxu0 0.0
  %156 = vmatprep.subr.mxu0 0.0
  %157 = vmatpush1.msra.mxu0 0.0
  %158 = vmatprep.subr.mxu0 0.0
  %159 = vmatpush1.msra.mxu0 0.0
  %160 = vmatprep.subr.mxu0 0.0
  %161 = vmatpush1.msra.mxu0 0.0
  %162 = vmatprep.subr.mxu0 0.0
  %163 = vmatpush1.msra.mxu0 0.0
  %164 = vmatprep.subr.mxu0 0.0
  %165 = vmatpush1.msra.mxu0 0.0
  %166 = vmatprep.subr.mxu0 0.0
  %167 = vmatpush1.msra.mxu0 0.0
  %168 = vmatprep.subr.mxu0 0.0
  %169 = vmatpush1.msra.mxu0 0.0
  %170 = vmatprep.subr.mxu0 0.0
  %171 = vmatpush1.msra.mxu0 0.0
  %172 = vmatprep.subr.mxu0 0.0
  %173 = vmatpush1.msra.mxu0 0.0
  %174 = vmatprep.subr.mxu0 0.0
  %175 = vmatpush1.msra.mxu0 0.0
  %176 = vmatprep.subr.mxu0 0.0
  %177 = vmatpush1.msra.mxu0 0.0
  %178 = vmatprep.subr.mxu0 0.0
  %179 = vmatpush1.msra.mxu0 0.0
  %180 = vmatprep.subr.mxu0 0.0
  %181 = vmatpush1.msra.mxu0 0.0
  %182 = vmatprep.subr.mxu0 0.0
  %183 = vmatpush1.msra.mxu0 0.0
  %184 = vmatprep.subr.mxu0 0.0
  %185 = vmatpush1.msra.mxu0 0.0
  %186 = vmatprep.subr.mxu0 0.0
  %187 = vmatpush1.msra.mxu0 0.0
  %188 = vmatprep.subr.mxu0 0.0
  %189 = vmatpush1.msra.mxu0 0.0
  %190 = vmatprep.subr.mxu0 0.0
  %191 = vmatpush1.msra.mxu0 0.0
  %192 = vmatprep.subr.mxu0 0.0
  %193 = vmatpush1.msra.mxu0 0.0
  %194 = vmatprep.subr.mxu0 0.0
  %195 = vmatpush1.msra.mxu0 0.0
  %196 = vmatprep.subr.mxu0 0.0
  %197 = vmatpush1.msra.mxu0 0.0
  %198 = vmatprep.subr.mxu0 0.0
  %199 = vmatpush1.msra.mxu0 0.0
  %200 = vmatprep.subr.mxu0 0.0
  %201 = vmatpush1.msra.mxu0 0.0
  %202 = vmatprep.subr.mxu0 0.0
  %203 = vmatpush1.msra.mxu0 0.0
  %204 = vmatprep.mubr.f32.mxu0 0.0
  %205 = vmatmul.mubr.f32.gmra.mrb[0].mxu0 %v56
  %v206 = vpop.f32.mrb[0].mxu0
  %v207 = vadd.f32 %v139, %v206
  %v208 = vpop.f32.mrb[0].mxu0
  %209 = vmatprep.mubr.f32.mxu0 0.0
  %210 = vmatmul.mubr.f32.gmra.mrb[0].mxu0 %v59
  %v211 = vpop.f32.mrb[0].mxu0
  %v212 = vadd.f32 %v139, %v211
  %v213 = vpop.f32.mrb[0].mxu0
  %214 = vdwg.mxu0
  %v215 = vld [vmem:[%s0 + $0x7] sm:$0xff]
  %v216 = vld [vmem:[%s0 + $0xf] sm:$0xff]
  %v218 = vsel %vm54, %v215, 0
  %v221 = vsel %vm54, %v216, 0
  %223 = vmatprep.subr.mxu0 0.0
  %224 = vmatpush1.msra.mxu0 %v40
  %225 = vmatprep.subr.mxu0 0.0
  %226 = vmatpush1.msra.mxu0 0.0
  %227 = vmatprep.subr.mxu0 0.0
  %228 = vmatpush1.msra.mxu0 0.0
  %229 = vmatprep.subr.mxu0 0.0
  %230 = vmatpush1.msra.mxu0 0.0
  %231 = vmatprep.subr.mxu0 0.0
  %232 = vmatpush1.msra.mxu0 0.0
  %233 = vmatprep.subr.mxu0 0.0
  %234 = vmatpush1.msra.mxu0 0.0
  %235 = vmatprep.subr.mxu0 0.0
  %236 = vmatpush1.msra.mxu0 0.0
  %237 = vmatprep.subr.mxu0 0.0
  %238 = vmatpush1.msra.mxu0 0.0
  %239 = vmatprep.subr.mxu0 0.0
  %240 = vmatpush1.msra.mxu0 0.0
  %241 = vmatprep.subr.mxu0 0.0
  %242 = vmatpush1.msra.mxu0 0.0
  %243 = vmatprep.subr.mxu0 0.0
  %244 = vmatpush1.msra.mxu0 0.0
  %245 = vmatprep.subr.mxu0 0.0
  %246 = vmatpush1.msra.mxu0 0.0
  %247 = vmatprep.subr.mxu0 0.0
  %248 = vmatpush1.msra.mxu0 0.0
  %249 = vmatprep.subr.mxu0 0.0
  %250 = vmatpush1.msra.mxu0 0.0
  %251 = vmatprep.subr.mxu0 0.0
  %252 = vmatpush1.msra.mxu0 0.0
  %253 = vmatprep.subr.mxu0 0.0
  %254 = vmatpush1.msra.mxu0 0.0
  %255 = vmatprep.subr.mxu0 0.0
  %256 = vmatpush1.msra.mxu0 0.0
  %257 = vmatprep.subr.mxu0 0.0
  %258 = vmatpush1.msra.mxu0 0.0
  %259 = vmatprep.subr.mxu0 0.0
  %260 = vmatpush1.msra.mxu0 0.0
  %261 = vmatprep.subr.mxu0 0.0
  %262 = vmatpush1.msra.mxu0 0.0
  %263 = vmatprep.subr.mxu0 0.0
  %264 = vmatpush1.msra.mxu0 0.0
  %265 = vmatprep.subr.mxu0 0.0
  %266 = vmatpush1.msra.mxu0 0.0
  %267 = vmatprep.subr.mxu0 0.0
  %268 = vmatpush1.msra.mxu0 0.0
  %269 = vmatprep.subr.mxu0 0.0
  %270 = vmatpush1.msra.mxu0 0.0
  %271 = vmatprep.subr.mxu0 0.0
  %272 = vmatpush1.msra.mxu0 0.0
  %273 = vmatprep.subr.mxu0 0.0
  %274 = vmatpush1.msra.mxu0 0.0
  %275 = vmatprep.subr.mxu0 0.0
  %276 = vmatpush1.msra.mxu0 0.0
  %277 = vmatprep.subr.mxu0 0.0
  %278 = vmatpush1.msra.mxu0 0.0
  %279 = vmatprep.subr.mxu0 0.0
  %280 = vmatpush1.msra.mxu0 0.0
  %281 = vmatprep.subr.mxu0 0.0
  %282 = vmatpush1.msra.mxu0 0.0
  %283 = vmatprep.subr.mxu0 0.0
  %284 = vmatpush1.msra.mxu0 0.0
  %285 = vmatprep.subr.mxu0 0.0
  %286 = vmatpush1.msra.mxu0 0.0
  %287 = vmatprep.mubr.f32.mxu0 0.0
  %288 = vmatmul.mubr.f32.gmra.mrb[0].mxu0 %v218
  %v289 = vpop.f32.mrb[0].mxu0
  %v290 = vadd.f32 0.0, %v289
  %v291 = vpop.f32.mrb[0].mxu0
  %292 = vmatprep.mubr.f32.mxu0 0.0
  %293 = vmatmul.mubr.f32.gmra.mrb[0].mxu0 %v221
  %v294 = vpop.f32.mrb[0].mxu0
  %v295 = vadd.f32 0.0, %v294
  %v296 = vpop.f32.mrb[0].mxu0
  %297 = vdwg.mxu0
  %v298 = vadd.f32 %v128, %v290
  %v299 = vadd.f32 %v133, %v295
  %300 = vmatprep.subr.mxu0 0.0
  %301 = vmatpush1.msra.mxu0 %v43
  %302 = vmatprep.subr.mxu0 0.0
  %303 = vmatpush1.msra.mxu0 0.0
  %304 = vmatprep.subr.mxu0 0.0
  %305 = vmatpush1.msra.mxu0 0.0
  %306 = vmatprep.subr.mxu0 0.0
  %307 = vmatpush1.msra.mxu0 0.0
  %308 = vmatprep.subr.mxu0 0.0
  %309 = vmatpush1.msra.mxu0 0.0
  %310 = vmatprep.subr.mxu0 0.0
  %311 = vmatpush1.msra.mxu0 0.0
  %312 = vmatprep.subr.mxu0 0.0
  %313 = vmatpush1.msra.mxu0 0.0
  %314 = vmatprep.subr.mxu0 0.0
  %315 = vmatpush1.msra.mxu0 0.0
  %316 = vmatprep.subr.mxu0 0.0
  %317 = vmatpush1.msra.mxu0 0.0
  %318 = vmatprep.subr.mxu0 0.0
  %319 = vmatpush1.msra.mxu0 0.0
  %320 = vmatprep.subr.mxu0 0.0
  %321 = vmatpush1.msra.mxu0 0.0
  %322 = vmatprep.subr.mxu0 0.0
  %323 = vmatpush1.msra.mxu0 0.0
  %324 = vmatprep.subr.mxu0 0.0
  %325 = vmatpush1.msra.mxu0 0.0
  %326 = vmatprep.subr.mxu0 0.0
  %327 = vmatpush1.msra.mxu0 0.0
  %328 = vmatprep.subr.mxu0 0.0
  %329 = vmatpush1.msra.mxu0 0.0
  %330 = vmatprep.subr.mxu0 0.0
  %331 = vmatpush1.msra.mxu0 0.0
  %332 = vmatprep.subr.mxu0 0.0
  %333 = vmatpush1.msra.mxu0 0.0
  %334 = vmatprep.subr.mxu0 0.0
  %335 = vmatpush1.msra.mxu0 0.0
  %336 = vmatprep.subr.mxu0 0.0
  %337 = vmatpush1.msra.mxu0 0.0
  %338 = vmatprep.subr.mxu0 0.0
  %339 = vmatpush1.msra.mxu0 0.0
  %340 = vmatprep.subr.mxu0 0.0
  %341 = vmatpush1.msra.mxu0 0.0
  %342 = vmatprep.subr.mxu0 0.0
  %343 = vmatpush1.msra.mxu0 0.0
  %344 = vmatprep.subr.mxu0 0.0
  %345 = vmatpush1.msra.mxu0 0.0
  %346 = vmatprep.subr.mxu0 0.0
  %347 = vmatpush1.msra.mxu0 0.0
  %348 = vmatprep.subr.mxu0 0.0
  %349 = vmatpush1.msra.mxu0 0.0
  %350 = vmatprep.subr.mxu0 0.0
  %351 = vmatpush1.msra.mxu0 0.0
  %352 = vmatprep.subr.mxu0 0.0
  %353 = vmatpush1.msra.mxu0 0.0
  %354 = vmatprep.subr.mxu0 0.0
  %355 = vmatpush1.msra.mxu0 0.0
  %356 = vmatprep.subr.mxu0 0.0
  %357 = vmatpush1.msra.mxu0 0.0
  %358 = vmatprep.subr.mxu0 0.0
  %359 = vmatpush1.msra.mxu0 0.0
  %360 = vmatprep.subr.mxu0 0.0
  %361 = vmatpush1.msra.mxu0 0.0
  %362 = vmatprep.subr.mxu0 0.0
  %363 = vmatpush1.msra.mxu0 0.0
  %364 = vmatprep.mubr.f32.mxu0 0.0
  %365 = vmatmul.mubr.f32.gmra.mrb[0].mxu0 %v218
  %v366 = vpop.f32.mrb[0].mxu0
  %v367 = vadd.f32 0.0, %v366
  %v368 = vpop.f32.mrb[0].mxu0
  %369 = vmatprep.mubr.f32.mxu0 0.0
  %370 = vmatmul.mubr.f32.gmra.mrb[0].mxu0 %v221
  %v371 = vpop.f32.mrb[0].mxu0
  %v372 = vadd.f32 0.0, %v371
  %v373 = vpop.f32.mrb[0].mxu0
  %374 = vdwg.mxu0
  %v375 = vadd.f32 %v207, %v367
  %v376 = vadd.f32 %v212, %v372
  %v377 = vsub.f32 0.0, %v375
  %v378 = vsub.f32 0.0, %v376
  %v379 = vmul.f32 %v377, 1.442695
  %v380 = vpow.pop %v379
  %v381 = vmul.f32 %v378, 1.442695
  %v382 = vpow.pop %v381
  %v383 = vadd.f32 %v380, 1.0
  %v384 = vadd.f32 %v382, 1.0
  %v385 = vrcp.pop %v383
  %v386 = vmul.f32 1.0, %v385
  %v387 = vrcp.pop %v384
  %v388 = vmul.f32 1.0, %v387
  %v389 = vtanh.pop %v298
  %v390 = vtanh.pop %v299
  %v391 = vmul.f32 %v389, %v386
  %v392 = vmul.f32 %v390, %v388
  %v393 = vadd.f32 %v391, 0.0
  %v394 = vadd.f32 %v392, 0.0
  %395 = vst.msk [vmem:[#allocation2 + $0x8] sm:$0xff] %vm34, %v391
  %396 = vst.msk [vmem:[#allocation2 + $0x10] sm:$0xff] %vm34, %v392
  %v397 = vld [vmem:[%s3] sm:$0xff]
  %v398 = vld [vmem:[%s3 + $0x8] sm:$0xff]
  %v399 = vld [vmem:[%s3 + $0x10] sm:$0xff]
  %v400 = vld [vmem:[%s3 + $0x18] sm:$0xff]
  %s401 = scalar_lea.vmem %s3, 32
  %v402 = vld [vmem:[%s401] sm:$0xff]
  %v403 = vld [vmem:[%s401 + $0x8] sm:$0xff]
  %v404 = vld [vmem:[%s401 + $0x10] sm:$0xff]
  %v405 = vld [vmem:[%s401 + $0x18] sm:$0xff]
  %v406 = vld [vmem:[%s4] sm:$0xff]
  %v407 = vld [vmem:[%s4 + $0x8] sm:$0xff]
  %v408 = vld [vmem:[%s4 + $0x10] sm:$0xff]
  %v409 = vld [vmem:[%s4 + $0x18] sm:$0xff]
  %s410 = scalar_lea.vmem %s4, 32
  %v411 = vld [vmem:[%s410] sm:$0xff]
  %v412 = vld [vmem:[%s410 + $0x8] sm:$0xff]
  %v413 = vld [vmem:[%s410 + $0x10] sm:$0xff]
  %v414 = vld [vmem:[%s410 + $0x18] sm:$0xff]
  %v415 = vld [vmem:[%s5 + $0x1] sm:$0x1]
  %v416 = vld [vmem:[%s6 + $0x1] sm:$0x1]
  %v417 = vld [vmem:[#allocation2 + $0x8] sm:$0xff]
  %v418 = vld [vmem:[#allocation2 + $0x10] sm:$0xff]
  %v419 = vlaneseq
  %v420 = vshrl.u32 %v419, 7
  %v421 = vsub.s32 0, %v420
  %v422 = vrot.slane %v415, %v421
  %v424 = vsel %vm34, %v417, 0
  %v427 = vsel %vm34, %v418, 0
  %429 = vmatprep.subr.mxu0 0.0
  %430 = vmatpush1.msra.mxu0 %v402
  %431 = vmatprep.subr.mxu0 0.0
  %432 = vmatpush1.msra.mxu0 %v403
  %433 = vmatprep.subr.mxu0 0.0
  %434 = vmatpush1.msra.mxu0 %v404
  %435 = vmatprep.subr.mxu0 0.0
  %436 = vmatpush1.msra.mxu0 %v405
  %437 = vmatprep.subr.mxu0 0.0
  %438 = vmatpush1.msra.mxu0 0.0
  %439 = vmatprep.subr.mxu0 0.0
  %440 = vmatpush1.msra.mxu0 0.0
  %441 = vmatprep.subr.mxu0 0.0
  %442 = vmatpush1.msra.mxu0 0.0
  %443 = vmatprep.subr.mxu0 0.0
  %444 = vmatpush1.msra.mxu0 0.0
  %445 = vmatprep.subr.mxu0 0.0
  %446 = vmatpush1.msra.mxu0 0.0
  %447 = vmatprep.subr.mxu0 0.0
  %448 = vmatpush1.msra.mxu0 0.0
  %449 = vmatprep.subr.mxu0 0.0
  %450 = vmatpush1.msra.mxu0 0.0
  %451 = vmatprep.subr.mxu0 0.0
  %452 = vmatpush1.msra.mxu0 0.0
  %453 = vmatprep.subr.mxu0 0.0
  %454 = vmatpush1.msra.mxu0 0.0
  %455 = vmatprep.subr.mxu0 0.0
  %456 = vmatpush1.msra.mxu0 0.0
  %457 = vmatprep.subr.mxu0 0.0
  %458 = vmatpush1.msra.mxu0 0.0
  %459 = vmatprep.subr.mxu0 0.0
  %460 = vmatpush1.msra.mxu0 0.0
  %461 = vmatprep.subr.mxu0 0.0
  %462 = vmatpush1.msra.mxu0 0.0
  %463 = vmatprep.subr.mxu0 0.0
  %464 = vmatpush1.msra.mxu0 0.0
  %465 = vmatprep.subr.mxu0 0.0
  %466 = vmatpush1.msra.mxu0 0.0
  %467 = vmatprep.subr.mxu0 0.0
  %468 = vmatpush1.msra.mxu0 0.0
  %469 = vmatprep.subr.mxu0 0.0
  %470 = vmatpush1.msra.mxu0 0.0
  %471 = vmatprep.subr.mxu0 0.0
  %472 = vmatpush1.msra.mxu0 0.0
  %473 = vmatprep.subr.mxu0 0.0
  %474 = vmatpush1.msra.mxu0 0.0
  %475 = vmatprep.subr.mxu0 0.0
  %476 = vmatpush1.msra.mxu0 0.0
  %477 = vmatprep.subr.mxu0 0.0
  %478 = vmatpush1.msra.mxu0 0.0
  %479 = vmatprep.subr.mxu0 0.0
  %480 = vmatpush1.msra.mxu0 0.0
  %481 = vmatprep.subr.mxu0 0.0
  %482 = vmatpush1.msra.mxu0 0.0
  %483 = vmatprep.subr.mxu0 0.0
  %484 = vmatpush1.msra.mxu0 0.0
  %485 = vmatprep.subr.mxu0 0.0
  %486 = vmatpush1.msra.mxu0 0.0
  %487 = vmatprep.subr.mxu0 0.0
  %488 = vmatpush1.msra.mxu0 0.0
  %489 = vmatprep.subr.mxu0 0.0
  %490 = vmatpush1.msra.mxu0 0.0
  %491 = vmatprep.subr.mxu0 0.0
  %492 = vmatpush1.msra.mxu0 0.0
  %493 = vmatprep.mubr.f32.mxu0 0.0
  %494 = vmatmul.mubr.f32.gmra.mrb[0].mxu0 %v424
  %v495 = vpop.f32.mrb[0].mxu0
  %v496 = vadd.f32 %v422, %v495
  %v497 = vpop.f32.mrb[0].mxu0
  %498 = vmatprep.mubr.f32.mxu0 0.0
  %499 = vmatmul.mubr.f32.gmra.mrb[0].mxu0 %v427
  %v500 = vpop.f32.mrb[0].mxu0
  %v501 = vadd.f32 %v422, %v500
  %v502 = vpop.f32.mrb[0].mxu0
  %503 = vdwg.mxu0
  %v504 = vlaneseq
  %v505 = vshrl.u32 %v504, 7
  %v506 = vsub.s32 0, %v505
  %v507 = vrot.slane %v416, %v506
  %508 = vmatprep.subr.mxu0 0.0
  %509 = vmatpush1.msra.mxu0 %v411
  %510 = vmatprep.subr.mxu0 0.0
  %511 = vmatpush1.msra.mxu0 %v412
  %512 = vmatprep.subr.mxu0 0.0
  %513 = vmatpush1.msra.mxu0 %v413
  %514 = vmatprep.subr.mxu0 0.0
  %515 = vmatpush1.msra.mxu0 %v414
  %516 = vmatprep.subr.mxu0 0.0
  %517 = vmatpush1.msra.mxu0 0.0
  %518 = vmatprep.subr.mxu0 0.0
  %519 = vmatpush1.msra.mxu0 0.0
  %520 = vmatprep.subr.mxu0 0.0
  %521 = vmatpush1.msra.mxu0 0.0
  %522 = vmatprep.subr.mxu0 0.0
  %523 = vmatpush1.msra.mxu0 0.0
  %524 = vmatprep.subr.mxu0 0.0
  %525 = vmatpush1.msra.mxu0 0.0
  %526 = vmatprep.subr.mxu0 0.0
  %527 = vmatpush1.msra.mxu0 0.0
  %528 = vmatprep.subr.mxu0 0.0
  %529 = vmatpush1.msra.mxu0 0.0
  %530 = vmatprep.subr.mxu0 0.0
  %531 = vmatpush1.msra.mxu0 0.0
  %532 = vmatprep.subr.mxu0 0.0
  %533 = vmatpush1.msra.mxu0 0.0
  %534 = vmatprep.subr.mxu0 0.0
  %535 = vmatpush1.msra.mxu0 0.0
  %536 = vmatprep.subr.mxu0 0.0
  %537 = vmatpush1.msra.mxu0 0.0
  %538 = vmatprep.subr.mxu0 0.0
  %539 = vmatpush1.msra.mxu0 0.0
  %540 = vmatprep.subr.mxu0 0.0
  %541 = vmatpush1.msra.mxu0 0.0
  %542 = vmatprep.subr.mxu0 0.0
  %543 = vmatpush1.msra.mxu0 0.0
  %544 = vmatprep.subr.mxu0 0.0
  %545 = vmatpush1.msra.mxu0 0.0
  %546 = vmatprep.subr.mxu0 0.0
  %547 = vmatpush1.msra.mxu0 0.0
  %548 = vmatprep.subr.mxu0 0.0
  %549 = vmatpush1.msra.mxu0 0.0
  %550 = vmatprep.subr.mxu0 0.0
  %551 = vmatpush1.msra.mxu0 0.0
  %552 = vmatprep.subr.mxu0 0.0
  %553 = vmatpush1.msra.mxu0 0.0
  %554 = vmatprep.subr.mxu0 0.0
  %555 = vmatpush1.msra.mxu0 0.0
  %556 = vmatprep.subr.mxu0 0.0
  %557 = vmatpush1.msra.mxu0 0.0
  %558 = vmatprep.subr.mxu0 0.0
  %559 = vmatpush1.msra.mxu0 0.0
  %560 = vmatprep.subr.mxu0 0.0
  %561 = vmatpush1.msra.mxu0 0.0
  %562 = vmatprep.subr.mxu0 0.0
  %563 = vmatpush1.msra.mxu0 0.0
  %564 = vmatprep.subr.mxu0 0.0
  %565 = vmatpush1.msra.mxu0 0.0
  %566 = vmatprep.subr.mxu0 0.0
  %567 = vmatpush1.msra.mxu0 0.0
  %568 = vmatprep.subr.mxu0 0.0
  %569 = vmatpush1.msra.mxu0 0.0
  %570 = vmatprep.subr.mxu0 0.0
  %571 = vmatpush1.msra.mxu0 0.0
  %572 = vmatprep.mubr.f32.mxu0 0.0
  %573 = vmatmul.mubr.f32.gmra.mrb[0].mxu0 %v424
  %v574 = vpop.f32.mrb[0].mxu0
  %v575 = vadd.f32 %v507, %v574
  %v576 = vpop.f32.mrb[0].mxu0
  %577 = vmatprep.mubr.f32.mxu0 0.0
  %578 = vmatmul.mubr.f32.gmra.mrb[0].mxu0 %v427
  %v579 = vpop.f32.mrb[0].mxu0
  %v580 = vadd.f32 %v507, %v579
  %v581 = vpop.f32.mrb[0].mxu0
  %582 = vdwg.mxu0
  %v583 = vld [vmem:[#allocation2 + $0x6] sm:$0xff]
  %v584 = vld [vmem:[#allocation2 + $0xe] sm:$0xff]
  %v586 = vsel %vm34, %v583, 0
  %v589 = vsel %vm34, %v584, 0
  %591 = vmatprep.subr.mxu0 0.0
  %592 = vmatpush1.msra.mxu0 %v397
  %593 = vmatprep.subr.mxu0 0.0
  %594 = vmatpush1.msra.mxu0 %v398
  %595 = vmatprep.subr.mxu0 0.0
  %596 = vmatpush1.msra.mxu0 %v399
  %597 = vmatprep.subr.mxu0 0.0
  %598 = vmatpush1.msra.mxu0 %v400
  %599 = vmatprep.subr.mxu0 0.0
  %600 = vmatpush1.msra.mxu0 0.0
  %601 = vmatprep.subr.mxu0 0.0
  %602 = vmatpush1.msra.mxu0 0.0
  %603 = vmatprep.subr.mxu0 0.0
  %604 = vmatpush1.msra.mxu0 0.0
  %605 = vmatprep.subr.mxu0 0.0
  %606 = vmatpush1.msra.mxu0 0.0
  %607 = vmatprep.subr.mxu0 0.0
  %608 = vmatpush1.msra.mxu0 0.0
  %609 = vmatprep.subr.mxu0 0.0
  %610 = vmatpush1.msra.mxu0 0.0
  %611 = vmatprep.subr.mxu0 0.0
  %612 = vmatpush1.msra.mxu0 0.0
  %613 = vmatprep.subr.mxu0 0.0
  %614 = vmatpush1.msra.mxu0 0.0
  %615 = vmatprep.subr.mxu0 0.0
  %616 = vmatpush1.msra.mxu0 0.0
  %617 = vmatprep.subr.mxu0 0.0
  %618 = vmatpush1.msra.mxu0 0.0
  %619 = vmatprep.subr.mxu0 0.0
  %620 = vmatpush1.msra.mxu0 0.0
  %621 = vmatprep.subr.mxu0 0.0
  %622 = vmatpush1.msra.mxu0 0.0
  %623 = vmatprep.subr.mxu0 0.0
  %624 = vmatpush1.msra.mxu0 0.0
  %625 = vmatprep.subr.mxu0 0.0
  %626 = vmatpush1.msra.mxu0 0.0
  %627 = vmatprep.subr.mxu0 0.0
  %628 = vmatpush1.msra.mxu0 0.0
  %629 = vmatprep.subr.mxu0 0.0
  %630 = vmatpush1.msra.mxu0 0.0
  %631 = vmatprep.subr.mxu0 0.0
  %632 = vmatpush1.msra.mxu0 0.0
  %633 = vmatprep.subr.mxu0 0.0
  %634 = vmatpush1.msra.mxu0 0.0
  %635 = vmatprep.subr.mxu0 0.0
  %636 = vmatpush1.msra.mxu0 0.0
  %637 = vmatprep.subr.mxu0 0.0
  %638 = vmatpush1.msra.mxu0 0.0
  %639 = vmatprep.subr.mxu0 0.0
  %640 = vmatpush1.msra.mxu0 0.0
  %641 = vmatprep.subr.mxu0 0.0
  %642 = vmatpush1.msra.mxu0 0.0
  %643 = vmatprep.subr.mxu0 0.0
  %644 = vmatpush1.msra.mxu0 0.0
  %645 = vmatprep.subr.mxu0 0.0
  %646 = vmatpush1.msra.mxu0 0.0
  %647 = vmatprep.subr.mxu0 0.0
  %648 = vmatpush1.msra.mxu0 0.0
  %649 = vmatprep.subr.mxu0 0.0
  %650 = vmatpush1.msra.mxu0 0.0
  %651 = vmatprep.subr.mxu0 0.0
  %652 = vmatpush1.msra.mxu0 0.0
  %653 = vmatprep.subr.mxu0 0.0
  %654 = vmatpush1.msra.mxu0 0.0
  %655 = vmatprep.mubr.f32.mxu0 0.0
  %656 = vmatmul.mubr.f32.gmra.mrb[0].mxu0 %v586
  %v657 = vpop.f32.mrb[0].mxu0
  %v658 = vadd.f32 0.0, %v657
  %v659 = vpop.f32.mrb[0].mxu0
  %660 = vmatprep.mubr.f32.mxu0 0.0
  %661 = vmatmul.mubr.f32.gmra.mrb[0].mxu0 %v589
  %v662 = vpop.f32.mrb[0].mxu0
  %v663 = vadd.f32 0.0, %v662
  %v664 = vpop.f32.mrb[0].mxu0
  %665 = vdwg.mxu0
  %v666 = vadd.f32 %v496, %v658
  %v667 = vadd.f32 %v501, %v663
  %668 = vmatprep.subr.mxu0 0.0
  %669 = vmatpush1.msra.mxu0 %v406
  %670 = vmatprep.subr.mxu0 0.0
  %671 = vmatpush1.msra.mxu0 %v407
  %672 = vmatprep.subr.mxu0 0.0
  %673 = vmatpush1.msra.mxu0 %v408
  %674 = vmatprep.subr.mxu0 0.0
  %675 = vmatpush1.msra.mxu0 %v409
  %676 = vmatprep.subr.mxu0 0.0
  %677 = vmatpush1.msra.mxu0 0.0
  %678 = vmatprep.subr.mxu0 0.0
  %679 = vmatpush1.msra.mxu0 0.0
  %680 = vmatprep.subr.mxu0 0.0
  %681 = vmatpush1.msra.mxu0 0.0
  %682 = vmatprep.subr.mxu0 0.0
  %683 = vmatpush1.msra.mxu0 0.0
  %684 = vmatprep.subr.mxu0 0.0
  %685 = vmatpush1.msra.mxu0 0.0
  %686 = vmatprep.subr.mxu0 0.0
  %687 = vmatpush1.msra.mxu0 0.0
  %688 = vmatprep.subr.mxu0 0.0
  %689 = vmatpush1.msra.mxu0 0.0
  %690 = vmatprep.subr.mxu0 0.0
  %691 = vmatpush1.msra.mxu0 0.0
  %692 = vmatprep.subr.mxu0 0.0
  %693 = vmatpush1.msra.mxu0 0.0
  %694 = vmatprep.subr.mxu0 0.0
  %695 = vmatpush1.msra.mxu0 0.0
  %696 = vmatprep.subr.mxu0 0.0
  %697 = vmatpush1.msra.mxu0 0.0
  %698 = vmatprep.subr.mxu0 0.0
  %699 = vmatpush1.msra.mxu0 0.0
  %700 = vmatprep.subr.mxu0 0.0
  %701 = vmatpush1.msra.mxu0 0.0
  %702 = vmatprep.subr.mxu0 0.0
  %703 = vmatpush1.msra.mxu0 0.0
  %704 = vmatprep.subr.mxu0 0.0
  %705 = vmatpush1.msra.mxu0 0.0
  %706 = vmatprep.subr.mxu0 0.0
  %707 = vmatpush1.msra.mxu0 0.0
  %708 = vmatprep.subr.mxu0 0.0
  %709 = vmatpush1.msra.mxu0 0.0
  %710 = vmatprep.subr.mxu0 0.0
  %711 = vmatpush1.msra.mxu0 0.0
  %712 = vmatprep.subr.mxu0 0.0
  %713 = vmatpush1.msra.mxu0 0.0
  %714 = vmatprep.subr.mxu0 0.0
  %715 = vmatpush1.msra.mxu0 0.0
  %716 = vmatprep.subr.mxu0 0.0
  %717 = vmatpush1.msra.mxu0 0.0
  %718 = vmatprep.subr.mxu0 0.0
  %719 = vmatpush1.msra.mxu0 0.0
  %720 = vmatprep.subr.mxu0 0.0
  %721 = vmatpush1.msra.mxu0 0.0
  %722 = vmatprep.subr.mxu0 0.0
  %723 = vmatpush1.msra.mxu0 0.0
  %724 = vmatprep.subr.mxu0 0.0
  %725 = vmatpush1.msra.mxu0 0.0
  %726 = vmatprep.subr.mxu0 0.0
  %727 = vmatpush1.msra.mxu0 0.0
  %728 = vmatprep.subr.mxu0 0.0
  %729 = vmatpush1.msra.mxu0 0.0
  %730 = vmatprep.subr.mxu0 0.0
  %731 = vmatpush1.msra.mxu0 0.0
  %732 = vmatprep.mubr.f32.mxu0 0.0
  %733 = vmatmul.mubr.f32.gmra.mrb[0].mxu0 %v586
  %v734 = vpop.f32.mrb[0].mxu0
  %v735 = vadd.f32 0.0, %v734
  %v736 = vpop.f32.mrb[0].mxu0
  %737 = vmatprep.mubr.f32.mxu0 0.0
  %738 = vmatmul.mubr.f32.gmra.mrb[0].mxu0 %v589
  %v739 = vpop.f32.mrb[0].mxu0
  %v740 = vadd.f32 0.0, %v739
  %v741 = vpop.f32.mrb[0].mxu0
  %742 = vdwg.mxu0
  %v743 = vadd.f32 %v575, %v735
  %v744 = vadd.f32 %v580, %v740
  %v745 = vsub.f32 0.0, %v743
  %v746 = vsub.f32 0.0, %v744
  %v747 = vmul.f32 %v745, 1.442695
  %v748 = vpow.pop %v747
  %v749 = vmul.f32 %v746, 1.442695
  %v750 = vpow.pop %v749
  %v751 = vadd.f32 %v748, 1.0
  %v752 = vadd.f32 %v750, 1.0
  %v753 = vrcp.pop %v751
  %v754 = vmul.f32 1.0, %v753
  %v755 = vrcp.pop %v752
  %v756 = vmul.f32 1.0, %v755
  %v757 = vtanh.pop %v666
  %v758 = vtanh.pop %v667
  %v759 = vmul.f32 %v757, %v754
  %v760 = vmul.f32 %v758, %v756
  %v761 = vadd.f32 %v393, %v759
  %v762 = vadd.f32 %v394, %v760
  %v763 = vadd.f32 %v759, %v417
  %v764 = vadd.f32 %v760, %v418
  %765 = vst.msk [vmem:[#allocation2 + $0x8] sm:$0xff] %vm34, %v763
  %766 = vst.msk [vmem:[#allocation2 + $0x10] sm:$0xff] %vm34, %v764
  %s767 = scalar_lea.vmem %s3, 64
  %v768 = vld [vmem:[%s767] sm:$0xff]
  %v769 = vld [vmem:[%s767 + $0x8] sm:$0xff]
  %v770 = vld [vmem:[%s767 + $0x10] sm:$0xff]
  %v771 = vld [vmem:[%s767 + $0x18] sm:$0xff]
  %s772 = scalar_lea.vmem %s3, 96
  %v773 = vld [vmem:[%s772] sm:$0xff]
  %v774 = vld [vmem:[%s772 + $0x8] sm:$0xff]
  %v775 = vld [vmem:[%s772 + $0x10] sm:$0xff]
  %v776 = vld [vmem:[%s772 + $0x18] sm:$0xff]
  %s777 = scalar_lea.vmem %s4, 64
  %v778 = vld [vmem:[%s777] sm:$0xff]
  %v779 = vld [vmem:[%s777 + $0x8] sm:$0xff]
  %v780 = vld [vmem:[%s777 + $0x10] sm:$0xff]
  %v781 = vld [vmem:[%s777 + $0x18] sm:$0xff]
  %s782 = scalar_lea.vmem %s4, 96
  %v783 = vld [vmem:[%s782] sm:$0xff]
  %v784 = vld [vmem:[%s782 + $0x8] sm:$0xff]
  %v785 = vld [vmem:[%s782 + $0x10] sm:$0xff]
  %v786 = vld [vmem:[%s782 + $0x18] sm:$0xff]
  %v787 = vld [vmem:[%s5 + $0x2] sm:$0x1]
  %v788 = vld [vmem:[%s6 + $0x2] sm:$0x1]
  %v789 = vld [vmem:[#allocation2 + $0x8] sm:$0xff]
  %v790 = vld [vmem:[#allocation2 + $0x10] sm:$0xff]
  %v791 = vlaneseq
  %v792 = vshrl.u32 %v791, 7
  %v793 = vsub.s32 0, %v792
  %v794 = vrot.slane %v787, %v793
  %v796 = vsel %vm34, %v789, 0
  %v799 = vsel %vm34, %v790, 0
  %801 = vmatprep.subr.mxu0 0.0
  %802 = vmatpush1.msra.mxu0 %v773
  %803 = vmatprep.subr.mxu0 0.0
  %804 = vmatpush1.msra.mxu0 %v774
  %805 = vmatprep.subr.mxu0 0.0
  %806 = vmatpush1.msra.mxu0 %v775
  %807 = vmatprep.subr.mxu0 0.0
  %808 = vmatpush1.msra.mxu0 %v776
  %809 = vmatprep.subr.mxu0 0.0
  %810 = vmatpush1.msra.mxu0 0.0
  %811 = vmatprep.subr.mxu0 0.0
  %812 = vmatpush1.msra.mxu0 0.0
  %813 = vmatprep.subr.mxu0 0.0
  %814 = vmatpush1.msra.mxu0 0.0
  %815 = vmatprep.subr.mxu0 0.0
  %816 = vmatpush1.msra.mxu0 0.0
  %817 = vmatprep.subr.mxu0 0.0
  %818 = vmatpush1.msra.mxu0 0.0
  %819 = vmatprep.subr.mxu0 0.0
  %820 = vmatpush1.msra.mxu0 0.0
  %821 = vmatprep.subr.mxu0 0.0
  %822 = vmatpush1.msra.mxu0 0.0
  %823 = vmatprep.subr.mxu0 0.0
  %824 = vmatpush1.msra.mxu0 0.0
  %825 = vmatprep.subr.mxu0 0.0
  %826 = vmatpush1.msra.mxu0 0.0
  %827 = vmatprep.subr.mxu0 0.0
  %828 = vmatpush1.msra.mxu0 0.0
  %829 = vmatprep.subr.mxu0 0.0
  %830 = vmatpush1.msra.mxu0 0.0
  %831 = vmatprep.subr.mxu0 0.0
  %832 = vmatpush1.msra.mxu0 0.0
  %833 = vmatprep.subr.mxu0 0.0
  %834 = vmatpush1.msra.mxu0 0.0
  %835 = vmatprep.subr.mxu0 0.0
  %836 = vmatpush1.msra.mxu0 0.0
  %837 = vmatprep.subr.mxu0 0.0
  %838 = vmatpush1.msra.mxu0 0.0
  %839 = vmatprep.subr.mxu0 0.0
  %840 = vmatpush1.msra.mxu0 0.0
  %841 = vmatprep.subr.mxu0 0.0
  %842 = vmatpush1.msra.mxu0 0.0
  %843 = vmatprep.subr.mxu0 0.0
  %844 = vmatpush1.msra.mxu0 0.0
  %845 = vmatprep.subr.mxu0 0.0
  %846 = vmatpush1.msra.mxu0 0.0
  %847 = vmatprep.subr.mxu0 0.0
  %848 = vmatpush1.msra.mxu0 0.0
  %849 = vmatprep.subr.mxu0 0.0
  %850 = vmatpush1.msra.mxu0 0.0
  %851 = vmatprep.subr.mxu0 0.0
  %852 = vmatpush1.msra.mxu0 0.0
  %853 = vmatprep.subr.mxu0 0.0
  %854 = vmatpush1.msra.mxu0 0.0
  %855 = vmatprep.subr.mxu0 0.0
  %856 = vmatpush1.msra.mxu0 0.0
  %857 = vmatprep.subr.mxu0 0.0
  %858 = vmatpush1.msra.mxu0 0.0
  %859 = vmatprep.subr.mxu0 0.0
  %860 = vmatpush1.msra.mxu0 0.0
  %861 = vmatprep.subr.mxu0 0.0
  %862 = vmatpush1.msra.mxu0 0.0
  %863 = vmatprep.subr.mxu0 0.0
  %864 = vmatpush1.msra.mxu0 0.0
  %865 = vmatprep.mubr.f32.mxu0 0.0
  %866 = vmatmul.mubr.f32.gmra.mrb[0].mxu0 %v796
  %v867 = vpop.f32.mrb[0].mxu0
  %v868 = vadd.f32 %v794, %v867
  %v869 = vpop.f32.mrb[0].mxu0
  %870 = vmatprep.mubr.f32.mxu0 0.0
  %871 = vmatmul.mubr.f32.gmra.mrb[0].mxu0 %v799
  %v872 = vpop.f32.mrb[0].mxu0
  %v873 = vadd.f32 %v794, %v872
  %v874 = vpop.f32.mrb[0].mxu0
  %875 = vdwg.mxu0
  %v876 = vlaneseq
  %v877 = vshrl.u32 %v876, 7
  %v878 = vsub.s32 0, %v877
  %v879 = vrot.slane %v788, %v878
  %880 = vmatprep.subr.mxu0 0.0
  %881 = vmatpush1.msra.mxu0 %v783
  %882 = vmatprep.subr.mxu0 0.0
  %883 = vmatpush1.msra.mxu0 %v784
  %884 = vmatprep.subr.mxu0 0.0
  %885 = vmatpush1.msra.mxu0 %v785
  %886 = vmatprep.subr.mxu0 0.0
  %887 = vmatpush1.msra.mxu0 %v786
  %888 = vmatprep.subr.mxu0 0.0
  %889 = vmatpush1.msra.mxu0 0.0
  %890 = vmatprep.subr.mxu0 0.0
  %891 = vmatpush1.msra.mxu0 0.0
  %892 = vmatprep.subr.mxu0 0.0
  %893 = vmatpush1.msra.mxu0 0.0
  %894 = vmatprep.subr.mxu0 0.0
  %895 = vmatpush1.msra.mxu0 0.0
  %896 = vmatprep.subr.mxu0 0.0
  %897 = vmatpush1.msra.mxu0 0.0
  %898 = vmatprep.subr.mxu0 0.0
  %899 = vmatpush1.msra.mxu0 0.0
  %900 = vmatprep.subr.mxu0 0.0
  %901 = vmatpush1.msra.mxu0 0.0
  %902 = vmatprep.subr.mxu0 0.0
  %903 = vmatpush1.msra.mxu0 0.0
  %904 = vmatprep.subr.mxu0 0.0
  %905 = vmatpush1.msra.mxu0 0.0
  %906 = vmatprep.subr.mxu0 0.0
  %907 = vmatpush1.msra.mxu0 0.0
  %908 = vmatprep.subr.mxu0 0.0
  %909 = vmatpush1.msra.mxu0 0.0
  %910 = vmatprep.subr.mxu0 0.0
  %911 = vmatpush1.msra.mxu0 0.0
  %912 = vmatprep.subr.mxu0 0.0
  %913 = vmatpush1.msra.mxu0 0.0
  %914 = vmatprep.subr.mxu0 0.0
  %915 = vmatpush1.msra.mxu0 0.0
  %916 = vmatprep.subr.mxu0 0.0
  %917 = vmatpush1.msra.mxu0 0.0
  %918 = vmatprep.subr.mxu0 0.0
  %919 = vmatpush1.msra.mxu0 0.0
  %920 = vmatprep.subr.mxu0 0.0
  %921 = vmatpush1.msra.mxu0 0.0
  %922 = vmatprep.subr.mxu0 0.0
  %923 = vmatpush1.msra.mxu0 0.0
  %924 = vmatprep.subr.mxu0 0.0
  %925 = vmatpush1.msra.mxu0 0.0
  %926 = vmatprep.subr.mxu0 0.0
  %927 = vmatpush1.msra.mxu0 0.0
  %928 = vmatprep.subr.mxu0 0.0
  %929 = vmatpush1.msra.mxu0 0.0
  %930 = vmatprep.subr.mxu0 0.0
  %931 = vmatpush1.msra.mxu0 0.0
  %932 = vmatprep.subr.mxu0 0.0
  %933 = vmatpush1.msra.mxu0 0.0
  %934 = vmatprep.subr.mxu0 0.0
  %935 = vmatpush1.msra.mxu0 0.0
  %936 = vmatprep.subr.mxu0 0.0
  %937 = vmatpush1.msra.mxu0 0.0
  %938 = vmatprep.subr.mxu0 0.0
  %939 = vmatpush1.msra.mxu0 0.0
  %940 = vmatprep.subr.mxu0 0.0
  %941 = vmatpush1.msra.mxu0 0.0
  %942 = vmatprep.subr.mxu0 0.0
  %943 = vmatpush1.msra.mxu0 0.0
  %944 = vmatprep.mubr.f32.mxu0 0.0
  %945 = vmatmul.mubr.f32.gmra.mrb[0].mxu0 %v796
  %v946 = vpop.f32.mrb[0].mxu0
  %v947 = vadd.f32 %v879, %v946
  %v948 = vpop.f32.mrb[0].mxu0
  %949 = vmatprep.mubr.f32.mxu0 0.0
  %950 = vmatmul.mubr.f32.gmra.mrb[0].mxu0 %v799
  %v951 = vpop.f32.mrb[0].mxu0
  %v952 = vadd.f32 %v879, %v951
  %v953 = vpop.f32.mrb[0].mxu0
  %954 = vdwg.mxu0
  %v955 = vld [vmem:[#allocation2 + $0x4] sm:$0xff]
  %v956 = vld [vmem:[#allocation2 + $0xc] sm:$0xff]
  %v958 = vsel %vm34, %v955, 0
  %v961 = vsel %vm34, %v956, 0
  %963 = vmatprep.subr.mxu0 0.0
  %964 = vmatpush1.msra.mxu0 %v768
  %965 = vmatprep.subr.mxu0 0.0
  %966 = vmatpush1.msra.mxu0 %v769
  %967 = vmatprep.subr.mxu0 0.0
  %968 = vmatpush1.msra.mxu0 %v770
  %969 = vmatprep.subr.mxu0 0.0
  %970 = vmatpush1.msra.mxu0 %v771
  %971 = vmatprep.subr.mxu0 0.0
  %972 = vmatpush1.msra.mxu0 0.0
  %973 = vmatprep.subr.mxu0 0.0
  %974 = vmatpush1.msra.mxu0 0.0
  %975 = vmatprep.subr.mxu0 0.0
  %976 = vmatpush1.msra.mxu0 0.0
  %977 = vmatprep.subr.mxu0 0.0
  %978 = vmatpush1.msra.mxu0 0.0
  %979 = vmatprep.subr.mxu0 0.0
  %980 = vmatpush1.msra.mxu0 0.0
  %981 = vmatprep.subr.mxu0 0.0
  %982 = vmatpush1.msra.mxu0 0.0
  %983 = vmatprep.subr.mxu0 0.0
  %984 = vmatpush1.msra.mxu0 0.0
  %985 = vmatprep.subr.mxu0 0.0
  %986 = vmatpush1.msra.mxu0 0.0
  %987 = vmatprep.subr.mxu0 0.0
  %988 = vmatpush1.msra.mxu0 0.0
  %989 = vmatprep.subr.mxu0 0.0
  %990 = vmatpush1.msra.mxu0 0.0
  %991 = vmatprep.subr.mxu0 0.0
  %992 = vmatpush1.msra.mxu0 0.0
  %993 = vmatprep.subr.mxu0 0.0
  %994 = vmatpush1.msra.mxu0 0.0
  %995 = vmatprep.subr.mxu0 0.0
  %996 = vmatpush1.msra.mxu0 0.0
  %997 = vmatprep.subr.mxu0 0.0
  %998 = vmatpush1.msra.mxu0 0.0
  %999 = vmatprep.subr.mxu0 0.0
  %1000 = vmatpush1.msra.mxu0 0.0
  %1001 = vmatprep.subr.mxu0 0.0
  %1002 = vmatpush1.msra.mxu0 0.0
  %1003 = vmatprep.subr.mxu0 0.0
  %1004 = vmatpush1.msra.mxu0 0.0
  %1005 = vmatprep.subr.mxu0 0.0
  %1006 = vmatpush1.msra.mxu0 0.0
  %1007 = vmatprep.subr.mxu0 0.0
  %1008 = vmatpush1.msra.mxu0 0.0
  %1009 = vmatprep.subr.mxu0 0.0
  %1010 = vmatpush1.msra.mxu0 0.0
  %1011 = vmatprep.subr.mxu0 0.0
  %1012 = vmatpush1.msra.mxu0 0.0
  %1013 = vmatprep.subr.mxu0 0.0
  %1014 = vmatpush1.msra.mxu0 0.0
  %1015 = vmatprep.subr.mxu0 0.0
  %1016 = vmatpush1.msra.mxu0 0.0
  %1017 = vmatprep.subr.mxu0 0.0
  %1018 = vmatpush1.msra.mxu0 0.0
  %1019 = vmatprep.subr.mxu0 0.0
  %1020 = vmatpush1.msra.mxu0 0.0
  %1021 = vmatprep.subr.mxu0 0.0
  %1022 = vmatpush1.msra.mxu0 0.0
  %1023 = vmatprep.subr.mxu0 0.0
  %1024 = vmatpush1.msra.mxu0 0.0
  %1025 = vmatprep.subr.mxu0 0.0
  %1026 = vmatpush1.msra.mxu0 0.0
  %1027 = vmatprep.mubr.f32.mxu0 0.0
  %1028 = vmatmul.mubr.f32.gmra.mrb[0].mxu0 %v958
  %v1029 = vpop.f32.mrb[0].mxu0
  %v1030 = vadd.f32 0.0, %v1029
  %v1031 = vpop.f32.mrb[0].mxu0
  %1032 = vmatprep.mubr.f32.mxu0 0.0
  %1033 = vmatmul.mubr.f32.gmra.mrb[0].mxu0 %v961
  %v1034 = vpop.f32.mrb[0].mxu0
  %v1035 = vadd.f32 0.0, %v1034
  %v1036 = vpop.f32.mrb[0].mxu0
  %1037 = vdwg.mxu0
  %v1038 = vadd.f32 %v868, %v1030
  %v1039 = vadd.f32 %v873, %v1035
  %1040 = vmatprep.subr.mxu0 0.0
  %1041 = vmatpush1.msra.mxu0 %v778
  %1042 = vmatprep.subr.mxu0 0.0
  %1043 = vmatpush1.msra.mxu0 %v779
  %1044 = vmatprep.subr.mxu0 0.0
  %1045 = vmatpush1.msra.mxu0 %v780
  %1046 = vmatprep.subr.mxu0 0.0
  %1047 = vmatpush1.msra.mxu0 %v781
  %1048 = vmatprep.subr.mxu0 0.0
  %1049 = vmatpush1.msra.mxu0 0.0
  %1050 = vmatprep.subr.mxu0 0.0
  %1051 = vmatpush1.msra.mxu0 0.0
  %1052 = vmatprep.subr.mxu0 0.0
  %1053 = vmatpush1.msra.mxu0 0.0
  %1054 = vmatprep.subr.mxu0 0.0
  %1055 = vmatpush1.msra.mxu0 0.0
  %1056 = vmatprep.subr.mxu0 0.0
  %1057 = vmatpush1.msra.mxu0 0.0
  %1058 = vmatprep.subr.mxu0 0.0
  %1059 = vmatpush1.msra.mxu0 0.0
  %1060 = vmatprep.subr.mxu0 0.0
  %1061 = vmatpush1.msra.mxu0 0.0
  %1062 = vmatprep.subr.mxu0 0.0
  %1063 = vmatpush1.msra.mxu0 0.0
  %1064 = vmatprep.subr.mxu0 0.0
  %1065 = vmatpush1.msra.mxu0 0.0
  %1066 = vmatprep.subr.mxu0 0.0
  %1067 = vmatpush1.msra.mxu0 0.0
  %1068 = vmatprep.subr.mxu0 0.0
  %1069 = vmatpush1.msra.mxu0 0.0
  %1070 = vmatprep.subr.mxu0 0.0
  %1071 = vmatpush1.msra.mxu0 0.0
  %1072 = vmatprep.subr.mxu0 0.0
  %1073 = vmatpush1.msra.mxu0 0.0
  %1074 = vmatprep.subr.mxu0 0.0
  %1075 = vmatpush1.msra.mxu0 0.0
  %1076 = vmatprep.subr.mxu0 0.0
  %1077 = vmatpush1.msra.mxu0 0.0
  %1078 = vmatprep.subr.mxu0 0.0
  %1079 = vmatpush1.msra.mxu0 0.0
  %1080 = vmatprep.subr.mxu0 0.0
  %1081 = vmatpush1.msra.mxu0 0.0
  %1082 = vmatprep.subr.mxu0 0.0
  %1083 = vmatpush1.msra.mxu0 0.0
  %1084 = vmatprep.subr.mxu0 0.0
  %1085 = vmatpush1.msra.mxu0 0.0
  %1086 = vmatprep.subr.mxu0 0.0
  %1087 = vmatpush1.msra.mxu0 0.0
  %1088 = vmatprep.subr.mxu0 0.0
  %1089 = vmatpush1.msra.mxu0 0.0
  %1090 = vmatprep.subr.mxu0 0.0
  %1091 = vmatpush1.msra.mxu0 0.0
  %1092 = vmatprep.subr.mxu0 0.0
  %1093 = vmatpush1.msra.mxu0 0.0
  %1094 = vmatprep.subr.mxu0 0.0
  %1095 = vmatpush1.msra.mxu0 0.0
  %1096 = vmatprep.subr.mxu0 0.0
  %1097 = vmatpush1.msra.mxu0 0.0
  %1098 = vmatprep.subr.mxu0 0.0
  %1099 = vmatpush1.msra.mxu0 0.0
  %1100 = vmatprep.subr.mxu0 0.0
  %1101 = vmatpush1.msra.mxu0 0.0
  %1102 = vmatprep.subr.mxu0 0.0
  %1103 = vmatpush1.msra.mxu0 0.0
  %1104 = vmatprep.mubr.f32.mxu0 0.0
  %1105 = vmatmul.mubr.f32.gmra.mrb[0].mxu0 %v958
  %v1106 = vpop.f32.mrb[0].mxu0
  %v1107 = vadd.f32 0.0, %v1106
  %v1108 = vpop.f32.mrb[0].mxu0
  %1109 = vmatprep.mubr.f32.mxu0 0.0
  %1110 = vmatmul.mubr.f32.gmra.mrb[0].mxu0 %v961
  %v1111 = vpop.f32.mrb[0].mxu0
  %v1112 = vadd.f32 0.0, %v1111
  %v1113 = vpop.f32.mrb[0].mxu0
  %1114 = vdwg.mxu0
  %v1115 = vadd.f32 %v947, %v1107
  %v1116 = vadd.f32 %v952, %v1112
  %v1117 = vsub.f32 0.0, %v1115
  %v1118 = vsub.f32 0.0, %v1116
  %v1119 = vmul.f32 %v1117, 1.442695
  %v1120 = vpow.pop %v1119
  %v1121 = vmul.f32 %v1118, 1.442695
  %v1122 = vpow.pop %v1121
  %v1123 = vadd.f32 %v1120, 1.0
  %v1124 = vadd.f32 %v1122, 1.0
  %v1125 = vrcp.pop %v1123
  %v1126 = vmul.f32 1.0, %v1125
  %v1127 = vrcp.pop %v1124
  %v1128 = vmul.f32 1.0, %v1127
  %v1129 = vtanh.pop %v1038
  %v1130 = vtanh.pop %v1039
  %v1131 = vmul.f32 %v1129, %v1126
  %v1132 = vmul.f32 %v1130, %v1128
  %v1133 = vadd.f32 %v761, %v1131
  %v1134 = vadd.f32 %v762, %v1132
  %v1135 = vadd.f32 %v1131, %v789
  %v1136 = vadd.f32 %v1132, %v790
  %1137 = vst.msk [vmem:[#allocation2 + $0x8] sm:$0xff] %vm34, %v1135
  %1138 = vst.msk [vmem:[#allocation2 + $0x10] sm:$0xff] %vm34, %v1136
  %s1139 = scalar_lea.vmem %s3, 128
  %v1140 = vld [vmem:[%s1139] sm:$0xff]
  %v1141 = vld [vmem:[%s1139 + $0x8] sm:$0xff]
  %v1142 = vld [vmem:[%s1139 + $0x10] sm:$0xff]
  %v1143 = vld [vmem:[%s1139 + $0x18] sm:$0xff]
  %s1144 = scalar_lea.vmem %s3, 160
  %v1145 = vld [vmem:[%s1144] sm:$0xff]
  %v1146 = vld [vmem:[%s1144 + $0x8] sm:$0xff]
  %v1147 = vld [vmem:[%s1144 + $0x10] sm:$0xff]
  %v1148 = vld [vmem:[%s1144 + $0x18] sm:$0xff]
  %s1149 = scalar_lea.vmem %s4, 128
  %v1150 = vld [vmem:[%s1149] sm:$0xff]
  %v1151 = vld [vmem:[%s1149 + $0x8] sm:$0xff]
  %v1152 = vld [vmem:[%s1149 + $0x10] sm:$0xff]
  %v1153 = vld [vmem:[%s1149 + $0x18] sm:$0xff]
  %s1154 = scalar_lea.vmem %s4, 160
  %v1155 = vld [vmem:[%s1154] sm:$0xff]
  %v1156 = vld [vmem:[%s1154 + $0x8] sm:$0xff]
  %v1157 = vld [vmem:[%s1154 + $0x10] sm:$0xff]
  %v1158 = vld [vmem:[%s1154 + $0x18] sm:$0xff]
  %v1159 = vld [vmem:[%s5 + $0x3] sm:$0x1]
  %v1160 = vld [vmem:[%s6 + $0x3] sm:$0x1]
  %v1161 = vld [vmem:[#allocation2 + $0x8] sm:$0xff]
  %v1162 = vld [vmem:[#allocation2 + $0x10] sm:$0xff]
  %v1163 = vlaneseq
  %v1164 = vshrl.u32 %v1163, 7
  %v1165 = vsub.s32 0, %v1164
  %v1166 = vrot.slane %v1159, %v1165
  %v1168 = vsel %vm34, %v1161, 0
  %v1171 = vsel %vm34, %v1162, 0
  %1173 = vmatprep.subr.mxu0 0.0
  %1174 = vmatpush1.msra.mxu0 %v1145
  %1175 = vmatprep.subr.mxu0 0.0
  %1176 = vmatpush1.msra.mxu0 %v1146
  %1177 = vmatprep.subr.mxu0 0.0
  %1178 = vmatpush1.msra.mxu0 %v1147
  %1179 = vmatprep.subr.mxu0 0.0
  %1180 = vmatpush1.msra.mxu0 %v1148
  %1181 = vmatprep.subr.mxu0 0.0
  %1182 = vmatpush1.msra.mxu0 0.0
  %1183 = vmatprep.subr.mxu0 0.0
  %1184 = vmatpush1.msra.mxu0 0.0
  %1185 = vmatprep.subr.mxu0 0.0
  %1186 = vmatpush1.msra.mxu0 0.0
  %1187 = vmatprep.subr.mxu0 0.0
  %1188 = vmatpush1.msra.mxu0 0.0
  %1189 = vmatprep.subr.mxu0 0.0
  %1190 = vmatpush1.msra.mxu0 0.0
  %1191 = vmatprep.subr.mxu0 0.0
  %1192 = vmatpush1.msra.mxu0 0.0
  %1193 = vmatprep.subr.mxu0 0.0
  %1194 = vmatpush1.msra.mxu0 0.0
  %1195 = vmatprep.subr.mxu0 0.0
  %1196 = vmatpush1.msra.mxu0 0.0
  %1197 = vmatprep.subr.mxu0 0.0
  %1198 = vmatpush1.msra.mxu0 0.0
  %1199 = vmatprep.subr.mxu0 0.0
  %1200 = vmatpush1.msra.mxu0 0.0
  %1201 = vmatprep.subr.mxu0 0.0
  %1202 = vmatpush1.msra.mxu0 0.0
  %1203 = vmatprep.subr.mxu0 0.0
  %1204 = vmatpush1.msra.mxu0 0.0
  %1205 = vmatprep.subr.mxu0 0.0
  %1206 = vmatpush1.msra.mxu0 0.0
  %1207 = vmatprep.subr.mxu0 0.0
  %1208 = vmatpush1.msra.mxu0 0.0
  %1209 = vmatprep.subr.mxu0 0.0
  %1210 = vmatpush1.msra.mxu0 0.0
  %1211 = vmatprep.subr.mxu0 0.0
  %1212 = vmatpush1.msra.mxu0 0.0
  %1213 = vmatprep.subr.mxu0 0.0
  %1214 = vmatpush1.msra.mxu0 0.0
  %1215 = vmatprep.subr.mxu0 0.0
  %1216 = vmatpush1.msra.mxu0 0.0
  %1217 = vmatprep.subr.mxu0 0.0
  %1218 = vmatpush1.msra.mxu0 0.0
  %1219 = vmatprep.subr.mxu0 0.0
  %1220 = vmatpush1.msra.mxu0 0.0
  %1221 = vmatprep.subr.mxu0 0.0
  %1222 = vmatpush1.msra.mxu0 0.0
  %1223 = vmatprep.subr.mxu0 0.0
  %1224 = vmatpush1.msra.mxu0 0.0
  %1225 = vmatprep.subr.mxu0 0.0
  %1226 = vmatpush1.msra.mxu0 0.0
  %1227 = vmatprep.subr.mxu0 0.0
  %1228 = vmatpush1.msra.mxu0 0.0
  %1229 = vmatprep.subr.mxu0 0.0
  %1230 = vmatpush1.msra.mxu0 0.0
  %1231 = vmatprep.subr.mxu0 0.0
  %1232 = vmatpush1.msra.mxu0 0.0
  %1233 = vmatprep.subr.mxu0 0.0
  %1234 = vmatpush1.msra.mxu0 0.0
  %1235 = vmatprep.subr.mxu0 0.0
  %1236 = vmatpush1.msra.mxu0 0.0
  %1237 = vmatprep.mubr.f32.mxu0 0.0
  %1238 = vmatmul.mubr.f32.gmra.mrb[0].mxu0 %v1168
  %v1239 = vpop.f32.mrb[0].mxu0
  %v1240 = vadd.f32 %v1166, %v1239
  %v1241 = vpop.f32.mrb[0].mxu0
  %1242 = vmatprep.mubr.f32.mxu0 0.0
  %1243 = vmatmul.mubr.f32.gmra.mrb[0].mxu0 %v1171
  %v1244 = vpop.f32.mrb[0].mxu0
  %v1245 = vadd.f32 %v1166, %v1244
  %v1246 = vpop.f32.mrb[0].mxu0
  %1247 = vdwg.mxu0
  %v1248 = vlaneseq
  %v1249 = vshrl.u32 %v1248, 7
  %v1250 = vsub.s32 0, %v1249
  %v1251 = vrot.slane %v1160, %v1250
  %1252 = vmatprep.subr.mxu0 0.0
  %1253 = vmatpush1.msra.mxu0 %v1155
  %1254 = vmatprep.subr.mxu0 0.0
  %1255 = vmatpush1.msra.mxu0 %v1156
  %1256 = vmatprep.subr.mxu0 0.0
  %1257 = vmatpush1.msra.mxu0 %v1157
  %1258 = vmatprep.subr.mxu0 0.0
  %1259 = vmatpush1.msra.mxu0 %v1158
  %1260 = vmatprep.subr.mxu0 0.0
  %1261 = vmatpush1.msra.mxu0 0.0
  %1262 = vmatprep.subr.mxu0 0.0
  %1263 = vmatpush1.msra.mxu0 0.0
  %1264 = vmatprep.subr.mxu0 0.0
  %1265 = vmatpush1.msra.mxu0 0.0
  %1266 = vmatprep.subr.mxu0 0.0
  %1267 = vmatpush1.msra.mxu0 0.0
  %1268 = vmatprep.subr.mxu0 0.0
  %1269 = vmatpush1.msra.mxu0 0.0
  %1270 = vmatprep.subr.mxu0 0.0
  %1271 = vmatpush1.msra.mxu0 0.0
  %1272 = vmatprep.subr.mxu0 0.0
  %1273 = vmatpush1.msra.mxu0 0.0
  %1274 = vmatprep.subr.mxu0 0.0
  %1275 = vmatpush1.msra.mxu0 0.0
  %1276 = vmatprep.subr.mxu0 0.0
  %1277 = vmatpush1.msra.mxu0 0.0
  %1278 = vmatprep.subr.mxu0 0.0
  %1279 = vmatpush1.msra.mxu0 0.0
  %1280 = vmatprep.subr.mxu0 0.0
  %1281 = vmatpush1.msra.mxu0 0.0
  %1282 = vmatprep.subr.mxu0 0.0
  %1283 = vmatpush1.msra.mxu0 0.0
  %1284 = vmatprep.subr.mxu0 0.0
  %1285 = vmatpush1.msra.mxu0 0.0
  %1286 = vmatprep.subr.mxu0 0.0
  %1287 = vmatpush1.msra.mxu0 0.0
  %1288 = vmatprep.subr.mxu0 0.0
  %1289 = vmatpush1.msra.mxu0 0.0
  %1290 = vmatprep.subr.mxu0 0.0
  %1291 = vmatpush1.msra.mxu0 0.0
  %1292 = vmatprep.subr.mxu0 0.0
  %1293 = vmatpush1.msra.mxu0 0.0
  %1294 = vmatprep.subr.mxu0 0.0
  %1295 = vmatpush1.msra.mxu0 0.0
  %1296 = vmatprep.subr.mxu0 0.0
  %1297 = vmatpush1.msra.mxu0 0.0
  %1298 = vmatprep.subr.mxu0 0.0
  %1299 = vmatpush1.msra.mxu0 0.0
  %1300 = vmatprep.subr.mxu0 0.0
  %1301 = vmatpush1.msra.mxu0 0.0
  %1302 = vmatprep.subr.mxu0 0.0
  %1303 = vmatpush1.msra.mxu0 0.0
  %1304 = vmatprep.subr.mxu0 0.0
  %1305 = vmatpush1.msra.mxu0 0.0
  %1306 = vmatprep.subr.mxu0 0.0
  %1307 = vmatpush1.msra.mxu0 0.0
  %1308 = vmatprep.subr.mxu0 0.0
  %1309 = vmatpush1.msra.mxu0 0.0
  %1310 = vmatprep.subr.mxu0 0.0
  %1311 = vmatpush1.msra.mxu0 0.0
  %1312 = vmatprep.subr.mxu0 0.0
  %1313 = vmatpush1.msra.mxu0 0.0
  %1314 = vmatprep.subr.mxu0 0.0
  %1315 = vmatpush1.msra.mxu0 0.0
  %1316 = vmatprep.mubr.f32.mxu0 0.0
  %1317 = vmatmul.mubr.f32.gmra.mrb[0].mxu0 %v1168
  %v1318 = vpop.f32.mrb[0].mxu0
  %v1319 = vadd.f32 %v1251, %v1318
  %v1320 = vpop.f32.mrb[0].mxu0
  %1321 = vmatprep.mubr.f32.mxu0 0.0
  %1322 = vmatmul.mubr.f32.gmra.mrb[0].mxu0 %v1171
  %v1323 = vpop.f32.mrb[0].mxu0
  %v1324 = vadd.f32 %v1251, %v1323
  %v1325 = vpop.f32.mrb[0].mxu0
  %1326 = vdwg.mxu0
  %v1327 = vld [vmem:[#allocation2] sm:$0xff]
  %v1328 = vld [vmem:[#allocation2 + $0x8] sm:$0xff]
  %v1330 = vsel %vm34, %v1327, 0
  %v1333 = vsel %vm34, %v1328, 0
  %1335 = vmatprep.subr.mxu0 0.0
  %1336 = vmatpush1.msra.mxu0 %v1140
  %1337 = vmatprep.subr.mxu0 0.0
  %1338 = vmatpush1.msra.mxu0 %v1141
  %1339 = vmatprep.subr.mxu0 0.0
  %1340 = vmatpush1.msra.mxu0 %v1142
  %1341 = vmatprep.subr.mxu0 0.0
  %1342 = vmatpush1.msra.mxu0 %v1143
  %1343 = vmatprep.subr.mxu0 0.0
  %1344 = vmatpush1.msra.mxu0 0.0
  %1345 = vmatprep.subr.mxu0 0.0
  %1346 = vmatpush1.msra.mxu0 0.0
  %1347 = vmatprep.subr.mxu0 0.0
  %1348 = vmatpush1.msra.mxu0 0.0
  %1349 = vmatprep.subr.mxu0 0.0
  %1350 = vmatpush1.msra.mxu0 0.0
  %1351 = vmatprep.subr.mxu0 0.0
  %1352 = vmatpush1.msra.mxu0 0.0
  %1353 = vmatprep.subr.mxu0 0.0
  %1354 = vmatpush1.msra.mxu0 0.0
  %1355 = vmatprep.subr.mxu0 0.0
  %1356 = vmatpush1.msra.mxu0 0.0
  %1357 = vmatprep.subr.mxu0 0.0
  %1358 = vmatpush1.msra.mxu0 0.0
  %1359 = vmatprep.subr.mxu0 0.0
  %1360 = vmatpush1.msra.mxu0 0.0
  %1361 = vmatprep.subr.mxu0 0.0
  %1362 = vmatpush1.msra.mxu0 0.0
  %1363 = vmatprep.subr.mxu0 0.0
  %1364 = vmatpush1.msra.mxu0 0.0
  %1365 = vmatprep.subr.mxu0 0.0
  %1366 = vmatpush1.msra.mxu0 0.0
  %1367 = vmatprep.subr.mxu0 0.0
  %1368 = vmatpush1.msra.mxu0 0.0
  %1369 = vmatprep.subr.mxu0 0.0
  %1370 = vmatpush1.msra.mxu0 0.0
  %1371 = vmatprep.subr.mxu0 0.0
  %1372 = vmatpush1.msra.mxu0 0.0
  %1373 = vmatprep.subr.mxu0 0.0
  %1374 = vmatpush1.msra.mxu0 0.0
  %1375 = vmatprep.subr.mxu0 0.0
  %1376 = vmatpush1.msra.mxu0 0.0
  %1377 = vmatprep.subr.mxu0 0.0
  %1378 = vmatpush1.msra.mxu0 0.0
  %1379 = vmatprep.subr.mxu0 0.0
  %1380 = vmatpush1.msra.mxu0 0.0
  %1381 = vmatprep.subr.mxu0 0.0
  %1382 = vmatpush1.msra.mxu0 0.0
  %1383 = vmatprep.subr.mxu0 0.0
  %1384 = vmatpush1.msra.mxu0 0.0
  %1385 = vmatprep.subr.mxu0 0.0
  %1386 = vmatpush1.msra.mxu0 0.0
  %1387 = vmatprep.subr.mxu0 0.0
  %1388 = vmatpush1.msra.mxu0 0.0
  %1389 = vmatprep.subr.mxu0 0.0
  %1390 = vmatpush1.msra.mxu0 0.0
  %1391 = vmatprep.subr.mxu0 0.0
  %1392 = vmatpush1.msra.mxu0 0.0
  %1393 = vmatprep.subr.mxu0 0.0
  %1394 = vmatpush1.msra.mxu0 0.0
  %1395 = vmatprep.subr.mxu0 0.0
  %1396 = vmatpush1.msra.mxu0 0.0
  %1397 = vmatprep.subr.mxu0 0.0
  %1398 = vmatpush1.msra.mxu0 0.0
  %1399 = vmatprep.mubr.f32.mxu0 0.0
  %1400 = vmatmul.mubr.f32.gmra.mrb[0].mxu0 %v1330
  %v1401 = vpop.f32.mrb[0].mxu0
  %v1402 = vadd.f32 0.0, %v1401
  %v1403 = vpop.f32.mrb[0].mxu0
  %1404 = vmatprep.mubr.f32.mxu0 0.0
  %1405 = vmatmul.mubr.f32.gmra.mrb[0].mxu0 %v1333
  %v1406 = vpop.f32.mrb[0].mxu0
  %v1407 = vadd.f32 0.0, %v1406
  %v1408 = vpop.f32.mrb[0].mxu0
  %1409 = vdwg.mxu0
  %v1410 = vadd.f32 %v1240, %v1402
  %v1411 = vadd.f32 %v1245, %v1407
  %1412 = vmatprep.subr.mxu0 0.0
  %1413 = vmatpush1.msra.mxu0 %v1150
  %1414 = vmatprep.subr.mxu0 0.0
  %1415 = vmatpush1.msra.mxu0 %v1151
  %1416 = vmatprep.subr.mxu0 0.0
  %1417 = vmatpush1.msra.mxu0 %v1152
  %1418 = vmatprep.subr.mxu0 0.0
  %1419 = vmatpush1.msra.mxu0 %v1153
  %1420 = vmatprep.subr.mxu0 0.0
  %1421 = vmatpush1.msra.mxu0 0.0
  %1422 = vmatprep.subr.mxu0 0.0
  %1423 = vmatpush1.msra.mxu0 0.0
  %1424 = vmatprep.subr.mxu0 0.0
  %1425 = vmatpush1.msra.mxu0 0.0
  %1426 = vmatprep.subr.mxu0 0.0
  %1427 = vmatpush1.msra.mxu0 0.0
  %1428 = vmatprep.subr.mxu0 0.0
  %1429 = vmatpush1.msra.mxu0 0.0
  %1430 = vmatprep.subr.mxu0 0.0
  %1431 = vmatpush1.msra.mxu0 0.0
  %1432 = vmatprep.subr.mxu0 0.0
  %1433 = vmatpush1.msra.mxu0 0.0
  %1434 = vmatprep.subr.mxu0 0.0
  %1435 = vmatpush1.msra.mxu0 0.0
  %1436 = vmatprep.subr.mxu0 0.0
  %1437 = vmatpush1.msra.mxu0 0.0
  %1438 = vmatprep.subr.mxu0 0.0
  %1439 = vmatpush1.msra.mxu0 0.0
  %1440 = vmatprep.subr.mxu0 0.0
  %1441 = vmatpush1.msra.mxu0 0.0
  %1442 = vmatprep.subr.mxu0 0.0
  %1443 = vmatpush1.msra.mxu0 0.0
  %1444 = vmatprep.subr.mxu0 0.0
  %1445 = vmatpush1.msra.mxu0 0.0
  %1446 = vmatprep.subr.mxu0 0.0
  %1447 = vmatpush1.msra.mxu0 0.0
  %1448 = vmatprep.subr.mxu0 0.0
  %1449 = vmatpush1.msra.mxu0 0.0
  %1450 = vmatprep.subr.mxu0 0.0
  %1451 = vmatpush1.msra.mxu0 0.0
  %1452 = vmatprep.subr.mxu0 0.0
  %1453 = vmatpush1.msra.mxu0 0.0
  %1454 = vmatprep.subr.mxu0 0.0
  %1455 = vmatpush1.msra.mxu0 0.0
  %1456 = vmatprep.subr.mxu0 0.0
  %1457 = vmatpush1.msra.mxu0 0.0
  %1458 = vmatprep.subr.mxu0 0.0
  %1459 = vmatpush1.msra.mxu0 0.0
  %1460 = vmatprep.subr.mxu0 0.0
  %1461 = vmatpush1.msra.mxu0 0.0
  %1462 = vmatprep.subr.mxu0 0.0
  %1463 = vmatpush1.msra.mxu0 0.0
  %1464 = vmatprep.subr.mxu0 0.0
  %1465 = vmatpush1.msra.mxu0 0.0
  %1466 = vmatprep.subr.mxu0 0.0
  %1467 = vmatpush1.msra.mxu0 0.0
  %1468 = vmatprep.subr.mxu0 0.0
  %1469 = vmatpush1.msra.mxu0 0.0
  %1470 = vmatprep.subr.mxu0 0.0
  %1471 = vmatpush1.msra.mxu0 0.0
  %1472 = vmatprep.subr.mxu0 0.0
  %1473 = vmatpush1.msra.mxu0 0.0
  %1474 = vmatprep.subr.mxu0 0.0
  %1475 = vmatpush1.msra.mxu0 0.0
  %1476 = vmatprep.mubr.f32.mxu0 0.0
  %1477 = vmatmul.mubr.f32.gmra.mrb[0].mxu0 %v1330
  %v1478 = vpop.f32.mrb[0].mxu0
  %v1479 = vadd.f32 0.0, %v1478
  %v1480 = vpop.f32.mrb[0].mxu0
  %1481 = vmatprep.mubr.f32.mxu0 0.0
  %1482 = vmatmul.mubr.f32.gmra.mrb[0].mxu0 %v1333
  %v1483 = vpop.f32.mrb[0].mxu0
  %v1484 = vadd.f32 0.0, %v1483
  %v1485 = vpop.f32.mrb[0].mxu0
  %1486 = vdwg.mxu0
  %v1487 = vadd.f32 %v1319, %v1479
  %v1488 = vadd.f32 %v1324, %v1484
  %v1489 = vsub.f32 0.0, %v1487
  %v1490 = vsub.f32 0.0, %v1488
  %v1491 = vmul.f32 %v1489, 1.442695
  %v1492 = vpow.pop %v1491
  %v1493 = vmul.f32 %v1490, 1.442695
  %v1494 = vpow.pop %v1493
  %v1495 = vadd.f32 %v1492, 1.0
  %v1496 = vadd.f32 %v1494, 1.0
  %v1497 = vrcp.pop %v1495
  %v1498 = vmul.f32 1.0, %v1497
  %v1499 = vrcp.pop %v1496
  %v1500 = vmul.f32 1.0, %v1499
  %v1501 = vtanh.pop %v1410
  %v1502 = vtanh.pop %v1411
  %v1503 = vmul.f32 %v1501, %v1498
  %v1504 = vmul.f32 %v1502, %v1500
  %v1505 = vadd.f32 %v1133, %v1503
  %v1506 = vadd.f32 %v1134, %v1504
  %v1507 = vadd.f32 %v1503, %v1161
  %v1508 = vadd.f32 %v1504, %v1162
  %1509 = vst.msk [vmem:[#allocation2 + $0x8] sm:$0xff] %vm34, %v1507
  %1510 = vst.msk [vmem:[#allocation2 + $0x10] sm:$0xff] %vm34, %v1508
  %s1511 = scalar_lea.vmem %s3, 224
  %v1512 = vld [vmem:[%s1511] sm:$0xff]
  %v1513 = vld [vmem:[%s1511 + $0x8] sm:$0xff]
  %v1514 = vld [vmem:[%s1511 + $0x10] sm:$0xff]
  %v1515 = vld [vmem:[%s1511 + $0x18] sm:$0xff]
  %s1516 = scalar_lea.vmem %s4, 224
  %v1517 = vld [vmem:[%s1516] sm:$0xff]
  %v1518 = vld [vmem:[%s1516 + $0x8] sm:$0xff]
  %v1519 = vld [vmem:[%s1516 + $0x10] sm:$0xff]
  %v1520 = vld [vmem:[%s1516 + $0x18] sm:$0xff]
  %v1521 = vld [vmem:[%s5 + $0x4] sm:$0x1]
  %v1522 = vld [vmem:[%s6 + $0x4] sm:$0x1]
  %v1523 = vld [vmem:[#allocation2 + $0x8] sm:$0xff]
  %v1524 = vld [vmem:[#allocation2 + $0x10] sm:$0xff]
  %v1525 = vlaneseq
  %v1526 = vshrl.u32 %v1525, 7
  %v1527 = vsub.s32 0, %v1526
  %v1528 = vrot.slane %v1521, %v1527
  %v1530 = vsel %vm34, %v1523, 0
  %v1533 = vsel %vm34, %v1524, 0
  %1535 = vmatprep.subr.mxu0 0.0
  %1536 = vmatpush1.msra.mxu0 %v1512
  %1537 = vmatprep.subr.mxu0 0.0
  %1538 = vmatpush1.msra.mxu0 %v1513
  %1539 = vmatprep.subr.mxu0 0.0
  %1540 = vmatpush1.msra.mxu0 %v1514
  %1541 = vmatprep.subr.mxu0 0.0
  %1542 = vmatpush1.msra.mxu0 %v1515
  %1543 = vmatprep.subr.mxu0 0.0
  %1544 = vmatpush1.msra.mxu0 0.0
  %1545 = vmatprep.subr.mxu0 0.0
  %1546 = vmatpush1.msra.mxu0 0.0
  %1547 = vmatprep.subr.mxu0 0.0
  %1548 = vmatpush1.msra.mxu0 0.0
  %1549 = vmatprep.subr.mxu0 0.0
  %1550 = vmatpush1.msra.mxu0 0.0
  %1551 = vmatprep.subr.mxu0 0.0
  %1552 = vmatpush1.msra.mxu0 0.0
  %1553 = vmatprep.subr.mxu0 0.0
  %1554 = vmatpush1.msra.mxu0 0.0
  %1555 = vmatprep.subr.mxu0 0.0
  %1556 = vmatpush1.msra.mxu0 0.0
  %1557 = vmatprep.subr.mxu0 0.0
  %1558 = vmatpush1.msra.mxu0 0.0
  %1559 = vmatprep.subr.mxu0 0.0
  %1560 = vmatpush1.msra.mxu0 0.0
  %1561 = vmatprep.subr.mxu0 0.0
  %1562 = vmatpush1.msra.mxu0 0.0
  %1563 = vmatprep.subr.mxu0 0.0
  %1564 = vmatpush1.msra.mxu0 0.0
  %1565 = vmatprep.subr.mxu0 0.0
  %1566 = vmatpush1.msra.mxu0 0.0
  %1567 = vmatprep.subr.mxu0 0.0
  %1568 = vmatpush1.msra.mxu0 0.0
  %1569 = vmatprep.subr.mxu0 0.0
  %1570 = vmatpush1.msra.mxu0 0.0
  %1571 = vmatprep.subr.mxu0 0.0
  %1572 = vmatpush1.msra.mxu0 0.0
  %1573 = vmatprep.subr.mxu0 0.0
  %1574 = vmatpush1.msra.mxu0 0.0
  %1575 = vmatprep.subr.mxu0 0.0
  %1576 = vmatpush1.msra.mxu0 0.0
  %1577 = vmatprep.subr.mxu0 0.0
  %1578 = vmatpush1.msra.mxu0 0.0
  %1579 = vmatprep.subr.mxu0 0.0
  %1580 = vmatpush1.msra.mxu0 0.0
  %1581 = vmatprep.subr.mxu0 0.0
  %1582 = vmatpush1.msra.mxu0 0.0
  %1583 = vmatprep.subr.mxu0 0.0
  %1584 = vmatpush1.msra.mxu0 0.0
  %1585 = vmatprep.subr.mxu0 0.0
  %1586 = vmatpush1.msra.mxu0 0.0
  %1587 = vmatprep.subr.mxu0 0.0
  %1588 = vmatpush1.msra.mxu0 0.0
  %1589 = vmatprep.subr.mxu0 0.0
  %1590 = vmatpush1.msra.mxu0 0.0
  %1591 = vmatprep.subr.mxu0 0.0
  %1592 = vmatpush1.msra.mxu0 0.0
  %1593 = vmatprep.subr.mxu0 0.0
  %1594 = vmatpush1.msra.mxu0 0.0
  %1595 = vmatprep.subr.mxu0 0.0
  %1596 = vmatpush1.msra.mxu0 0.0
  %1597 = vmatprep.subr.mxu0 0.0
  %1598 = vmatpush1.msra.mxu0 0.0
  %1599 = vmatprep.mubr.f32.mxu0 0.0
  %1600 = vmatmul.mubr.f32.gmra.mrb[0].mxu0 %v1530
  %v1601 = vpop.f32.mrb[0].mxu0
  %v1602 = vadd.f32 %v1528, %v1601
  %v1603 = vpop.f32.mrb[0].mxu0
  %1604 = vmatprep.mubr.f32.mxu0 0.0
  %1605 = vmatmul.mubr.f32.gmra.mrb[0].mxu0 %v1533
  %v1606 = vpop.f32.mrb[0].mxu0
  %v1607 = vadd.f32 %v1528, %v1606
  %v1608 = vpop.f32.mrb[0].mxu0
  %1609 = vdwg.mxu0
  %v1610 = vlaneseq
  %v1611 = vshrl.u32 %v1610, 7
  %v1612 = vsub.s32 0, %v1611
  %v1613 = vrot.slane %v1522, %v1612
  %1614 = vmatprep.subr.mxu0 0.0
  %1615 = vmatpush1.msra.mxu0 %v1517
  %1616 = vmatprep.subr.mxu0 0.0
  %1617 = vmatpush1.msra.mxu0 %v1518
  %1618 = vmatprep.subr.mxu0 0.0
  %1619 = vmatpush1.msra.mxu0 %v1519
  %1620 = vmatprep.subr.mxu0 0.0
  %1621 = vmatpush1.msra.mxu0 %v1520
  %1622 = vmatprep.subr.mxu0 0.0
  %1623 = vmatpush1.msra.mxu0 0.0
  %1624 = vmatprep.subr.mxu0 0.0
  %1625 = vmatpush1.msra.mxu0 0.0
  %1626 = vmatprep.subr.mxu0 0.0
  %1627 = vmatpush1.msra.mxu0 0.0
  %1628 = vmatprep.subr.mxu0 0.0
  %1629 = vmatpush1.msra.mxu0 0.0
  %1630 = vmatprep.subr.mxu0 0.0
  %1631 = vmatpush1.msra.mxu0 0.0
  %1632 = vmatprep.subr.mxu0 0.0
  %1633 = vmatpush1.msra.mxu0 0.0
  %1634 = vmatprep.subr.mxu0 0.0
  %1635 = vmatpush1.msra.mxu0 0.0
  %1636 = vmatprep.subr.mxu0 0.0
  %1637 = vmatpush1.msra.mxu0 0.0
  %1638 = vmatprep.subr.mxu0 0.0
  %1639 = vmatpush1.msra.mxu0 0.0
  %1640 = vmatprep.subr.mxu0 0.0
  %1641 = vmatpush1.msra.mxu0 0.0
  %1642 = vmatprep.subr.mxu0 0.0
  %1643 = vmatpush1.msra.mxu0 0.0
  %1644 = vmatprep.subr.mxu0 0.0
  %1645 = vmatpush1.msra.mxu0 0.0
  %1646 = vmatprep.subr.mxu0 0.0
  %1647 = vmatpush1.msra.mxu0 0.0
  %1648 = vmatprep.subr.mxu0 0.0
  %1649 = vmatpush1.msra.mxu0 0.0
  %1650 = vmatprep.subr.mxu0 0.0
  %1651 = vmatpush1.msra.mxu0 0.0
  %1652 = vmatprep.subr.mxu0 0.0
  %1653 = vmatpush1.msra.mxu0 0.0
  %1654 = vmatprep.subr.mxu0 0.0
  %1655 = vmatpush1.msra.mxu0 0.0
  %1656 = vmatprep.subr.mxu0 0.0
  %1657 = vmatpush1.msra.mxu0 0.0
  %1658 = vmatprep.subr.mxu0 0.0
  %1659 = vmatpush1.msra.mxu0 0.0
  %1660 = vmatprep.subr.mxu0 0.0
  %1661 = vmatpush1.msra.mxu0 0.0
  %1662 = vmatprep.subr.mxu0 0.0
  %1663 = vmatpush1.msra.mxu0 0.0
  %1664 = vmatprep.subr.mxu0 0.0
  %1665 = vmatpush1.msra.mxu0 0.0
  %1666 = vmatprep.subr.mxu0 0.0
  %1667 = vmatpush1.msra.mxu0 0.0
  %1668 = vmatprep.subr.mxu0 0.0
  %1669 = vmatpush1.msra.mxu0 0.0
  %1670 = vmatprep.subr.mxu0 0.0
  %1671 = vmatpush1.msra.mxu0 0.0
  %1672 = vmatprep.subr.mxu0 0.0
  %1673 = vmatpush1.msra.mxu0 0.0
  %1674 = vmatprep.subr.mxu0 0.0
  %1675 = vmatpush1.msra.mxu0 0.0
  %1676 = vmatprep.subr.mxu0 0.0
  %1677 = vmatpush1.msra.mxu0 0.0
  %1678 = vmatprep.mubr.f32.mxu0 0.0
  %1679 = vmatmul.mubr.f32.gmra.mrb[0].mxu0 %v1530
  %v1680 = vpop.f32.mrb[0].mxu0
  %v1681 = vadd.f32 %v1613, %v1680
  %v1682 = vpop.f32.mrb[0].mxu0
  %1683 = vmatprep.mubr.f32.mxu0 0.0
  %1684 = vmatmul.mubr.f32.gmra.mrb[0].mxu0 %v1533
  %v1685 = vpop.f32.mrb[0].mxu0
  %v1686 = vadd.f32 %v1613, %v1685
  %v1687 = vpop.f32.mrb[0].mxu0
  %1688 = vdwg.mxu0
  %v1689 = vsub.f32 0.0, %v1681
  %v1690 = vsub.f32 0.0, %v1686
  %v1691 = vmul.f32 %v1689, 1.442695
  %v1692 = vpow.pop %v1691
  %v1693 = vmul.f32 %v1690, 1.442695
  %v1694 = vpow.pop %v1693
  %v1695 = vadd.f32 %v1692, 1.0
  %v1696 = vadd.f32 %v1694, 1.0
  %v1697 = vrcp.pop %v1695
  %v1698 = vmul.f32 1.0, %v1697
  %v1699 = vrcp.pop %v1696
  %v1700 = vmul.f32 1.0, %v1699
  %v1701 = vtanh.pop %v1602
  %v1702 = vtanh.pop %v1607
  %v1703 = vmul.f32 %v1701, %v1698
  %v1704 = vmul.f32 %v1702, %v1700
  %v1705 = vadd.f32 %v1505, %v1703
  %v1706 = vadd.f32 %v1506, %v1704
  %v1707 = vadd.f32 %v1703, %v1523
  %v1708 = vadd.f32 %v1704, %v1524
  %1709 = vst.msk [vmem:[#allocation2 + $0x8] sm:$0xff] %vm34, %v1707
  %1710 = vst.msk [vmem:[#allocation2 + $0x10] sm:$0xff] %vm34, %v1708
  %s1711 = scalar_lea.vmem %s3, 288
  %v1712 = vld [vmem:[%s1711] sm:$0xff]
  %v1713 = vld [vmem:[%s1711 + $0x8] sm:$0xff]
  %v1714 = vld [vmem:[%s1711 + $0x10] sm:$0xff]
  %v1715 = vld [vmem:[%s1711 + $0x18] sm:$0xff]
  %s1716 = scalar_lea.vmem %s4, 288
  %v1717 = vld [vmem:[%s1716] sm:$0xff]
  %v1718 = vld [vmem:[%s1716 + $0x8] sm:$0xff]
  %v1719 = vld [vmem:[%s1716 + $0x10] sm:$0xff]
  %v1720 = vld [vmem:[%s1716 + $0x18] sm:$0xff]
  %v1721 = vld [vmem:[%s5 + $0x5] sm:$0x1]
  %v1722 = vld [vmem:[%s6 + $0x5] sm:$0x1]
  %v1723 = vld [vmem:[#allocation2 + $0x8] sm:$0xff]
  %v1724 = vld [vmem:[#allocation2 + $0x10] sm:$0xff]
  %v1725 = vlaneseq
  %v1726 = vshrl.u32 %v1725, 7
  %v1727 = vsub.s32 0, %v1726
  %v1728 = vrot.slane %v1721, %v1727
  %v1730 = vsel %vm34, %v1723, 0
  %v1733 = vsel %vm34, %v1724, 0
  %1735 = vmatprep.subr.mxu0 0.0
  %1736 = vmatpush1.msra.mxu0 %v1712
  %1737 = vmatprep.subr.mxu0 0.0
  %1738 = vmatpush1.msra.mxu0 %v1713
  %1739 = vmatprep.subr.mxu0 0.0
  %1740 = vmatpush1.msra.mxu0 %v1714
  %1741 = vmatprep.subr.mxu0 0.0
  %1742 = vmatpush1.msra.mxu0 %v1715
  %1743 = vmatprep.subr.mxu0 0.0
  %1744 = vmatpush1.msra.mxu0 0.0
  %1745 = vmatprep.subr.mxu0 0.0
  %1746 = vmatpush1.msra.mxu0 0.0
  %1747 = vmatprep.subr.mxu0 0.0
  %1748 = vmatpush1.msra.mxu0 0.0
  %1749 = vmatprep.subr.mxu0 0.0
  %1750 = vmatpush1.msra.mxu0 0.0
  %1751 = vmatprep.subr.mxu0 0.0
  %1752 = vmatpush1.msra.mxu0 0.0
  %1753 = vmatprep.subr.mxu0 0.0
  %1754 = vmatpush1.msra.mxu0 0.0
  %1755 = vmatprep.subr.mxu0 0.0
  %1756 = vmatpush1.msra.mxu0 0.0
  %1757 = vmatprep.subr.mxu0 0.0
  %1758 = vmatpush1.msra.mxu0 0.0
  %1759 = vmatprep.subr.mxu0 0.0
  %1760 = vmatpush1.msra.mxu0 0.0
  %1761 = vmatprep.subr.mxu0 0.0
  %1762 = vmatpush1.msra.mxu0 0.0
  %1763 = vmatprep.subr.mxu0 0.0
  %1764 = vmatpush1.msra.mxu0 0.0
  %1765 = vmatprep.subr.mxu0 0.0
  %1766 = vmatpush1.msra.mxu0 0.0
  %1767 = vmatprep.subr.mxu0 0.0
  %1768 = vmatpush1.msra.mxu0 0.0
  %1769 = vmatprep.subr.mxu0 0.0
  %1770 = vmatpush1.msra.mxu0 0.0
  %1771 = vmatprep.subr.mxu0 0.0
  %1772 = vmatpush1.msra.mxu0 0.0
  %1773 = vmatprep.subr.mxu0 0.0
  %1774 = vmatpush1.msra.mxu0 0.0
  %1775 = vmatprep.subr.mxu0 0.0
  %1776 = vmatpush1.msra.mxu0 0.0
  %1777 = vmatprep.subr.mxu0 0.0
  %1778 = vmatpush1.msra.mxu0 0.0
  %1779 = vmatprep.subr.mxu0 0.0
  %1780 = vmatpush1.msra.mxu0 0.0
  %1781 = vmatprep.subr.mxu0 0.0
  %1782 = vmatpush1.msra.mxu0 0.0
  %1783 = vmatprep.subr.mxu0 0.0
  %1784 = vmatpush1.msra.mxu0 0.0
  %1785 = vmatprep.subr.mxu0 0.0
  %1786 = vmatpush1.msra.mxu0 0.0
  %1787 = vmatprep.subr.mxu0 0.0
  %1788 = vmatpush1.msra.mxu0 0.0
  %1789 = vmatprep.subr.mxu0 0.0
  %1790 = vmatpush1.msra.mxu0 0.0
  %1791 = vmatprep.subr.mxu0 0.0
  %1792 = vmatpush1.msra.mxu0 0.0
  %1793 = vmatprep.subr.mxu0 0.0
  %1794 = vmatpush1.msra.mxu0 0.0
  %1795 = vmatprep.subr.mxu0 0.0
  %1796 = vmatpush1.msra.mxu0 0.0
  %1797 = vmatprep.subr.mxu0 0.0
  %1798 = vmatpush1.msra.mxu0 0.0
  %1799 = vmatprep.mubr.f32.mxu0 0.0
  %1800 = vmatmul.mubr.f32.gmra.mrb[0].mxu0 %v1730
  %v1801 = vpop.f32.mrb[0].mxu0
  %v1802 = vadd.f32 %v1728, %v1801
  %v1803 = vpop.f32.mrb[0].mxu0
  %1804 = vmatprep.mubr.f32.mxu0 0.0
  %1805 = vmatmul.mubr.f32.gmra.mrb[0].mxu0 %v1733
  %v1806 = vpop.f32.mrb[0].mxu0
  %v1807 = vadd.f32 %v1728, %v1806
  %v1808 = vpop.f32.mrb[0].mxu0
  %1809 = vdwg.mxu0
  %v1810 = vlaneseq
  %v1811 = vshrl.u32 %v1810, 7
  %v1812 = vsub.s32 0, %v1811
  %v1813 = vrot.slane %v1722, %v1812
  %1814 = vmatprep.subr.mxu0 0.0
  %1815 = vmatpush1.msra.mxu0 %v1717
  %1816 = vmatprep.subr.mxu0 0.0
  %1817 = vmatpush1.msra.mxu0 %v1718
  %1818 = vmatprep.subr.mxu0 0.0
  %1819 = vmatpush1.msra.mxu0 %v1719
  %1820 = vmatprep.subr.mxu0 0.0
  %1821 = vmatpush1.msra.mxu0 %v1720
  %1822 = vmatprep.subr.mxu0 0.0
  %1823 = vmatpush1.msra.mxu0 0.0
  %1824 = vmatprep.subr.mxu0 0.0
  %1825 = vmatpush1.msra.mxu0 0.0
  %1826 = vmatprep.subr.mxu0 0.0
  %1827 = vmatpush1.msra.mxu0 0.0
  %1828 = vmatprep.subr.mxu0 0.0
  %1829 = vmatpush1.msra.mxu0 0.0
  %1830 = vmatprep.subr.mxu0 0.0
  %1831 = vmatpush1.msra.mxu0 0.0
  %1832 = vmatprep.subr.mxu0 0.0
  %1833 = vmatpush1.msra.mxu0 0.0
  %1834 = vmatprep.subr.mxu0 0.0
  %1835 = vmatpush1.msra.mxu0 0.0
  %1836 = vmatprep.subr.mxu0 0.0
  %1837 = vmatpush1.msra.mxu0 0.0
  %1838 = vmatprep.subr.mxu0 0.0
  %1839 = vmatpush1.msra.mxu0 0.0
  %1840 = vmatprep.subr.mxu0 0.0
  %1841 = vmatpush1.msra.mxu0 0.0
  %1842 = vmatprep.subr.mxu0 0.0
  %1843 = vmatpush1.msra.mxu0 0.0
  %1844 = vmatprep.subr.mxu0 0.0
  %1845 = vmatpush1.msra.mxu0 0.0
  %1846 = vmatprep.subr.mxu0 0.0
  %1847 = vmatpush1.msra.mxu0 0.0
  %1848 = vmatprep.subr.mxu0 0.0
  %1849 = vmatpush1.msra.mxu0 0.0
  %1850 = vmatprep.subr.mxu0 0.0
  %1851 = vmatpush1.msra.mxu0 0.0
  %1852 = vmatprep.subr.mxu0 0.0
  %1853 = vmatpush1.msra.mxu0 0.0
  %1854 = vmatprep.subr.mxu0 0.0
  %1855 = vmatpush1.msra.mxu0 0.0
  %1856 = vmatprep.subr.mxu0 0.0
  %1857 = vmatpush1.msra.mxu0 0.0
  %1858 = vmatprep.subr.mxu0 0.0
  %1859 = vmatpush1.msra.mxu0 0.0
  %1860 = vmatprep.subr.mxu0 0.0
  %1861 = vmatpush1.msra.mxu0 0.0
  %1862 = vmatprep.subr.mxu0 0.0
  %1863 = vmatpush1.msra.mxu0 0.0
  %1864 = vmatprep.subr.mxu0 0.0
  %1865 = vmatpush1.msra.mxu0 0.0
  %1866 = vmatprep.subr.mxu0 0.0
  %1867 = vmatpush1.msra.mxu0 0.0
  %1868 = vmatprep.subr.mxu0 0.0
  %1869 = vmatpush1.msra.mxu0 0.0
  %1870 = vmatprep.subr.mxu0 0.0
  %1871 = vmatpush1.msra.mxu0 0.0
  %1872 = vmatprep.subr.mxu0 0.0
  %1873 = vmatpush1.msra.mxu0 0.0
  %1874 = vmatprep.subr.mxu0 0.0
  %1875 = vmatpush1.msra.mxu0 0.0
  %1876 = vmatprep.subr.mxu0 0.0
  %1877 = vmatpush1.msra.mxu0 0.0
  %1878 = vmatprep.mubr.f32.mxu0 0.0
  %1879 = vmatmul.mubr.f32.gmra.mrb[0].mxu0 %v1730
  %v1880 = vpop.f32.mrb[0].mxu0
  %v1881 = vadd.f32 %v1813, %v1880
  %v1882 = vpop.f32.mrb[0].mxu0
  %1883 = vmatprep.mubr.f32.mxu0 0.0
  %1884 = vmatmul.mubr.f32.gmra.mrb[0].mxu0 %v1733
  %v1885 = vpop.f32.mrb[0].mxu0
  %v1886 = vadd.f32 %v1813, %v1885
  %v1887 = vpop.f32.mrb[0].mxu0
  %1888 = vdwg.mxu0
  %v1889 = vsub.f32 0.0, %v1881
  %v1890 = vsub.f32 0.0, %v1886
  %v1891 = vmul.f32 %v1889, 1.442695
  %v1892 = vpow.pop %v1891
  %v1893 = vmul.f32 %v1890, 1.442695
  %v1894 = vpow.pop %v1893
  %v1895 = vadd.f32 %v1892, 1.0
  %v1896 = vadd.f32 %v1894, 1.0
  %v1897 = vrcp.pop %v1895
  %v1898 = vmul.f32 1.0, %v1897
  %v1899 = vrcp.pop %v1896
  %v1900 = vmul.f32 1.0, %v1899
  %v1901 = vtanh.pop %v1802
  %v1902 = vtanh.pop %v1807
  %v1903 = vmul.f32 %v1901, %v1898
  %v1904 = vmul.f32 %v1902, %v1900
  %v1905 = vadd.f32 %v1705, %v1903
  %v1906 = vadd.f32 %v1706, %v1904
  %v1907 = vadd.f32 %v1903, %v1723
  %v1908 = vadd.f32 %v1904, %v1724
  %1909 = vst.msk [vmem:[#allocation2 + $0x8] sm:$0xff] %vm34, %v1907
  %1910 = vst.msk [vmem:[#allocation2 + $0x10] sm:$0xff] %vm34, %v1908
  %s1911 = scalar_lea.vmem %s3, 352
  %v1912 = vld [vmem:[%s1911] sm:$0xff]
  %v1913 = vld [vmem:[%s1911 + $0x8] sm:$0xff]
  %v1914 = vld [vmem:[%s1911 + $0x10] sm:$0xff]
  %v1915 = vld [vmem:[%s1911 + $0x18] sm:$0xff]
  %s1916 = scalar_lea.vmem %s4, 352
  %v1917 = vld [vmem:[%s1916] sm:$0xff]
  %v1918 = vld [vmem:[%s1916 + $0x8] sm:$0xff]
  %v1919 = vld [vmem:[%s1916 + $0x10] sm:$0xff]
  %v1920 = vld [vmem:[%s1916 + $0x18] sm:$0xff]
  %v1921 = vld [vmem:[%s5 + $0x6] sm:$0x1]
  %v1922 = vld [vmem:[%s6 + $0x6] sm:$0x1]
  %v1923 = vld [vmem:[#allocation2 + $0x8] sm:$0xff]
  %v1924 = vld [vmem:[#allocation2 + $0x10] sm:$0xff]
  %v1925 = vlaneseq
  %v1926 = vshrl.u32 %v1925, 7
  %v1927 = vsub.s32 0, %v1926
  %v1928 = vrot.slane %v1921, %v1927
  %v1930 = vsel %vm34, %v1923, 0
  %v1933 = vsel %vm34, %v1924, 0
  %1935 = vmatprep.subr.mxu0 0.0
  %1936 = vmatpush1.msra.mxu0 %v1912
  %1937 = vmatprep.subr.mxu0 0.0
  %1938 = vmatpush1.msra.mxu0 %v1913
  %1939 = vmatprep.subr.mxu0 0.0
  %1940 = vmatpush1.msra.mxu0 %v1914
  %1941 = vmatprep.subr.mxu0 0.0
  %1942 = vmatpush1.msra.mxu0 %v1915
  %1943 = vmatprep.subr.mxu0 0.0
  %1944 = vmatpush1.msra.mxu0 0.0
  %1945 = vmatprep.subr.mxu0 0.0
  %1946 = vmatpush1.msra.mxu0 0.0
  %1947 = vmatprep.subr.mxu0 0.0
  %1948 = vmatpush1.msra.mxu0 0.0
  %1949 = vmatprep.subr.mxu0 0.0
  %1950 = vmatpush1.msra.mxu0 0.0
  %1951 = vmatprep.subr.mxu0 0.0
  %1952 = vmatpush1.msra.mxu0 0.0
  %1953 = vmatprep.subr.mxu0 0.0
  %1954 = vmatpush1.msra.mxu0 0.0
  %1955 = vmatprep.subr.mxu0 0.0
  %1956 = vmatpush1.msra.mxu0 0.0
  %1957 = vmatprep.subr.mxu0 0.0
  %1958 = vmatpush1.msra.mxu0 0.0
  %1959 = vmatprep.subr.mxu0 0.0
  %1960 = vmatpush1.msra.mxu0 0.0
  %1961 = vmatprep.subr.mxu0 0.0
  %1962 = vmatpush1.msra.mxu0 0.0
  %1963 = vmatprep.subr.mxu0 0.0
  %1964 = vmatpush1.msra.mxu0 0.0
  %1965 = vmatprep.subr.mxu0 0.0
  %1966 = vmatpush1.msra.mxu0 0.0
  %1967 = vmatprep.subr.mxu0 0.0
  %1968 = vmatpush1.msra.mxu0 0.0
  %1969 = vmatprep.subr.mxu0 0.0
  %1970 = vmatpush1.msra.mxu0 0.0
  %1971 = vmatprep.subr.mxu0 0.0
  %1972 = vmatpush1.msra.mxu0 0.0
  %1973 = vmatprep.subr.mxu0 0.0
  %1974 = vmatpush1.msra.mxu0 0.0
  %1975 = vmatprep.subr.mxu0 0.0
  %1976 = vmatpush1.msra.mxu0 0.0
  %1977 = vmatprep.subr.mxu0 0.0
  %1978 = vmatpush1.msra.mxu0 0.0
  %1979 = vmatprep.subr.mxu0 0.0
  %1980 = vmatpush1.msra.mxu0 0.0
  %1981 = vmatprep.subr.mxu0 0.0
  %1982 = vmatpush1.msra.mxu0 0.0
  %1983 = vmatprep.subr.mxu0 0.0
  %1984 = vmatpush1.msra.mxu0 0.0
  %1985 = vmatprep.subr.mxu0 0.0
  %1986 = vmatpush1.msra.mxu0 0.0
  %1987 = vmatprep.subr.mxu0 0.0
  %1988 = vmatpush1.msra.mxu0 0.0
  %1989 = vmatprep.subr.mxu0 0.0
  %1990 = vmatpush1.msra.mxu0 0.0
  %1991 = vmatprep.subr.mxu0 0.0
  %1992 = vmatpush1.msra.mxu0 0.0
  %1993 = vmatprep.subr.mxu0 0.0
  %1994 = vmatpush1.msra.mxu0 0.0
  %1995 = vmatprep.subr.mxu0 0.0
  %1996 = vmatpush1.msra.mxu0 0.0
  %1997 = vmatprep.subr.mxu0 0.0
  %1998 = vmatpush1.msra.mxu0 0.0
  %1999 = vmatprep.mubr.f32.mxu0 0.0
  %2000 = vmatmul.mubr.f32.gmra.mrb[0].mxu0 %v1930
  %v2001 = vpop.f32.mrb[0].mxu0
  %v2002 = vadd.f32 %v1928, %v2001
  %v2003 = vpop.f32.mrb[0].mxu0
  %2004 = vmatprep.mubr.f32.mxu0 0.0
  %2005 = vmatmul.mubr.f32.gmra.mrb[0].mxu0 %v1933
  %v2006 = vpop.f32.mrb[0].mxu0
  %v2007 = vadd.f32 %v1928, %v2006
  %v2008 = vpop.f32.mrb[0].mxu0
  %2009 = vdwg.mxu0
  %v2010 = vlaneseq
  %v2011 = vshrl.u32 %v2010, 7
  %v2012 = vsub.s32 0, %v2011
  %v2013 = vrot.slane %v1922, %v2012
  %2014 = vmatprep.subr.mxu0 0.0
  %2015 = vmatpush1.msra.mxu0 %v1917
  %2016 = vmatprep.subr.mxu0 0.0
  %2017 = vmatpush1.msra.mxu0 %v1918
  %2018 = vmatprep.subr.mxu0 0.0
  %2019 = vmatpush1.msra.mxu0 %v1919
  %2020 = vmatprep.subr.mxu0 0.0
  %2021 = vmatpush1.msra.mxu0 %v1920
  %2022 = vmatprep.subr.mxu0 0.0
  %2023 = vmatpush1.msra.mxu0 0.0
  %2024 = vmatprep.subr.mxu0 0.0
  %2025 = vmatpush1.msra.mxu0 0.0
  %2026 = vmatprep.subr.mxu0 0.0
  %2027 = vmatpush1.msra.mxu0 0.0
  %2028 = vmatprep.subr.mxu0 0.0
  %2029 = vmatpush1.msra.mxu0 0.0
  %2030 = vmatprep.subr.mxu0 0.0
  %2031 = vmatpush1.msra.mxu0 0.0
  %2032 = vmatprep.subr.mxu0 0.0
  %2033 = vmatpush1.msra.mxu0 0.0
  %2034 = vmatprep.subr.mxu0 0.0
  %2035 = vmatpush1.msra.mxu0 0.0
  %2036 = vmatprep.subr.mxu0 0.0
  %2037 = vmatpush1.msra.mxu0 0.0
  %2038 = vmatprep.subr.mxu0 0.0
  %2039 = vmatpush1.msra.mxu0 0.0
  %2040 = vmatprep.subr.mxu0 0.0
  %2041 = vmatpush1.msra.mxu0 0.0
  %2042 = vmatprep.subr.mxu0 0.0
  %2043 = vmatpush1.msra.mxu0 0.0
  %2044 = vmatprep.subr.mxu0 0.0
  %2045 = vmatpush1.msra.mxu0 0.0
  %2046 = vmatprep.subr.mxu0 0.0
  %2047 = vmatpush1.msra.mxu0 0.0
  %2048 = vmatprep.subr.mxu0 0.0
  %2049 = vmatpush1.msra.mxu0 0.0
  %2050 = vmatprep.subr.mxu0 0.0
  %2051 = vmatpush1.msra.mxu0 0.0
  %2052 = vmatprep.subr.mxu0 0.0
  %2053 = vmatpush1.msra.mxu0 0.0
  %2054 = vmatprep.subr.mxu0 0.0
  %2055 = vmatpush1.msra.mxu0 0.0
  %2056 = vmatprep.subr.mxu0 0.0
  %2057 = vmatpush1.msra.mxu0 0.0
  %2058 = vmatprep.subr.mxu0 0.0
  %2059 = vmatpush1.msra.mxu0 0.0
  %2060 = vmatprep.subr.mxu0 0.0
  %2061 = vmatpush1.msra.mxu0 0.0
  %2062 = vmatprep.subr.mxu0 0.0
  %2063 = vmatpush1.msra.mxu0 0.0
  %2064 = vmatprep.subr.mxu0 0.0
  %2065 = vmatpush1.msra.mxu0 0.0
  %2066 = vmatprep.subr.mxu0 0.0
  %2067 = vmatpush1.msra.mxu0 0.0
  %2068 = vmatprep.subr.mxu0 0.0
  %2069 = vmatpush1.msra.mxu0 0.0
  %2070 = vmatprep.subr.mxu0 0.0
  %2071 = vmatpush1.msra.mxu0 0.0
  %2072 = vmatprep.subr.mxu0 0.0
  %2073 = vmatpush1.msra.mxu0 0.0
  %2074 = vmatprep.subr.mxu0 0.0
  %2075 = vmatpush1.msra.mxu0 0.0
  %2076 = vmatprep.subr.mxu0 0.0
  %2077 = vmatpush1.msra.mxu0 0.0
  %2078 = vmatprep.mubr.f32.mxu0 0.0
  %2079 = vmatmul.mubr.f32.gmra.mrb[0].mxu0 %v1930
  %v2080 = vpop.f32.mrb[0].mxu0
  %v2081 = vadd.f32 %v2013, %v2080
  %v2082 = vpop.f32.mrb[0].mxu0
  %2083 = vmatprep.mubr.f32.mxu0 0.0
  %2084 = vmatmul.mubr.f32.gmra.mrb[0].mxu0 %v1933
  %v2085 = vpop.f32.mrb[0].mxu0
  %v2086 = vadd.f32 %v2013, %v2085
  %v2087 = vpop.f32.mrb[0].mxu0
  %2088 = vdwg.mxu0
  %v2089 = vsub.f32 0.0, %v2081
  %v2090 = vsub.f32 0.0, %v2086
  %v2091 = vmul.f32 %v2089, 1.442695
  %v2092 = vpow.pop %v2091
  %v2093 = vmul.f32 %v2090, 1.442695
  %v2094 = vpow.pop %v2093
  %v2095 = vadd.f32 %v2092, 1.0
  %v2096 = vadd.f32 %v2094, 1.0
  %v2097 = vrcp.pop %v2095
  %v2098 = vmul.f32 1.0, %v2097
  %v2099 = vrcp.pop %v2096
  %v2100 = vmul.f32 1.0, %v2099
  %v2101 = vtanh.pop %v2002
  %v2102 = vtanh.pop %v2007
  %v2103 = vmul.f32 %v2101, %v2098
  %v2104 = vmul.f32 %v2102, %v2100
  %v2105 = vadd.f32 %v1905, %v2103
  %v2106 = vadd.f32 %v1906, %v2104
  %v2107 = vadd.f32 %v2103, %v1923
  %v2108 = vadd.f32 %v2104, %v1924
  %2109 = vst.msk [vmem:[#allocation2 + $0x8] sm:$0xff] %vm34, %v2107
  %2110 = vst.msk [vmem:[#allocation2 + $0x10] sm:$0xff] %vm34, %v2108
  %s2111 = scalar_lea.vmem %s3, 416
  %v2112 = vld [vmem:[%s2111] sm:$0xff]
  %v2113 = vld [vmem:[%s2111 + $0x8] sm:$0xff]
  %v2114 = vld [vmem:[%s2111 + $0x10] sm:$0xff]
  %v2115 = vld [vmem:[%s2111 + $0x18] sm:$0xff]
  %s2116 = scalar_lea.vmem %s4, 416
  %v2117 = vld [vmem:[%s2116] sm:$0xff]
  %v2118 = vld [vmem:[%s2116 + $0x8] sm:$0xff]
  %v2119 = vld [vmem:[%s2116 + $0x10] sm:$0xff]
  %v2120 = vld [vmem:[%s2116 + $0x18] sm:$0xff]
  %v2121 = vld [vmem:[%s5 + $0x7] sm:$0x1]
  %v2122 = vld [vmem:[%s6 + $0x7] sm:$0x1]
  %v2123 = vld [vmem:[#allocation2 + $0x8] sm:$0xff]
  %v2124 = vld [vmem:[#allocation2 + $0x10] sm:$0xff]
  %v2125 = vlaneseq
  %v2126 = vshrl.u32 %v2125, 7
  %v2127 = vsub.s32 0, %v2126
  %v2128 = vrot.slane %v2121, %v2127
  %v2130 = vsel %vm34, %v2123, 0
  %v2133 = vsel %vm34, %v2124, 0
  %2135 = vmatprep.subr.mxu0 0.0
  %2136 = vmatpush1.msra.mxu0 %v2112
  %2137 = vmatprep.subr.mxu0 0.0
  %2138 = vmatpush1.msra.mxu0 %v2113
  %2139 = vmatprep.subr.mxu0 0.0
  %2140 = vmatpush1.msra.mxu0 %v2114
  %2141 = vmatprep.subr.mxu0 0.0
  %2142 = vmatpush1.msra.mxu0 %v2115
  %2143 = vmatprep.subr.mxu0 0.0
  %2144 = vmatpush1.msra.mxu0 0.0
  %2145 = vmatprep.subr.mxu0 0.0
  %2146 = vmatpush1.msra.mxu0 0.0
  %2147 = vmatprep.subr.mxu0 0.0
  %2148 = vmatpush1.msra.mxu0 0.0
  %2149 = vmatprep.subr.mxu0 0.0
  %2150 = vmatpush1.msra.mxu0 0.0
  %2151 = vmatprep.subr.mxu0 0.0
  %2152 = vmatpush1.msra.mxu0 0.0
  %2153 = vmatprep.subr.mxu0 0.0
  %2154 = vmatpush1.msra.mxu0 0.0
  %2155 = vmatprep.subr.mxu0 0.0
  %2156 = vmatpush1.msra.mxu0 0.0
  %2157 = vmatprep.subr.mxu0 0.0
  %2158 = vmatpush1.msra.mxu0 0.0
  %2159 = vmatprep.subr.mxu0 0.0
  %2160 = vmatpush1.msra.mxu0 0.0
  %2161 = vmatprep.subr.mxu0 0.0
  %2162 = vmatpush1.msra.mxu0 0.0
  %2163 = vmatprep.subr.mxu0 0.0
  %2164 = vmatpush1.msra.mxu0 0.0
  %2165 = vmatprep.subr.mxu0 0.0
  %2166 = vmatpush1.msra.mxu0 0.0
  %2167 = vmatprep.subr.mxu0 0.0
  %2168 = vmatpush1.msra.mxu0 0.0
  %2169 = vmatprep.subr.mxu0 0.0
  %2170 = vmatpush1.msra.mxu0 0.0
  %2171 = vmatprep.subr.mxu0 0.0
  %2172 = vmatpush1.msra.mxu0 0.0
  %2173 = vmatprep.subr.mxu0 0.0
  %2174 = vmatpush1.msra.mxu0 0.0
  %2175 = vmatprep.subr.mxu0 0.0
  %2176 = vmatpush1.msra.mxu0 0.0
  %2177 = vmatprep.subr.mxu0 0.0
  %2178 = vmatpush1.msra.mxu0 0.0
  %2179 = vmatprep.subr.mxu0 0.0
  %2180 = vmatpush1.msra.mxu0 0.0
  %2181 = vmatprep.subr.mxu0 0.0
  %2182 = vmatpush1.msra.mxu0 0.0
  %2183 = vmatprep.subr.mxu0 0.0
  %2184 = vmatpush1.msra.mxu0 0.0
  %2185 = vmatprep.subr.mxu0 0.0
  %2186 = vmatpush1.msra.mxu0 0.0
  %2187 = vmatprep.subr.mxu0 0.0
  %2188 = vmatpush1.msra.mxu0 0.0
  %2189 = vmatprep.subr.mxu0 0.0
  %2190 = vmatpush1.msra.mxu0 0.0
  %2191 = vmatprep.subr.mxu0 0.0
  %2192 = vmatpush1.msra.mxu0 0.0
  %2193 = vmatprep.subr.mxu0 0.0
  %2194 = vmatpush1.msra.mxu0 0.0
  %2195 = vmatprep.subr.mxu0 0.0
  %2196 = vmatpush1.msra.mxu0 0.0
  %2197 = vmatprep.subr.mxu0 0.0
  %2198 = vmatpush1.msra.mxu0 0.0
  %2199 = vmatprep.mubr.f32.mxu0 0.0
  %2200 = vmatmul.mubr.f32.gmra.mrb[0].mxu0 %v2130
  %v2201 = vpop.f32.mrb[0].mxu0
  %v2202 = vadd.f32 %v2128, %v2201
  %v2203 = vpop.f32.mrb[0].mxu0
  %2204 = vmatprep.mubr.f32.mxu0 0.0
  %2205 = vmatmul.mubr.f32.gmra.mrb[0].mxu0 %v2133
  %v2206 = vpop.f32.mrb[0].mxu0
  %v2207 = vadd.f32 %v2128, %v2206
  %v2208 = vpop.f32.mrb[0].mxu0
  %2209 = vdwg.mxu0
  %v2210 = vlaneseq
  %v2211 = vshrl.u32 %v2210, 7
  %v2212 = vsub.s32 0, %v2211
  %v2213 = vrot.slane %v2122, %v2212
  %2214 = vmatprep.subr.mxu0 0.0
  %2215 = vmatpush1.msra.mxu0 %v2117
  %2216 = vmatprep.subr.mxu0 0.0
  %2217 = vmatpush1.msra.mxu0 %v2118
  %2218 = vmatprep.subr.mxu0 0.0
  %2219 = vmatpush1.msra.mxu0 %v2119
  %2220 = vmatprep.subr.mxu0 0.0
  %2221 = vmatpush1.msra.mxu0 %v2120
  %2222 = vmatprep.subr.mxu0 0.0
  %2223 = vmatpush1.msra.mxu0 0.0
  %2224 = vmatprep.subr.mxu0 0.0
  %2225 = vmatpush1.msra.mxu0 0.0
  %2226 = vmatprep.subr.mxu0 0.0
  %2227 = vmatpush1.msra.mxu0 0.0
  %2228 = vmatprep.subr.mxu0 0.0
  %2229 = vmatpush1.msra.mxu0 0.0
  %2230 = vmatprep.subr.mxu0 0.0
  %2231 = vmatpush1.msra.mxu0 0.0
  %2232 = vmatprep.subr.mxu0 0.0
  %2233 = vmatpush1.msra.mxu0 0.0
  %2234 = vmatprep.subr.mxu0 0.0
  %2235 = vmatpush1.msra.mxu0 0.0
  %2236 = vmatprep.subr.mxu0 0.0
  %2237 = vmatpush1.msra.mxu0 0.0
  %2238 = vmatprep.subr.mxu0 0.0
  %2239 = vmatpush1.msra.mxu0 0.0
  %2240 = vmatprep.subr.mxu0 0.0
  %2241 = vmatpush1.msra.mxu0 0.0
  %2242 = vmatprep.subr.mxu0 0.0
  %2243 = vmatpush1.msra.mxu0 0.0
  %2244 = vmatprep.subr.mxu0 0.0
  %2245 = vmatpush1.msra.mxu0 0.0
  %2246 = vmatprep.subr.mxu0 0.0
  %2247 = vmatpush1.msra.mxu0 0.0
  %2248 = vmatprep.subr.mxu0 0.0
  %2249 = vmatpush1.msra.mxu0 0.0
  %2250 = vmatprep.subr.mxu0 0.0
  %2251 = vmatpush1.msra.mxu0 0.0
  %2252 = vmatprep.subr.mxu0 0.0
  %2253 = vmatpush1.msra.mxu0 0.0
  %2254 = vmatprep.subr.mxu0 0.0
  %2255 = vmatpush1.msra.mxu0 0.0
  %2256 = vmatprep.subr.mxu0 0.0
  %2257 = vmatpush1.msra.mxu0 0.0
  %2258 = vmatprep.subr.mxu0 0.0
  %2259 = vmatpush1.msra.mxu0 0.0
  %2260 = vmatprep.subr.mxu0 0.0
  %2261 = vmatpush1.msra.mxu0 0.0
  %2262 = vmatprep.subr.mxu0 0.0
  %2263 = vmatpush1.msra.mxu0 0.0
  %2264 = vmatprep.subr.mxu0 0.0
  %2265 = vmatpush1.msra.mxu0 0.0
  %2266 = vmatprep.subr.mxu0 0.0
  %2267 = vmatpush1.msra.mxu0 0.0
  %2268 = vmatprep.subr.mxu0 0.0
  %2269 = vmatpush1.msra.mxu0 0.0
  %2270 = vmatprep.subr.mxu0 0.0
  %2271 = vmatpush1.msra.mxu0 0.0
  %2272 = vmatprep.subr.mxu0 0.0
  %2273 = vmatpush1.msra.mxu0 0.0
  %2274 = vmatprep.subr.mxu0 0.0
  %2275 = vmatpush1.msra.mxu0 0.0
  %2276 = vmatprep.subr.mxu0 0.0
  %2277 = vmatpush1.msra.mxu0 0.0
  %2278 = vmatprep.mubr.f32.mxu0 0.0
  %2279 = vmatmul.mubr.f32.gmra.mrb[0].mxu0 %v2130
  %v2280 = vpop.f32.mrb[0].mxu0
  %v2281 = vadd.f32 %v2213, %v2280
  %v2282 = vpop.f32.mrb[0].mxu0
  %2283 = vmatprep.mubr.f32.mxu0 0.0
  %2284 = vmatmul.mubr.f32.gmra.mrb[0].mxu0 %v2133
  %v2285 = vpop.f32.mrb[0].mxu0
  %v2286 = vadd.f32 %v2213, %v2285
  %v2287 = vpop.f32.mrb[0].mxu0
  %2288 = vdwg.mxu0
  %v2289 = vsub.f32 0.0, %v2281
  %v2290 = vsub.f32 0.0, %v2286
  %v2291 = vmul.f32 %v2289, 1.442695
  %v2292 = vpow.pop %v2291
  %v2293 = vmul.f32 %v2290, 1.442695
  %v2294 = vpow.pop %v2293
  %v2295 = vadd.f32 %v2292, 1.0
  %v2296 = vadd.f32 %v2294, 1.0
  %v2297 = vrcp.pop %v2295
  %v2298 = vmul.f32 1.0, %v2297
  %v2299 = vrcp.pop %v2296
  %v2300 = vmul.f32 1.0, %v2299
  %v2301 = vtanh.pop %v2202
  %v2302 = vtanh.pop %v2207
  %v2303 = vmul.f32 %v2301, %v2298
  %v2304 = vmul.f32 %v2302, %v2300
  %v2305 = vadd.f32 %v2105, %v2303
  %v2306 = vadd.f32 %v2106, %v2304
  %v2307 = vadd.f32 %v2303, %v2123
  %v2308 = vadd.f32 %v2304, %v2124
  %2309 = vst.msk [vmem:[#allocation2 + $0x8] sm:$0xff] %vm34, %v2307
  %2310 = vst.msk [vmem:[#allocation2 + $0x10] sm:$0xff] %vm34, %v2308
  %s2311 = scalar_lea.vmem %s3, 480
  %v2312 = vld [vmem:[%s2311] sm:$0xff]
  %v2313 = vld [vmem:[%s2311 + $0x8] sm:$0xff]
  %v2314 = vld [vmem:[%s2311 + $0x10] sm:$0xff]
  %v2315 = vld [vmem:[%s2311 + $0x18] sm:$0xff]
  %s2316 = scalar_lea.vmem %s4, 480
  %v2317 = vld [vmem:[%s2316] sm:$0xff]
  %v2318 = vld [vmem:[%s2316 + $0x8] sm:$0xff]
  %v2319 = vld [vmem:[%s2316 + $0x10] sm:$0xff]
  %v2320 = vld [vmem:[%s2316 + $0x18] sm:$0xff]
  %v2321 = vld [vmem:[%s5 + $0x8] sm:$0x1]
  %v2322 = vld [vmem:[%s6 + $0x8] sm:$0x1]
  %v2323 = vld [vmem:[#allocation2 + $0x8] sm:$0xff]
  %v2324 = vld [vmem:[#allocation2 + $0x10] sm:$0xff]
  %v2325 = vlaneseq
  %v2326 = vshrl.u32 %v2325, 7
  %v2327 = vsub.s32 0, %v2326
  %v2328 = vrot.slane %v2321, %v2327
  %v2330 = vsel %vm34, %v2323, 0
  %v2333 = vsel %vm34, %v2324, 0
  %2335 = vmatprep.subr.mxu0 0.0
  %2336 = vmatpush1.msra.mxu0 %v2312
  %2337 = vmatprep.subr.mxu0 0.0
  %2338 = vmatpush1.msra.mxu0 %v2313
  %2339 = vmatprep.subr.mxu0 0.0
  %2340 = vmatpush1.msra.mxu0 %v2314
  %2341 = vmatprep.subr.mxu0 0.0
  %2342 = vmatpush1.msra.mxu0 %v2315
  %2343 = vmatprep.subr.mxu0 0.0
  %2344 = vmatpush1.msra.mxu0 0.0
  %2345 = vmatprep.subr.mxu0 0.0
  %2346 = vmatpush1.msra.mxu0 0.0
  %2347 = vmatprep.subr.mxu0 0.0
  %2348 = vmatpush1.msra.mxu0 0.0
  %2349 = vmatprep.subr.mxu0 0.0
  %2350 = vmatpush1.msra.mxu0 0.0
  %2351 = vmatprep.subr.mxu0 0.0
  %2352 = vmatpush1.msra.mxu0 0.0
  %2353 = vmatprep.subr.mxu0 0.0
  %2354 = vmatpush1.msra.mxu0 0.0
  %2355 = vmatprep.subr.mxu0 0.0
  %2356 = vmatpush1.msra.mxu0 0.0
  %2357 = vmatprep.subr.mxu0 0.0
  %2358 = vmatpush1.msra.mxu0 0.0
  %2359 = vmatprep.subr.mxu0 0.0
  %2360 = vmatpush1.msra.mxu0 0.0
  %2361 = vmatprep.subr.mxu0 0.0
  %2362 = vmatpush1.msra.mxu0 0.0
  %2363 = vmatprep.subr.mxu0 0.0
  %2364 = vmatpush1.msra.mxu0 0.0
  %2365 = vmatprep.subr.mxu0 0.0
  %2366 = vmatpush1.msra.mxu0 0.0
  %2367 = vmatprep.subr.mxu0 0.0
  %2368 = vmatpush1.msra.mxu0 0.0
  %2369 = vmatprep.subr.mxu0 0.0
  %2370 = vmatpush1.msra.mxu0 0.0
  %2371 = vmatprep.subr.mxu0 0.0
  %2372 = vmatpush1.msra.mxu0 0.0
  %2373 = vmatprep.subr.mxu0 0.0
  %2374 = vmatpush1.msra.mxu0 0.0
  %2375 = vmatprep.subr.mxu0 0.0
  %2376 = vmatpush1.msra.mxu0 0.0
  %2377 = vmatprep.subr.mxu0 0.0
  %2378 = vmatpush1.msra.mxu0 0.0
  %2379 = vmatprep.subr.mxu0 0.0
  %2380 = vmatpush1.msra.mxu0 0.0
  %2381 = vmatprep.subr.mxu0 0.0
  %2382 = vmatpush1.msra.mxu0 0.0
  %2383 = vmatprep.subr.mxu0 0.0
  %2384 = vmatpush1.msra.mxu0 0.0
  %2385 = vmatprep.subr.mxu0 0.0
  %2386 = vmatpush1.msra.mxu0 0.0
  %2387 = vmatprep.subr.mxu0 0.0
  %2388 = vmatpush1.msra.mxu0 0.0
  %2389 = vmatprep.subr.mxu0 0.0
  %2390 = vmatpush1.msra.mxu0 0.0
  %2391 = vmatprep.subr.mxu0 0.0
  %2392 = vmatpush1.msra.mxu0 0.0
  %2393 = vmatprep.subr.mxu0 0.0
  %2394 = vmatpush1.msra.mxu0 0.0
  %2395 = vmatprep.subr.mxu0 0.0
  %2396 = vmatpush1.msra.mxu0 0.0
  %2397 = vmatprep.subr.mxu0 0.0
  %2398 = vmatpush1.msra.mxu0 0.0
  %2399 = vmatprep.mubr.f32.mxu0 0.0
  %2400 = vmatmul.mubr.f32.gmra.mrb[0].mxu0 %v2330
  %v2401 = vpop.f32.mrb[0].mxu0
  %v2402 = vadd.f32 %v2328, %v2401
  %v2403 = vpop.f32.mrb[0].mxu0
  %2404 = vmatprep.mubr.f32.mxu0 0.0
  %2405 = vmatmul.mubr.f32.gmra.mrb[0].mxu0 %v2333
  %v2406 = vpop.f32.mrb[0].mxu0
  %v2407 = vadd.f32 %v2328, %v2406
  %v2408 = vpop.f32.mrb[0].mxu0
  %2409 = vdwg.mxu0
  %v2410 = vlaneseq
  %v2411 = vshrl.u32 %v2410, 7
  %v2412 = vsub.s32 0, %v2411
  %v2413 = vrot.slane %v2322, %v2412
  %2414 = vmatprep.subr.mxu0 0.0
  %2415 = vmatpush1.msra.mxu0 %v2317
  %2416 = vmatprep.subr.mxu0 0.0
  %2417 = vmatpush1.msra.mxu0 %v2318
  %2418 = vmatprep.subr.mxu0 0.0
  %2419 = vmatpush1.msra.mxu0 %v2319
  %2420 = vmatprep.subr.mxu0 0.0
  %2421 = vmatpush1.msra.mxu0 %v2320
  %2422 = vmatprep.subr.mxu0 0.0
  %2423 = vmatpush1.msra.mxu0 0.0
  %2424 = vmatprep.subr.mxu0 0.0
  %2425 = vmatpush1.msra.mxu0 0.0
  %2426 = vmatprep.subr.mxu0 0.0
  %2427 = vmatpush1.msra.mxu0 0.0
  %2428 = vmatprep.subr.mxu0 0.0
  %2429 = vmatpush1.msra.mxu0 0.0
  %2430 = vmatprep.subr.mxu0 0.0
  %2431 = vmatpush1.msra.mxu0 0.0
  %2432 = vmatprep.subr.mxu0 0.0
  %2433 = vmatpush1.msra.mxu0 0.0
  %2434 = vmatprep.subr.mxu0 0.0
  %2435 = vmatpush1.msra.mxu0 0.0
  %2436 = vmatprep.subr.mxu0 0.0
  %2437 = vmatpush1.msra.mxu0 0.0
  %2438 = vmatprep.subr.mxu0 0.0
  %2439 = vmatpush1.msra.mxu0 0.0
  %2440 = vmatprep.subr.mxu0 0.0
  %2441 = vmatpush1.msra.mxu0 0.0
  %2442 = vmatprep.subr.mxu0 0.0
  %2443 = vmatpush1.msra.mxu0 0.0
  %2444 = vmatprep.subr.mxu0 0.0
  %2445 = vmatpush1.msra.mxu0 0.0
  %2446 = vmatprep.subr.mxu0 0.0
  %2447 = vmatpush1.msra.mxu0 0.0
  %2448 = vmatprep.subr.mxu0 0.0
  %2449 = vmatpush1.msra.mxu0 0.0
  %2450 = vmatprep.subr.mxu0 0.0
  %2451 = vmatpush1.msra.mxu0 0.0
  %2452 = vmatprep.subr.mxu0 0.0
  %2453 = vmatpush1.msra.mxu0 0.0
  %2454 = vmatprep.subr.mxu0 0.0
  %2455 = vmatpush1.msra.mxu0 0.0
  %2456 = vmatprep.subr.mxu0 0.0
  %2457 = vmatpush1.msra.mxu0 0.0
  %2458 = vmatprep.subr.mxu0 0.0
  %2459 = vmatpush1.msra.mxu0 0.0
  %2460 = vmatprep.subr.mxu0 0.0
  %2461 = vmatpush1.msra.mxu0 0.0
  %2462 = vmatprep.subr.mxu0 0.0
  %2463 = vmatpush1.msra.mxu0 0.0
  %2464 = vmatprep.subr.mxu0 0.0
  %2465 = vmatpush1.msra.mxu0 0.0
  %2466 = vmatprep.subr.mxu0 0.0
  %2467 = vmatpush1.msra.mxu0 0.0
  %2468 = vmatprep.subr.mxu0 0.0
  %2469 = vmatpush1.msra.mxu0 0.0
  %2470 = vmatprep.subr.mxu0 0.0
  %2471 = vmatpush1.msra.mxu0 0.0
  %2472 = vmatprep.subr.mxu0 0.0
  %2473 = vmatpush1.msra.mxu0 0.0
  %2474 = vmatprep.subr.mxu0 0.0
  %2475 = vmatpush1.msra.mxu0 0.0
  %2476 = vmatprep.subr.mxu0 0.0
  %2477 = vmatpush1.msra.mxu0 0.0
  %2478 = vmatprep.mubr.f32.mxu0 0.0
  %2479 = vmatmul.mubr.f32.gmra.mrb[0].mxu0 %v2330
  %v2480 = vpop.f32.mrb[0].mxu0
  %v2481 = vadd.f32 %v2413, %v2480
  %v2482 = vpop.f32.mrb[0].mxu0
  %2483 = vmatprep.mubr.f32.mxu0 0.0
  %2484 = vmatmul.mubr.f32.gmra.mrb[0].mxu0 %v2333
  %v2485 = vpop.f32.mrb[0].mxu0
  %v2486 = vadd.f32 %v2413, %v2485
  %v2487 = vpop.f32.mrb[0].mxu0
  %2488 = vdwg.mxu0
  %v2489 = vsub.f32 0.0, %v2481
  %v2490 = vsub.f32 0.0, %v2486
  %v2491 = vmul.f32 %v2489, 1.442695
  %v2492 = vpow.pop %v2491
  %v2493 = vmul.f32 %v2490, 1.442695
  %v2494 = vpow.pop %v2493
  %v2495 = vadd.f32 %v2492, 1.0
  %v2496 = vadd.f32 %v2494, 1.0
  %v2497 = vrcp.pop %v2495
  %v2498 = vmul.f32 1.0, %v2497
  %v2499 = vrcp.pop %v2496
  %v2500 = vmul.f32 1.0, %v2499
  %v2501 = vtanh.pop %v2402
  %v2502 = vtanh.pop %v2407
  %v2503 = vmul.f32 %v2501, %v2498
  %v2504 = vmul.f32 %v2502, %v2500
  %v2505 = vadd.f32 %v2305, %v2503
  %v2506 = vadd.f32 %v2306, %v2504
  %v2508 = vlaneseq
  %v2509 = vshrl.u32 %v2508, 7
  %v2510 = vsub.s32 0, %v2509
  %v2511 = vrot.slane %v38, %v2510
  %v2513 = vmul.f32 %v2505, %v2511
  %v2514 = vmul.f32 %v2506, %v2511
  %v2515 = vsel %vm34, %v2513, 0.0
  %2516 = vadd.xlane.f32.xlu0 %v2515
  %v2517 = vpop.xlane.xlu0 %2516
  %v2518 = vsel %vm34, %v2514, 0.0
  %2519 = vadd.xlane.f32.xlu0 %v2518
  %v2520 = vpop.xlane.xlu0 %2519
  %v2522 = vlaneseq
  %v2523 = vshrl.u32 %v2522, 7
  %v2524 = vsub.s32 0, %v2523
  %v2525 = vrot.slane %v39, %v2524
  %v2527 = vadd.f32 %v2517, %v2525
  %v2528 = vadd.f32 %v2520, %v2525
  %vm2529 = vcmask 7168
  %2530 = vst.msk [vmem:[%s9] sm:$0xff] %vm2529, %v2527
  %2531 = vst.msk [vmem:[%s9 + $0x8] sm:$0xff] %vm2529, %v2528
  %v2532 = vld [vmem:[%s1] sm:$0xff]
  %v2533 = vld [vmem:[%s41] sm:$0xff]
  %v2534 = vld [vmem:[%s2] sm:$0xff]
  %v2535 = vld [vmem:[%s44] sm:$0xff]
  %v2536 = vld [vmem:[%s5] sm:$0x1]
  %v2537 = vld [vmem:[%s6] sm:$0x1]
  %v2538 = vld [vmem:[%s0 + $0x20] sm:$0xff]
  %v2539 = vld [vmem:[%s0 + $0x28] sm:$0xff]
  %v2540 = vlaneseq
  %v2541 = vshrl.u32 %v2540, 7
  %v2542 = vsub.s32 0, %v2541
  %v2543 = vrot.slane %v2536, %v2542
  %v2545 = vsel %vm54, %v2538, 0
  %v2548 = vsel %vm54, %v2539, 0
  %2550 = vmatprep.subr.mxu0 0.0
  %2551 = vmatpush1.msra.mxu0 %v2533
  %2552 = vmatprep.subr.mxu0 0.0
  %2553 = vmatpush1.msra.mxu0 0.0
  %2554 = vmatprep.subr.mxu0 0.0
  %2555 = vmatpush1.msra.mxu0 0.0
  %2556 = vmatprep.subr.mxu0 0.0
  %2557 = vmatpush1.msra.mxu0 0.0
  %2558 = vmatprep.subr.mxu0 0.0
  %2559 = vmatpush1.msra.mxu0 0.0
  %2560 = vmatprep.subr.mxu0 0.0
  %2561 = vmatpush1.msra.mxu0 0.0
  %2562 = vmatprep.subr.mxu0 0.0
  %2563 = vmatpush1.msra.mxu0 0.0
  %2564 = vmatprep.subr.mxu0 0.0
  %2565 = vmatpush1.msra.mxu0 0.0
  %2566 = vmatprep.subr.mxu0 0.0
  %2567 = vmatpush1.msra.mxu0 0.0
  %2568 = vmatprep.subr.mxu0 0.0
  %2569 = vmatpush1.msra.mxu0 0.0
  %2570 = vmatprep.subr.mxu0 0.0
  %2571 = vmatpush1.msra.mxu0 0.0
  %2572 = vmatprep.subr.mxu0 0.0
  %2573 = vmatpush1.msra.mxu0 0.0
  %2574 = vmatprep.subr.mxu0 0.0
  %2575 = vmatpush1.msra.mxu0 0.0
  %2576 = vmatprep.subr.mxu0 0.0
  %2577 = vmatpush1.msra.mxu0 0.0
  %2578 = vmatprep.subr.mxu0 0.0
  %2579 = vmatpush1.msra.mxu0 0.0
  %2580 = vmatprep.subr.mxu0 0.0
  %2581 = vmatpush1.msra.mxu0 0.0
  %2582 = vmatprep.subr.mxu0 0.0
  %2583 = vmatpush1.msra.mxu0 0.0
  %2584 = vmatprep.subr.mxu0 0.0
  %2585 = vmatpush1.msra.mxu0 0.0
  %2586 = vmatprep.subr.mxu0 0.0
  %2587 = vmatpush1.msra.mxu0 0.0
  %2588 = vmatprep.subr.mxu0 0.0
  %2589 = vmatpush1.msra.mxu0 0.0
  %2590 = vmatprep.subr.mxu0 0.0
  %2591 = vmatpush1.msra.mxu0 0.0
  %2592 = vmatprep.subr.mxu0 0.0
  %2593 = vmatpush1.msra.mxu0 0.0
  %2594 = vmatprep.subr.mxu0 0.0
  %2595 = vmatpush1.msra.mxu0 0.0
  %2596 = vmatprep.subr.mxu0 0.0
  %2597 = vmatpush1.msra.mxu0 0.0
  %2598 = vmatprep.subr.mxu0 0.0
  %2599 = vmatpush1.msra.mxu0 0.0
  %2600 = vmatprep.subr.mxu0 0.0
  %2601 = vmatpush1.msra.mxu0 0.0
  %2602 = vmatprep.subr.mxu0 0.0
  %2603 = vmatpush1.msra.mxu0 0.0
  %2604 = vmatprep.subr.mxu0 0.0
  %2605 = vmatpush1.msra.mxu0 0.0
  %2606 = vmatprep.subr.mxu0 0.0
  %2607 = vmatpush1.msra.mxu0 0.0
  %2608 = vmatprep.subr.mxu0 0.0
  %2609 = vmatpush1.msra.mxu0 0.0
  %2610 = vmatprep.subr.mxu0 0.0
  %2611 = vmatpush1.msra.mxu0 0.0
  %2612 = vmatprep.subr.mxu0 0.0
  %2613 = vmatpush1.msra.mxu0 0.0
  %2614 = vmatprep.mubr.f32.mxu0 0.0
  %2615 = vmatmul.mubr.f32.gmra.mrb[0].mxu0 %v2545
  %v2616 = vpop.f32.mrb[0].mxu0
  %v2617 = vadd.f32 %v2543, %v2616
  %v2618 = vpop.f32.mrb[0].mxu0
  %2619 = vmatprep.mubr.f32.mxu0 0.0
  %2620 = vmatmul.mubr.f32.gmra.mrb[0].mxu0 %v2548
  %v2621 = vpop.f32.mrb[0].mxu0
  %v2622 = vadd.f32 %v2543, %v2621
  %v2623 = vpop.f32.mrb[0].mxu0
  %2624 = vdwg.mxu0
  %v2625 = vlaneseq
  %v2626 = vshrl.u32 %v2625, 7
  %v2627 = vsub.s32 0, %v2626
  %v2628 = vrot.slane %v2537, %v2627
  %2629 = vmatprep.subr.mxu0 0.0
  %2630 = vmatpush1.msra.mxu0 %v2535
  %2631 = vmatprep.subr.mxu0 0.0
  %2632 = vmatpush1.msra.mxu0 0.0
  %2633 = vmatprep.subr.mxu0 0.0
  %2634 = vmatpush1.msra.mxu0 0.0
  %2635 = vmatprep.subr.mxu0 0.0
  %2636 = vmatpush1.msra.mxu0 0.0
  %2637 = vmatprep.subr.mxu0 0.0
  %2638 = vmatpush1.msra.mxu0 0.0
  %2639 = vmatprep.subr.mxu0 0.0
  %2640 = vmatpush1.msra.mxu0 0.0
  %2641 = vmatprep.subr.mxu0 0.0
  %2642 = vmatpush1.msra.mxu0 0.0
  %2643 = vmatprep.subr.mxu0 0.0
  %2644 = vmatpush1.msra.mxu0 0.0
  %2645 = vmatprep.subr.mxu0 0.0
  %2646 = vmatpush1.msra.mxu0 0.0
  %2647 = vmatprep.subr.mxu0 0.0
  %2648 = vmatpush1.msra.mxu0 0.0
  %2649 = vmatprep.subr.mxu0 0.0
  %2650 = vmatpush1.msra.mxu0 0.0
  %2651 = vmatprep.subr.mxu0 0.0
  %2652 = vmatpush1.msra.mxu0 0.0
  %2653 = vmatprep.subr.mxu0 0.0
  %2654 = vmatpush1.msra.mxu0 0.0
  %2655 = vmatprep.subr.mxu0 0.0
  %2656 = vmatpush1.msra.mxu0 0.0
  %2657 = vmatprep.subr.mxu0 0.0
  %2658 = vmatpush1.msra.mxu0 0.0
  %2659 = vmatprep.subr.mxu0 0.0
  %2660 = vmatpush1.msra.mxu0 0.0
  %2661 = vmatprep.subr.mxu0 0.0
  %2662 = vmatpush1.msra.mxu0 0.0
  %2663 = vmatprep.subr.mxu0 0.0
  %2664 = vmatpush1.msra.mxu0 0.0
  %2665 = vmatprep.subr.mxu0 0.0
  %2666 = vmatpush1.msra.mxu0 0.0
  %2667 = vmatprep.subr.mxu0 0.0
  %2668 = vmatpush1.msra.mxu0 0.0
  %2669 = vmatprep.subr.mxu0 0.0
  %2670 = vmatpush1.msra.mxu0 0.0
  %2671 = vmatprep.subr.mxu0 0.0
  %2672 = vmatpush1.msra.mxu0 0.0
  %2673 = vmatprep.subr.mxu0 0.0
  %2674 = vmatpush1.msra.mxu0 0.0
  %2675 = vmatprep.subr.mxu0 0.0
  %2676 = vmatpush1.msra.mxu0 0.0
  %2677 = vmatprep.subr.mxu0 0.0
  %2678 = vmatpush1.msra.mxu0 0.0
  %2679 = vmatprep.subr.mxu0 0.0
  %2680 = vmatpush1.msra.mxu0 0.0
  %2681 = vmatprep.subr.mxu0 0.0
  %2682 = vmatpush1.msra.mxu0 0.0
  %2683 = vmatprep.subr.mxu0 0.0
  %2684 = vmatpush1.msra.mxu0 0.0
  %2685 = vmatprep.subr.mxu0 0.0
  %2686 = vmatpush1.msra.mxu0 0.0
  %2687 = vmatprep.subr.mxu0 0.0
  %2688 = vmatpush1.msra.mxu0 0.0
  %2689 = vmatprep.subr.mxu0 0.0
  %2690 = vmatpush1.msra.mxu0 0.0
  %2691 = vmatprep.subr.mxu0 0.0
  %2692 = vmatpush1.msra.mxu0 0.0
  %2693 = vmatprep.mubr.f32.mxu0 0.0
  %2694 = vmatmul.mubr.f32.gmra.mrb[0].mxu0 %v2545
  %v2695 = vpop.f32.mrb[0].mxu0
  %v2696 = vadd.f32 %v2628, %v2695
  %v2697 = vpop.f32.mrb[0].mxu0
  %2698 = vmatprep.mubr.f32.mxu0 0.0
  %2699 = vmatmul.mubr.f32.gmra.mrb[0].mxu0 %v2548
  %v2700 = vpop.f32.mrb[0].mxu0
  %v2701 = vadd.f32 %v2628, %v2700
  %v2702 = vpop.f32.mrb[0].mxu0
  %2703 = vdwg.mxu0
  %v2704 = vld [vmem:[%s0 + $0x1f] sm:$0xff]
  %v2705 = vld [vmem:[%s0 + $0x27] sm:$0xff]
  %v2707 = vsel %vm54, %v2704, 0
  %v2710 = vsel %vm54, %v2705, 0
  %2712 = vmatprep.subr.mxu0 0.0
  %2713 = vmatpush1.msra.mxu0 %v2532
  %2714 = vmatprep.subr.mxu0 0.0
  %2715 = vmatpush1.msra.mxu0 0.0
  %2716 = vmatprep.subr.mxu0 0.0
  %2717 = vmatpush1.msra.mxu0 0.0
  %2718 = vmatprep.subr.mxu0 0.0
  %2719 = vmatpush1.msra.mxu0 0.0
  %2720 = vmatprep.subr.mxu0 0.0
  %2721 = vmatpush1.msra.mxu0 0.0
  %2722 = vmatprep.subr.mxu0 0.0
  %2723 = vmatpush1.msra.mxu0 0.0
  %2724 = vmatprep.subr.mxu0 0.0
  %2725 = vmatpush1.msra.mxu0 0.0
  %2726 = vmatprep.subr.mxu0 0.0
  %2727 = vmatpush1.msra.mxu0 0.0
  %2728 = vmatprep.subr.mxu0 0.0
  %2729 = vmatpush1.msra.mxu0 0.0
  %2730 = vmatprep.subr.mxu0 0.0
  %2731 = vmatpush1.msra.mxu0 0.0
  %2732 = vmatprep.subr.mxu0 0.0
  %2733 = vmatpush1.msra.mxu0 0.0
  %2734 = vmatprep.subr.mxu0 0.0
  %2735 = vmatpush1.msra.mxu0 0.0
  %2736 = vmatprep.subr.mxu0 0.0
  %2737 = vmatpush1.msra.mxu0 0.0
  %2738 = vmatprep.subr.mxu0 0.0
  %2739 = vmatpush1.msra.mxu0 0.0
  %2740 = vmatprep.subr.mxu0 0.0
  %2741 = vmatpush1.msra.mxu0 0.0
  %2742 = vmatprep.subr.mxu0 0.0
  %2743 = vmatpush1.msra.mxu0 0.0
  %2744 = vmatprep.subr.mxu0 0.0
  %2745 = vmatpush1.msra.mxu0 0.0
  %2746 = vmatprep.subr.mxu0 0.0
  %2747 = vmatpush1.msra.mxu0 0.0
  %2748 = vmatprep.subr.mxu0 0.0
  %2749 = vmatpush1.msra.mxu0 0.0
  %2750 = vmatprep.subr.mxu0 0.0
  %2751 = vmatpush1.msra.mxu0 0.0
  %2752 = vmatprep.subr.mxu0 0.0
  %2753 = vmatpush1.msra.mxu0 0.0
  %2754 = vmatprep.subr.mxu0 0.0
  %2755 = vmatpush1.msra.mxu0 0.0
  %2756 = vmatprep.subr.mxu0 0.0
  %2757 = vmatpush1.msra.mxu0 0.0
  %2758 = vmatprep.subr.mxu0 0.0
  %2759 = vmatpush1.msra.mxu0 0.0
  %2760 = vmatprep.subr.mxu0 0.0
  %2761 = vmatpush1.msra.mxu0 0.0
  %2762 = vmatprep.subr.mxu0 0.0
  %2763 = vmatpush1.msra.mxu0 0.0
  %2764 = vmatprep.subr.mxu0 0.0
  %2765 = vmatpush1.msra.mxu0 0.0
  %2766 = vmatprep.subr.mxu0 0.0
  %2767 = vmatpush1.msra.mxu0 0.0
  %2768 = vmatprep.subr.mxu0 0.0
  %2769 = vmatpush1.msra.mxu0 0.0
  %2770 = vmatprep.subr.mxu0 0.0
  %2771 = vmatpush1.msra.mxu0 0.0
  %2772 = vmatprep.subr.mxu0 0.0
  %2773 = vmatpush1.msra.mxu0 0.0
  %2774 = vmatprep.subr.mxu0 0.0
  %2775 = vmatpush1.msra.mxu0 0.0
  %2776 = vmatprep.mubr.f32.mxu0 0.0
  %2777 = vmatmul.mubr.f32.gmra.mrb[0].mxu0 %v2707
  %v2778 = vpop.f32.mrb[0].mxu0
  %v2779 = vadd.f32 0.0, %v2778
  %v2780 = vpop.f32.mrb[0].mxu0
  %2781 = vmatprep.mubr.f32.mxu0 0.0
  %2782 = vmatmul.mubr.f32.gmra.mrb[0].mxu0 %v2710
  %v2783 = vpop.f32.mrb[0].mxu0
  %v2784 = vadd.f32 0.0, %v2783
  %v2785 = vpop.f32.mrb[0].mxu0
  %2786 = vdwg.mxu0
  %v2787 = vadd.f32 %v2617, %v2779
  %v2788 = vadd.f32 %v2622, %v2784
  %2789 = vmatprep.subr.mxu0 0.0
  %2790 = vmatpush1.msra.mxu0 %v2534
  %2791 = vmatprep.subr.mxu0 0.0
  %2792 = vmatpush1.msra.mxu0 0.0
  %2793 = vmatprep.subr.mxu0 0.0
  %2794 = vmatpush1.msra.mxu0 0.0
  %2795 = vmatprep.subr.mxu0 0.0
  %2796 = vmatpush1.msra.mxu0 0.0
  %2797 = vmatprep.subr.mxu0 0.0
  %2798 = vmatpush1.msra.mxu0 0.0
  %2799 = vmatprep.subr.mxu0 0.0
  %2800 = vmatpush1.msra.mxu0 0.0
  %2801 = vmatprep.subr.mxu0 0.0
  %2802 = vmatpush1.msra.mxu0 0.0
  %2803 = vmatprep.subr.mxu0 0.0
  %2804 = vmatpush1.msra.mxu0 0.0
  %2805 = vmatprep.subr.mxu0 0.0
  %2806 = vmatpush1.msra.mxu0 0.0
  %2807 = vmatprep.subr.mxu0 0.0
  %2808 = vmatpush1.msra.mxu0 0.0
  %2809 = vmatprep.subr.mxu0 0.0
  %2810 = vmatpush1.msra.mxu0 0.0
  %2811 = vmatprep.subr.mxu0 0.0
  %2812 = vmatpush1.msra.mxu0 0.0
  %2813 = vmatprep.subr.mxu0 0.0
  %2814 = vmatpush1.msra.mxu0 0.0
  %2815 = vmatprep.subr.mxu0 0.0
  %2816 = vmatpush1.msra.mxu0 0.0
  %2817 = vmatprep.subr.mxu0 0.0
  %2818 = vmatpush1.msra.mxu0 0.0
  %2819 = vmatprep.subr.mxu0 0.0
  %2820 = vmatpush1.msra.mxu0 0.0
  %2821 = vmatprep.subr.mxu0 0.0
  %2822 = vmatpush1.msra.mxu0 0.0
  %2823 = vmatprep.subr.mxu0 0.0
  %2824 = vmatpush1.msra.mxu0 0.0
  %2825 = vmatprep.subr.mxu0 0.0
  %2826 = vmatpush1.msra.mxu0 0.0
  %2827 = vmatprep.subr.mxu0 0.0
  %2828 = vmatpush1.msra.mxu0 0.0
  %2829 = vmatprep.subr.mxu0 0.0
  %2830 = vmatpush1.msra.mxu0 0.0
  %2831 = vmatprep.subr.mxu0 0.0
  %2832 = vmatpush1.msra.mxu0 0.0
  %2833 = vmatprep.subr.mxu0 0.0
  %2834 = vmatpush1.msra.mxu0 0.0
  %2835 = vmatprep.subr.mxu0 0.0
  %2836 = vmatpush1.msra.mxu0 0.0
  %2837 = vmatprep.subr.mxu0 0.0
  %2838 = vmatpush1.msra.mxu0 0.0
  %2839 = vmatprep.subr.mxu0 0.0
  %2840 = vmatpush1.msra.mxu0 0.0
  %2841 = vmatprep.subr.mxu0 0.0
  %2842 = vmatpush1.msra.mxu0 0.0
  %2843 = vmatprep.subr.mxu0 0.0
  %2844 = vmatpush1.msra.mxu0 0.0
  %2845 = vmatprep.subr.mxu0 0.0
  %2846 = vmatpush1.msra.mxu0 0.0
  %2847 = vmatprep.subr.mxu0 0.0
  %2848 = vmatpush1.msra.mxu0 0.0
  %2849 = vmatprep.subr.mxu0 0.0
  %2850 = vmatpush1.msra.mxu0 0.0
  %2851 = vmatprep.subr.mxu0 0.0
  %2852 = vmatpush1.msra.mxu0 0.0
  %2853 = vmatprep.mubr.f32.mxu0 0.0
  %2854 = vmatmul.mubr.f32.gmra.mrb[0].mxu0 %v2707
  %v2855 = vpop.f32.mrb[0].mxu0
  %v2856 = vadd.f32 0.0, %v2855
  %v2857 = vpop.f32.mrb[0].mxu0
  %2858 = vmatprep.mubr.f32.mxu0 0.0
  %2859 = vmatmul.mubr.f32.gmra.mrb[0].mxu0 %v2710
  %v2860 = vpop.f32.mrb[0].mxu0
  %v2861 = vadd.f32 0.0, %v2860
  %v2862 = vpop.f32.mrb[0].mxu0
  %2863 = vdwg.mxu0
  %v2864 = vadd.f32 %v2696, %v2856
  %v2865 = vadd.f32 %v2701, %v2861
  %v2866 = vsub.f32 0.0, %v2864
  %v2867 = vsub.f32 0.0, %v2865
  %v2868 = vmul.f32 %v2866, 1.442695
  %v2869 = vpow.pop %v2868
  %v2870 = vmul.f32 %v2867, 1.442695
  %v2871 = vpow.pop %v2870
  %v2872 = vadd.f32 %v2869, 1.0
  %v2873 = vadd.f32 %v2871, 1.0
  %v2874 = vrcp.pop %v2872
  %v2875 = vmul.f32 1.0, %v2874
  %v2876 = vrcp.pop %v2873
  %v2877 = vmul.f32 1.0, %v2876
  %v2878 = vtanh.pop %v2787
  %v2879 = vtanh.pop %v2788
  %v2880 = vmul.f32 %v2878, %v2875
  %v2881 = vmul.f32 %v2879, %v2877
  %v2882 = vadd.f32 %v2880, 0.0
  %v2883 = vadd.f32 %v2881, 0.0
  %2884 = vst.msk [vmem:[#allocation2 + $0x8] sm:$0xff] %vm34, %v2880
  %2885 = vst.msk [vmem:[#allocation2 + $0x10] sm:$0xff] %vm34, %v2881
  %v2886 = vld [vmem:[%s3] sm:$0xff]
  %v2887 = vld [vmem:[%s3 + $0x8] sm:$0xff]
  %v2888 = vld [vmem:[%s3 + $0x10] sm:$0xff]
  %v2889 = vld [vmem:[%s3 + $0x18] sm:$0xff]
  %v2890 = vld [vmem:[%s401] sm:$0xff]
  %v2891 = vld [vmem:[%s401 + $0x8] sm:$0xff]
  %v2892 = vld [vmem:[%s401 + $0x10] sm:$0xff]
  %v2893 = vld [vmem:[%s401 + $0x18] sm:$0xff]
  %v2894 = vld [vmem:[%s4] sm:$0xff]
  %v2895 = vld [vmem:[%s4 + $0x8] sm:$0xff]
  %v2896 = vld [vmem:[%s4 + $0x10] sm:$0xff]
  %v2897 = vld [vmem:[%s4 + $0x18] sm:$0xff]
  %v2898 = vld [vmem:[%s410] sm:$0xff]
  %v2899 = vld [vmem:[%s410 + $0x8] sm:$0xff]
  %v2900 = vld [vmem:[%s410 + $0x10] sm:$0xff]
  %v2901 = vld [vmem:[%s410 + $0x18] sm:$0xff]
  %v2902 = vld [vmem:[%s5 + $0x1] sm:$0x1]
  %v2903 = vld [vmem:[%s6 + $0x1] sm:$0x1]
  %v2904 = vld [vmem:[#allocation2 + $0x8] sm:$0xff]
  %v2905 = vld [vmem:[#allocation2 + $0x10] sm:$0xff]
  %v2906 = vlaneseq
  %v2907 = vshrl.u32 %v2906, 7
  %v2908 = vsub.s32 0, %v2907
  %v2909 = vrot.slane %v2902, %v2908
  %v2911 = vsel %vm34, %v2904, 0
  %v2914 = vsel %vm34, %v2905, 0
  %2916 = vmatprep.subr.mxu0 0.0
  %2917 = vmatpush1.msra.mxu0 %v2890
  %2918 = vmatprep.subr.mxu0 0.0
  %2919 = vmatpush1.msra.mxu0 %v2891
  %2920 = vmatprep.subr.mxu0 0.0
  %2921 = vmatpush1.msra.mxu0 %v2892
  %2922 = vmatprep.subr.mxu0 0.0
  %2923 = vmatpush1.msra.mxu0 %v2893
  %2924 = vmatprep.subr.mxu0 0.0
  %2925 = vmatpush1.msra.mxu0 0.0
  %2926 = vmatprep.subr.mxu0 0.0
  %2927 = vmatpush1.msra.mxu0 0.0
  %2928 = vmatprep.subr.mxu0 0.0
  %2929 = vmatpush1.msra.mxu0 0.0
  %2930 = vmatprep.subr.mxu0 0.0
  %2931 = vmatpush1.msra.mxu0 0.0
  %2932 = vmatprep.subr.mxu0 0.0
  %2933 = vmatpush1.msra.mxu0 0.0
  %2934 = vmatprep.subr.mxu0 0.0
  %2935 = vmatpush1.msra.mxu0 0.0
  %2936 = vmatprep.subr.mxu0 0.0
  %2937 = vmatpush1.msra.mxu0 0.0
  %2938 = vmatprep.subr.mxu0 0.0
  %2939 = vmatpush1.msra.mxu0 0.0
  %2940 = vmatprep.subr.mxu0 0.0
  %2941 = vmatpush1.msra.mxu0 0.0
  %2942 = vmatprep.subr.mxu0 0.0
  %2943 = vmatpush1.msra.mxu0 0.0
  %2944 = vmatprep.subr.mxu0 0.0
  %2945 = vmatpush1.msra.mxu0 0.0
  %2946 = vmatprep.subr.mxu0 0.0
  %2947 = vmatpush1.msra.mxu0 0.0
  %2948 = vmatprep.subr.mxu0 0.0
  %2949 = vmatpush1.msra.mxu0 0.0
  %2950 = vmatprep.subr.mxu0 0.0
  %2951 = vmatpush1.msra.mxu0 0.0
  %2952 = vmatprep.subr.mxu0 0.0
  %2953 = vmatpush1.msra.mxu0 0.0
  %2954 = vmatprep.subr.mxu0 0.0
  %2955 = vmatpush1.msra.mxu0 0.0
  %2956 = vmatprep.subr.mxu0 0.0
  %2957 = vmatpush1.msra.mxu0 0.0
  %2958 = vmatprep.subr.mxu0 0.0
  %2959 = vmatpush1.msra.mxu0 0.0
  %2960 = vmatprep.subr.mxu0 0.0
  %2961 = vmatpush1.msra.mxu0 0.0
  %2962 = vmatprep.subr.mxu0 0.0
  %2963 = vmatpush1.msra.mxu0 0.0
  %2964 = vmatprep.subr.mxu0 0.0
  %2965 = vmatpush1.msra.mxu0 0.0
  %2966 = vmatprep.subr.mxu0 0.0
  %2967 = vmatpush1.msra.mxu0 0.0
  %2968 = vmatprep.subr.mxu0 0.0
  %2969 = vmatpush1.msra.mxu0 0.0
  %2970 = vmatprep.subr.mxu0 0.0
  %2971 = vmatpush1.msra.mxu0 0.0
  %2972 = vmatprep.subr.mxu0 0.0
  %2973 = vmatpush1.msra.mxu0 0.0
  %2974 = vmatprep.subr.mxu0 0.0
  %2975 = vmatpush1.msra.mxu0 0.0
  %2976 = vmatprep.subr.mxu0 0.0
  %2977 = vmatpush1.msra.mxu0 0.0
  %2978 = vmatprep.subr.mxu0 0.0
  %2979 = vmatpush1.msra.mxu0 0.0
  %2980 = vmatprep.mubr.f32.mxu0 0.0
  %2981 = vmatmul.mubr.f32.gmra.mrb[0].mxu0 %v2911
  %v2982 = vpop.f32.mrb[0].mxu0
  %v2983 = vadd.f32 %v2909, %v2982
  %v2984 = vpop.f32.mrb[0].mxu0
  %2985 = vmatprep.mubr.f32.mxu0 0.0
  %2986 = vmatmul.mubr.f32.gmra.mrb[0].mxu0 %v2914
  %v2987 = vpop.f32.mrb[0].mxu0
  %v2988 = vadd.f32 %v2909, %v2987
  %v2989 = vpop.f32.mrb[0].mxu0
  %2990 = vdwg.mxu0
  %v2991 = vlaneseq
  %v2992 = vshrl.u32 %v2991, 7
  %v2993 = vsub.s32 0, %v2992
  %v2994 = vrot.slane %v2903, %v2993
  %2995 = vmatprep.subr.mxu0 0.0
  %2996 = vmatpush1.msra.mxu0 %v2898
  %2997 = vmatprep.subr.mxu0 0.0
  %2998 = vmatpush1.msra.mxu0 %v2899
  %2999 = vmatprep.subr.mxu0 0.0
  %3000 = vmatpush1.msra.mxu0 %v2900
  %3001 = vmatprep.subr.mxu0 0.0
  %3002 = vmatpush1.msra.mxu0 %v2901
  %3003 = vmatprep.subr.mxu0 0.0
  %3004 = vmatpush1.msra.mxu0 0.0
  %3005 = vmatprep.subr.mxu0 0.0
  %3006 = vmatpush1.msra.mxu0 0.0
  %3007 = vmatprep.subr.mxu0 0.0
  %3008 = vmatpush1.msra.mxu0 0.0
  %3009 = vmatprep.subr.mxu0 0.0
  %3010 = vmatpush1.msra.mxu0 0.0
  %3011 = vmatprep.subr.mxu0 0.0
  %3012 = vmatpush1.msra.mxu0 0.0
  %3013 = vmatprep.subr.mxu0 0.0
  %3014 = vmatpush1.msra.mxu0 0.0
  %3015 = vmatprep.subr.mxu0 0.0
  %3016 = vmatpush1.msra.mxu0 0.0
  %3017 = vmatprep.subr.mxu0 0.0
  %3018 = vmatpush1.msra.mxu0 0.0
  %3019 = vmatprep.subr.mxu0 0.0
  %3020 = vmatpush1.msra.mxu0 0.0
  %3021 = vmatprep.subr.mxu0 0.0
  %3022 = vmatpush1.msra.mxu0 0.0
  %3023 = vmatprep.subr.mxu0 0.0
  %3024 = vmatpush1.msra.mxu0 0.0
  %3025 = vmatprep.subr.mxu0 0.0
  %3026 = vmatpush1.msra.mxu0 0.0
  %3027 = vmatprep.subr.mxu0 0.0
  %3028 = vmatpush1.msra.mxu0 0.0
  %3029 = vmatprep.subr.mxu0 0.0
  %3030 = vmatpush1.msra.mxu0 0.0
  %3031 = vmatprep.subr.mxu0 0.0
  %3032 = vmatpush1.msra.mxu0 0.0
  %3033 = vmatprep.subr.mxu0 0.0
  %3034 = vmatpush1.msra.mxu0 0.0
  %3035 = vmatprep.subr.mxu0 0.0
  %3036 = vmatpush1.msra.mxu0 0.0
  %3037 = vmatprep.subr.mxu0 0.0
  %3038 = vmatpush1.msra.mxu0 0.0
  %3039 = vmatprep.subr.mxu0 0.0
  %3040 = vmatpush1.msra.mxu0 0.0
  %3041 = vmatprep.subr.mxu0 0.0
  %3042 = vmatpush1.msra.mxu0 0.0
  %3043 = vmatprep.subr.mxu0 0.0
  %3044 = vmatpush1.msra.mxu0 0.0
  %3045 = vmatprep.subr.mxu0 0.0
  %3046 = vmatpush1.msra.mxu0 0.0
  %3047 = vmatprep.subr.mxu0 0.0
  %3048 = vmatpush1.msra.mxu0 0.0
  %3049 = vmatprep.subr.mxu0 0.0
  %3050 = vmatpush1.msra.mxu0 0.0
  %3051 = vmatprep.subr.mxu0 0.0
  %3052 = vmatpush1.msra.mxu0 0.0
  %3053 = vmatprep.subr.mxu0 0.0
  %3054 = vmatpush1.msra.mxu0 0.0
  %3055 = vmatprep.subr.mxu0 0.0
  %3056 = vmatpush1.msra.mxu0 0.0
  %3057 = vmatprep.subr.mxu0 0.0
  %3058 = vmatpush1.msra.mxu0 0.0
  %3059 = vmatprep.mubr.f32.mxu0 0.0
  %3060 = vmatmul.mubr.f32.gmra.mrb[0].mxu0 %v2911
  %v3061 = vpop.f32.mrb[0].mxu0
  %v3062 = vadd.f32 %v2994, %v3061
  %v3063 = vpop.f32.mrb[0].mxu0
  %3064 = vmatprep.mubr.f32.mxu0 0.0
  %3065 = vmatmul.mubr.f32.gmra.mrb[0].mxu0 %v2914
  %v3066 = vpop.f32.mrb[0].mxu0
  %v3067 = vadd.f32 %v2994, %v3066
  %v3068 = vpop.f32.mrb[0].mxu0
  %3069 = vdwg.mxu0
  %v3070 = vld [vmem:[#allocation2 + $0x6] sm:$0xff]
  %v3071 = vld [vmem:[#allocation2 + $0xe] sm:$0xff]
  %v3073 = vsel %vm34, %v3070, 0
  %v3076 = vsel %vm34, %v3071, 0
  %3078 = vmatprep.subr.mxu0 0.0
  %3079 = vmatpush1.msra.mxu0 %v2886
  %3080 = vmatprep.subr.mxu0 0.0
  %3081 = vmatpush1.msra.mxu0 %v2887
  %3082 = vmatprep.subr.mxu0 0.0
  %3083 = vmatpush1.msra.mxu0 %v2888
  %3084 = vmatprep.subr.mxu0 0.0
  %3085 = vmatpush1.msra.mxu0 %v2889
  %3086 = vmatprep.subr.mxu0 0.0
  %3087 = vmatpush1.msra.mxu0 0.0
  %3088 = vmatprep.subr.mxu0 0.0
  %3089 = vmatpush1.msra.mxu0 0.0
  %3090 = vmatprep.subr.mxu0 0.0
  %3091 = vmatpush1.msra.mxu0 0.0
  %3092 = vmatprep.subr.mxu0 0.0
  %3093 = vmatpush1.msra.mxu0 0.0
  %3094 = vmatprep.subr.mxu0 0.0
  %3095 = vmatpush1.msra.mxu0 0.0
  %3096 = vmatprep.subr.mxu0 0.0
  %3097 = vmatpush1.msra.mxu0 0.0
  %3098 = vmatprep.subr.mxu0 0.0
  %3099 = vmatpush1.msra.mxu0 0.0
  %3100 = vmatprep.subr.mxu0 0.0
  %3101 = vmatpush1.msra.mxu0 0.0
  %3102 = vmatprep.subr.mxu0 0.0
  %3103 = vmatpush1.msra.mxu0 0.0
  %3104 = vmatprep.subr.mxu0 0.0
  %3105 = vmatpush1.msra.mxu0 0.0
  %3106 = vmatprep.subr.mxu0 0.0
  %3107 = vmatpush1.msra.mxu0 0.0
  %3108 = vmatprep.subr.mxu0 0.0
  %3109 = vmatpush1.msra.mxu0 0.0
  %3110 = vmatprep.subr.mxu0 0.0
  %3111 = vmatpush1.msra.mxu0 0.0
  %3112 = vmatprep.subr.mxu0 0.0
  %3113 = vmatpush1.msra.mxu0 0.0
  %3114 = vmatprep.subr.mxu0 0.0
  %3115 = vmatpush1.msra.mxu0 0.0
  %3116 = vmatprep.subr.mxu0 0.0
  %3117 = vmatpush1.msra.mxu0 0.0
  %3118 = vmatprep.subr.mxu0 0.0
  %3119 = vmatpush1.msra.mxu0 0.0
  %3120 = vmatprep.subr.mxu0 0.0
  %3121 = vmatpush1.msra.mxu0 0.0
  %3122 = vmatprep.subr.mxu0 0.0
  %3123 = vmatpush1.msra.mxu0 0.0
  %3124 = vmatprep.subr.mxu0 0.0
  %3125 = vmatpush1.msra.mxu0 0.0
  %3126 = vmatprep.subr.mxu0 0.0
  %3127 = vmatpush1.msra.mxu0 0.0
  %3128 = vmatprep.subr.mxu0 0.0
  %3129 = vmatpush1.msra.mxu0 0.0
  %3130 = vmatprep.subr.mxu0 0.0
  %3131 = vmatpush1.msra.mxu0 0.0
  %3132 = vmatprep.subr.mxu0 0.0
  %3133 = vmatpush1.msra.mxu0 0.0
  %3134 = vmatprep.subr.mxu0 0.0
  %3135 = vmatpush1.msra.mxu0 0.0
  %3136 = vmatprep.subr.mxu0 0.0
  %3137 = vmatpush1.msra.mxu0 0.0
  %3138 = vmatprep.subr.mxu0 0.0
  %3139 = vmatpush1.msra.mxu0 0.0
  %3140 = vmatprep.subr.mxu0 0.0
  %3141 = vmatpush1.msra.mxu0 0.0
  %3142 = vmatprep.mubr.f32.mxu0 0.0
  %3143 = vmatmul.mubr.f32.gmra.mrb[0].mxu0 %v3073
  %v3144 = vpop.f32.mrb[0].mxu0
  %v3145 = vadd.f32 0.0, %v3144
  %v3146 = vpop.f32.mrb[0].mxu0
  %3147 = vmatprep.mubr.f32.mxu0 0.0
  %3148 = vmatmul.mubr.f32.gmra.mrb[0].mxu0 %v3076
  %v3149 = vpop.f32.mrb[0].mxu0
  %v3150 = vadd.f32 0.0, %v3149
  %v3151 = vpop.f32.mrb[0].mxu0
  %3152 = vdwg.mxu0
  %v3153 = vadd.f32 %v2983, %v3145
  %v3154 = vadd.f32 %v2988, %v3150
  %3155 = vmatprep.subr.mxu0 0.0
  %3156 = vmatpush1.msra.mxu0 %v2894
  %3157 = vmatprep.subr.mxu0 0.0
  %3158 = vmatpush1.msra.mxu0 %v2895
  %3159 = vmatprep.subr.mxu0 0.0
  %3160 = vmatpush1.msra.mxu0 %v2896
  %3161 = vmatprep.subr.mxu0 0.0
  %3162 = vmatpush1.msra.mxu0 %v2897
  %3163 = vmatprep.subr.mxu0 0.0
  %3164 = vmatpush1.msra.mxu0 0.0
  %3165 = vmatprep.subr.mxu0 0.0
  %3166 = vmatpush1.msra.mxu0 0.0
  %3167 = vmatprep.subr.mxu0 0.0
  %3168 = vmatpush1.msra.mxu0 0.0
  %3169 = vmatprep.subr.mxu0 0.0
  %3170 = vmatpush1.msra.mxu0 0.0
  %3171 = vmatprep.subr.mxu0 0.0
  %3172 = vmatpush1.msra.mxu0 0.0
  %3173 = vmatprep.subr.mxu0 0.0
  %3174 = vmatpush1.msra.mxu0 0.0
  %3175 = vmatprep.subr.mxu0 0.0
  %3176 = vmatpush1.msra.mxu0 0.0
  %3177 = vmatprep.subr.mxu0 0.0
  %3178 = vmatpush1.msra.mxu0 0.0
  %3179 = vmatprep.subr.mxu0 0.0
  %3180 = vmatpush1.msra.mxu0 0.0
  %3181 = vmatprep.subr.mxu0 0.0
  %3182 = vmatpush1.msra.mxu0 0.0
  %3183 = vmatprep.subr.mxu0 0.0
  %3184 = vmatpush1.msra.mxu0 0.0
  %3185 = vmatprep.subr.mxu0 0.0
  %3186 = vmatpush1.msra.mxu0 0.0
  %3187 = vmatprep.subr.mxu0 0.0
  %3188 = vmatpush1.msra.mxu0 0.0
  %3189 = vmatprep.subr.mxu0 0.0
  %3190 = vmatpush1.msra.mxu0 0.0
  %3191 = vmatprep.subr.mxu0 0.0
  %3192 = vmatpush1.msra.mxu0 0.0
  %3193 = vmatprep.subr.mxu0 0.0
  %3194 = vmatpush1.msra.mxu0 0.0
  %3195 = vmatprep.subr.mxu0 0.0
  %3196 = vmatpush1.msra.mxu0 0.0
  %3197 = vmatprep.subr.mxu0 0.0
  %3198 = vmatpush1.msra.mxu0 0.0
  %3199 = vmatprep.subr.mxu0 0.0
  %3200 = vmatpush1.msra.mxu0 0.0
  %3201 = vmatprep.subr.mxu0 0.0
  %3202 = vmatpush1.msra.mxu0 0.0
  %3203 = vmatprep.subr.mxu0 0.0
  %3204 = vmatpush1.msra.mxu0 0.0
  %3205 = vmatprep.subr.mxu0 0.0
  %3206 = vmatpush1.msra.mxu0 0.0
  %3207 = vmatprep.subr.mxu0 0.0
  %3208 = vmatpush1.msra.mxu0 0.0
  %3209 = vmatprep.subr.mxu0 0.0
  %3210 = vmatpush1.msra.mxu0 0.0
  %3211 = vmatprep.subr.mxu0 0.0
  %3212 = vmatpush1.msra.mxu0 0.0
  %3213 = vmatprep.subr.mxu0 0.0
  %3214 = vmatpush1.msra.mxu0 0.0
  %3215 = vmatprep.subr.mxu0 0.0
  %3216 = vmatpush1.msra.mxu0 0.0
  %3217 = vmatprep.subr.mxu0 0.0
  %3218 = vmatpush1.msra.mxu0 0.0
  %3219 = vmatprep.mubr.f32.mxu0 0.0
  %3220 = vmatmul.mubr.f32.gmra.mrb[0].mxu0 %v3073
  %v3221 = vpop.f32.mrb[0].mxu0
  %v3222 = vadd.f32 0.0, %v3221
  %v3223 = vpop.f32.mrb[0].mxu0
  %3224 = vmatprep.mubr.f32.mxu0 0.0
  %3225 = vmatmul.mubr.f32.gmra.mrb[0].mxu0 %v3076
  %v3226 = vpop.f32.mrb[0].mxu0
  %v3227 = vadd.f32 0.0, %v3226
  %v3228 = vpop.f32.mrb[0].mxu0
  %3229 = vdwg.mxu0
  %v3230 = vadd.f32 %v3062, %v3222
  %v3231 = vadd.f32 %v3067, %v3227
  %v3232 = vsub.f32 0.0, %v3230
  %v3233 = vsub.f32 0.0, %v3231
  %v3234 = vmul.f32 %v3232, 1.442695
  %v3235 = vpow.pop %v3234
  %v3236 = vmul.f32 %v3233, 1.442695
  %v3237 = vpow.pop %v3236
  %v3238 = vadd.f32 %v3235, 1.0
  %v3239 = vadd.f32 %v3237, 1.0
  %v3240 = vrcp.pop %v3238
  %v3241 = vmul.f32 1.0, %v3240
  %v3242 = vrcp.pop %v3239
  %v3243 = vmul.f32 1.0, %v3242
  %v3244 = vtanh.pop %v3153
  %v3245 = vtanh.pop %v3154
  %v3246 = vmul.f32 %v3244, %v3241
  %v3247 = vmul.f32 %v3245, %v3243
  %v3248 = vadd.f32 %v2882, %v3246
  %v3249 = vadd.f32 %v2883, %v3247
  %v3250 = vadd.f32 %v3246, %v2904
  %v3251 = vadd.f32 %v3247, %v2905
  %3252 = vst.msk [vmem:[#allocation2 + $0x8] sm:$0xff] %vm34, %v3250
  %3253 = vst.msk [vmem:[#allocation2 + $0x10] sm:$0xff] %vm34, %v3251
  %v3254 = vld [vmem:[%s767] sm:$0xff]
  %v3255 = vld [vmem:[%s767 + $0x8] sm:$0xff]
  %v3256 = vld [vmem:[%s767 + $0x10] sm:$0xff]
  %v3257 = vld [vmem:[%s767 + $0x18] sm:$0xff]
  %v3258 = vld [vmem:[%s772] sm:$0xff]
  %v3259 = vld [vmem:[%s772 + $0x8] sm:$0xff]
  %v3260 = vld [vmem:[%s772 + $0x10] sm:$0xff]
  %v3261 = vld [vmem:[%s772 + $0x18] sm:$0xff]
  %v3262 = vld [vmem:[%s777] sm:$0xff]
  %v3263 = vld [vmem:[%s777 + $0x8] sm:$0xff]
  %v3264 = vld [vmem:[%s777 + $0x10] sm:$0xff]
  %v3265 = vld [vmem:[%s777 + $0x18] sm:$0xff]
  %v3266 = vld [vmem:[%s782] sm:$0xff]
  %v3267 = vld [vmem:[%s782 + $0x8] sm:$0xff]
  %v3268 = vld [vmem:[%s782 + $0x10] sm:$0xff]
  %v3269 = vld [vmem:[%s782 + $0x18] sm:$0xff]
  %v3270 = vld [vmem:[%s5 + $0x2] sm:$0x1]
  %v3271 = vld [vmem:[%s6 + $0x2] sm:$0x1]
  %v3272 = vld [vmem:[#allocation2 + $0x8] sm:$0xff]
  %v3273 = vld [vmem:[#allocation2 + $0x10] sm:$0xff]
  %v3274 = vlaneseq
  %v3275 = vshrl.u32 %v3274, 7
  %v3276 = vsub.s32 0, %v3275
  %v3277 = vrot.slane %v3270, %v3276
  %v3279 = vsel %vm34, %v3272, 0
  %v3282 = vsel %vm34, %v3273, 0
  %3284 = vmatprep.subr.mxu0 0.0
  %3285 = vmatpush1.msra.mxu0 %v3258
  %3286 = vmatprep.subr.mxu0 0.0
  %3287 = vmatpush1.msra.mxu0 %v3259
  %3288 = vmatprep.subr.mxu0 0.0
  %3289 = vmatpush1.msra.mxu0 %v3260
  %3290 = vmatprep.subr.mxu0 0.0
  %3291 = vmatpush1.msra.mxu0 %v3261
  %3292 = vmatprep.subr.mxu0 0.0
  %3293 = vmatpush1.msra.mxu0 0.0
  %3294 = vmatprep.subr.mxu0 0.0
  %3295 = vmatpush1.msra.mxu0 0.0
  %3296 = vmatprep.subr.mxu0 0.0
  %3297 = vmatpush1.msra.mxu0 0.0
  %3298 = vmatprep.subr.mxu0 0.0
  %3299 = vmatpush1.msra.mxu0 0.0
  %3300 = vmatprep.subr.mxu0 0.0
  %3301 = vmatpush1.msra.mxu0 0.0
  %3302 = vmatprep.subr.mxu0 0.0
  %3303 = vmatpush1.msra.mxu0 0.0
  %3304 = vmatprep.subr.mxu0 0.0
  %3305 = vmatpush1.msra.mxu0 0.0
  %3306 = vmatprep.subr.mxu0 0.0
  %3307 = vmatpush1.msra.mxu0 0.0
  %3308 = vmatprep.subr.mxu0 0.0
  %3309 = vmatpush1.msra.mxu0 0.0
  %3310 = vmatprep.subr.mxu0 0.0
  %3311 = vmatpush1.msra.mxu0 0.0
  %3312 = vmatprep.subr.mxu0 0.0
  %3313 = vmatpush1.msra.mxu0 0.0
  %3314 = vmatprep.subr.mxu0 0.0
  %3315 = vmatpush1.msra.mxu0 0.0
  %3316 = vmatprep.subr.mxu0 0.0
  %3317 = vmatpush1.msra.mxu0 0.0
  %3318 = vmatprep.subr.mxu0 0.0
  %3319 = vmatpush1.msra.mxu0 0.0
  %3320 = vmatprep.subr.mxu0 0.0
  %3321 = vmatpush1.msra.mxu0 0.0
  %3322 = vmatprep.subr.mxu0 0.0
  %3323 = vmatpush1.msra.mxu0 0.0
  %3324 = vmatprep.subr.mxu0 0.0
  %3325 = vmatpush1.msra.mxu0 0.0
  %3326 = vmatprep.subr.mxu0 0.0
  %3327 = vmatpush1.msra.mxu0 0.0
  %3328 = vmatprep.subr.mxu0 0.0
  %3329 = vmatpush1.msra.mxu0 0.0
  %3330 = vmatprep.subr.mxu0 0.0
  %3331 = vmatpush1.msra.mxu0 0.0
  %3332 = vmatprep.subr.mxu0 0.0
  %3333 = vmatpush1.msra.mxu0 0.0
  %3334 = vmatprep.subr.mxu0 0.0
  %3335 = vmatpush1.msra.mxu0 0.0
  %3336 = vmatprep.subr.mxu0 0.0
  %3337 = vmatpush1.msra.mxu0 0.0
  %3338 = vmatprep.subr.mxu0 0.0
  %3339 = vmatpush1.msra.mxu0 0.0
  %3340 = vmatprep.subr.mxu0 0.0
  %3341 = vmatpush1.msra.mxu0 0.0
  %3342 = vmatprep.subr.mxu0 0.0
  %3343 = vmatpush1.msra.mxu0 0.0
  %3344 = vmatprep.subr.mxu0 0.0
  %3345 = vmatpush1.msra.mxu0 0.0
  %3346 = vmatprep.subr.mxu0 0.0
  %3347 = vmatpush1.msra.mxu0 0.0
  %3348 = vmatprep.mubr.f32.mxu0 0.0
  %3349 = vmatmul.mubr.f32.gmra.mrb[0].mxu0 %v3279
  %v3350 = vpop.f32.mrb[0].mxu0
  %v3351 = vadd.f32 %v3277, %v3350
  %v3352 = vpop.f32.mrb[0].mxu0
  %3353 = vmatprep.mubr.f32.mxu0 0.0
  %3354 = vmatmul.mubr.f32.gmra.mrb[0].mxu0 %v3282
  %v3355 = vpop.f32.mrb[0].mxu0
  %v3356 = vadd.f32 %v3277, %v3355
  %v3357 = vpop.f32.mrb[0].mxu0
  %3358 = vdwg.mxu0
  %v3359 = vlaneseq
  %v3360 = vshrl.u32 %v3359, 7
  %v3361 = vsub.s32 0, %v3360
  %v3362 = vrot.slane %v3271, %v3361
  %3363 = vmatprep.subr.mxu0 0.0
  %3364 = vmatpush1.msra.mxu0 %v3266
  %3365 = vmatprep.subr.mxu0 0.0
  %3366 = vmatpush1.msra.mxu0 %v3267
  %3367 = vmatprep.subr.mxu0 0.0
  %3368 = vmatpush1.msra.mxu0 %v3268
  %3369 = vmatprep.subr.mxu0 0.0
  %3370 = vmatpush1.msra.mxu0 %v3269
  %3371 = vmatprep.subr.mxu0 0.0
  %3372 = vmatpush1.msra.mxu0 0.0
  %3373 = vmatprep.subr.mxu0 0.0
  %3374 = vmatpush1.msra.mxu0 0.0
  %3375 = vmatprep.subr.mxu0 0.0
  %3376 = vmatpush1.msra.mxu0 0.0
  %3377 = vmatprep.subr.mxu0 0.0
  %3378 = vmatpush1.msra.mxu0 0.0
  %3379 = vmatprep.subr.mxu0 0.0
  %3380 = vmatpush1.msra.mxu0 0.0
  %3381 = vmatprep.subr.mxu0 0.0
  %3382 = vmatpush1.msra.mxu0 0.0
  %3383 = vmatprep.subr.mxu0 0.0
  %3384 = vmatpush1.msra.mxu0 0.0
  %3385 = vmatprep.subr.mxu0 0.0
  %3386 = vmatpush1.msra.mxu0 0.0
  %3387 = vmatprep.subr.mxu0 0.0
  %3388 = vmatpush1.msra.mxu0 0.0
  %3389 = vmatprep.subr.mxu0 0.0
  %3390 = vmatpush1.msra.mxu0 0.0
  %3391 = vmatprep.subr.mxu0 0.0
  %3392 = vmatpush1.msra.mxu0 0.0
  %3393 = vmatprep.subr.mxu0 0.0
  %3394 = vmatpush1.msra.mxu0 0.0
  %3395 = vmatprep.subr.mxu0 0.0
  %3396 = vmatpush1.msra.mxu0 0.0
  %3397 = vmatprep.subr.mxu0 0.0
  %3398 = vmatpush1.msra.mxu0 0.0
  %3399 = vmatprep.subr.mxu0 0.0
  %3400 = vmatpush1.msra.mxu0 0.0
  %3401 = vmatprep.subr.mxu0 0.0
  %3402 = vmatpush1.msra.mxu0 0.0
  %3403 = vmatprep.subr.mxu0 0.0
  %3404 = vmatpush1.msra.mxu0 0.0
  %3405 = vmatprep.subr.mxu0 0.0
  %3406 = vmatpush1.msra.mxu0 0.0
  %3407 = vmatprep.subr.mxu0 0.0
  %3408 = vmatpush1.msra.mxu0 0.0
  %3409 = vmatprep.subr.mxu0 0.0
  %3410 = vmatpush1.msra.mxu0 0.0
  %3411 = vmatprep.subr.mxu0 0.0
  %3412 = vmatpush1.msra.mxu0 0.0
  %3413 = vmatprep.subr.mxu0 0.0
  %3414 = vmatpush1.msra.mxu0 0.0
  %3415 = vmatprep.subr.mxu0 0.0
  %3416 = vmatpush1.msra.mxu0 0.0
  %3417 = vmatprep.subr.mxu0 0.0
  %3418 = vmatpush1.msra.mxu0 0.0
  %3419 = vmatprep.subr.mxu0 0.0
  %3420 = vmatpush1.msra.mxu0 0.0
  %3421 = vmatprep.subr.mxu0 0.0
  %3422 = vmatpush1.msra.mxu0 0.0
  %3423 = vmatprep.subr.mxu0 0.0
  %3424 = vmatpush1.msra.mxu0 0.0
  %3425 = vmatprep.subr.mxu0 0.0
  %3426 = vmatpush1.msra.mxu0 0.0
  %3427 = vmatprep.mubr.f32.mxu0 0.0
  %3428 = vmatmul.mubr.f32.gmra.mrb[0].mxu0 %v3279
  %v3429 = vpop.f32.mrb[0].mxu0
  %v3430 = vadd.f32 %v3362, %v3429
  %v3431 = vpop.f32.mrb[0].mxu0
  %3432 = vmatprep.mubr.f32.mxu0 0.0
  %3433 = vmatmul.mubr.f32.gmra.mrb[0].mxu0 %v3282
  %v3434 = vpop.f32.mrb[0].mxu0
  %v3435 = vadd.f32 %v3362, %v3434
  %v3436 = vpop.f32.mrb[0].mxu0
  %3437 = vdwg.mxu0
  %v3438 = vld [vmem:[#allocation2 + $0x4] sm:$0xff]
  %v3439 = vld [vmem:[#allocation2 + $0xc] sm:$0xff]
  %v3441 = vsel %vm34, %v3438, 0
  %v3444 = vsel %vm34, %v3439, 0
  %3446 = vmatprep.subr.mxu0 0.0
  %3447 = vmatpush1.msra.mxu0 %v3254
  %3448 = vmatprep.subr.mxu0 0.0
  %3449 = vmatpush1.msra.mxu0 %v3255
  %3450 = vmatprep.subr.mxu0 0.0
  %3451 = vmatpush1.msra.mxu0 %v3256
  %3452 = vmatprep.subr.mxu0 0.0
  %3453 = vmatpush1.msra.mxu0 %v3257
  %3454 = vmatprep.subr.mxu0 0.0
  %3455 = vmatpush1.msra.mxu0 0.0
  %3456 = vmatprep.subr.mxu0 0.0
  %3457 = vmatpush1.msra.mxu0 0.0
  %3458 = vmatprep.subr.mxu0 0.0
  %3459 = vmatpush1.msra.mxu0 0.0
  %3460 = vmatprep.subr.mxu0 0.0
  %3461 = vmatpush1.msra.mxu0 0.0
  %3462 = vmatprep.subr.mxu0 0.0
  %3463 = vmatpush1.msra.mxu0 0.0
  %3464 = vmatprep.subr.mxu0 0.0
  %3465 = vmatpush1.msra.mxu0 0.0
  %3466 = vmatprep.subr.mxu0 0.0
  %3467 = vmatpush1.msra.mxu0 0.0
  %3468 = vmatprep.subr.mxu0 0.0
  %3469 = vmatpush1.msra.mxu0 0.0
  %3470 = vmatprep.subr.mxu0 0.0
  %3471 = vmatpush1.msra.mxu0 0.0
  %3472 = vmatprep.subr.mxu0 0.0
  %3473 = vmatpush1.msra.mxu0 0.0
  %3474 = vmatprep.subr.mxu0 0.0
  %3475 = vmatpush1.msra.mxu0 0.0
  %3476 = vmatprep.subr.mxu0 0.0
  %3477 = vmatpush1.msra.mxu0 0.0
  %3478 = vmatprep.subr.mxu0 0.0
  %3479 = vmatpush1.msra.mxu0 0.0
  %3480 = vmatprep.subr.mxu0 0.0
  %3481 = vmatpush1.msra.mxu0 0.0
  %3482 = vmatprep.subr.mxu0 0.0
  %3483 = vmatpush1.msra.mxu0 0.0
  %3484 = vmatprep.subr.mxu0 0.0
  %3485 = vmatpush1.msra.mxu0 0.0
  %3486 = vmatprep.subr.mxu0 0.0
  %3487 = vmatpush1.msra.mxu0 0.0
  %3488 = vmatprep.subr.mxu0 0.0
  %3489 = vmatpush1.msra.mxu0 0.0
  %3490 = vmatprep.subr.mxu0 0.0
  %3491 = vmatpush1.msra.mxu0 0.0
  %3492 = vmatprep.subr.mxu0 0.0
  %3493 = vmatpush1.msra.mxu0 0.0
  %3494 = vmatprep.subr.mxu0 0.0
  %3495 = vmatpush1.msra.mxu0 0.0
  %3496 = vmatprep.subr.mxu0 0.0
  %3497 = vmatpush1.msra.mxu0 0.0
  %3498 = vmatprep.subr.mxu0 0.0
  %3499 = vmatpush1.msra.mxu0 0.0
  %3500 = vmatprep.subr.mxu0 0.0
  %3501 = vmatpush1.msra.mxu0 0.0
  %3502 = vmatprep.subr.mxu0 0.0
  %3503 = vmatpush1.msra.mxu0 0.0
  %3504 = vmatprep.subr.mxu0 0.0
  %3505 = vmatpush1.msra.mxu0 0.0
  %3506 = vmatprep.subr.mxu0 0.0
  %3507 = vmatpush1.msra.mxu0 0.0
  %3508 = vmatprep.subr.mxu0 0.0
  %3509 = vmatpush1.msra.mxu0 0.0
  %3510 = vmatprep.mubr.f32.mxu0 0.0
  %3511 = vmatmul.mubr.f32.gmra.mrb[0].mxu0 %v3441
  %v3512 = vpop.f32.mrb[0].mxu0
  %v3513 = vadd.f32 0.0, %v3512
  %v3514 = vpop.f32.mrb[0].mxu0
  %3515 = vmatprep.mubr.f32.mxu0 0.0
  %3516 = vmatmul.mubr.f32.gmra.mrb[0].mxu0 %v3444
  %v3517 = vpop.f32.mrb[0].mxu0
  %v3518 = vadd.f32 0.0, %v3517
  %v3519 = vpop.f32.mrb[0].mxu0
  %3520 = vdwg.mxu0
  %v3521 = vadd.f32 %v3351, %v3513
  %v3522 = vadd.f32 %v3356, %v3518
  %3523 = vmatprep.subr.mxu0 0.0
  %3524 = vmatpush1.msra.mxu0 %v3262
  %3525 = vmatprep.subr.mxu0 0.0
  %3526 = vmatpush1.msra.mxu0 %v3263
  %3527 = vmatprep.subr.mxu0 0.0
  %3528 = vmatpush1.msra.mxu0 %v3264
  %3529 = vmatprep.subr.mxu0 0.0
  %3530 = vmatpush1.msra.mxu0 %v3265
  %3531 = vmatprep.subr.mxu0 0.0
  %3532 = vmatpush1.msra.mxu0 0.0
  %3533 = vmatprep.subr.mxu0 0.0
  %3534 = vmatpush1.msra.mxu0 0.0
  %3535 = vmatprep.subr.mxu0 0.0
  %3536 = vmatpush1.msra.mxu0 0.0
  %3537 = vmatprep.subr.mxu0 0.0
  %3538 = vmatpush1.msra.mxu0 0.0
  %3539 = vmatprep.subr.mxu0 0.0
  %3540 = vmatpush1.msra.mxu0 0.0
  %3541 = vmatprep.subr.mxu0 0.0
  %3542 = vmatpush1.msra.mxu0 0.0
  %3543 = vmatprep.subr.mxu0 0.0
  %3544 = vmatpush1.msra.mxu0 0.0
  %3545 = vmatprep.subr.mxu0 0.0
  %3546 = vmatpush1.msra.mxu0 0.0
  %3547 = vmatprep.subr.mxu0 0.0
  %3548 = vmatpush1.msra.mxu0 0.0
  %3549 = vmatprep.subr.mxu0 0.0
  %3550 = vmatpush1.msra.mxu0 0.0
  %3551 = vmatprep.subr.mxu0 0.0
  %3552 = vmatpush1.msra.mxu0 0.0
  %3553 = vmatprep.subr.mxu0 0.0
  %3554 = vmatpush1.msra.mxu0 0.0
  %3555 = vmatprep.subr.mxu0 0.0
  %3556 = vmatpush1.msra.mxu0 0.0
  %3557 = vmatprep.subr.mxu0 0.0
  %3558 = vmatpush1.msra.mxu0 0.0
  %3559 = vmatprep.subr.mxu0 0.0
  %3560 = vmatpush1.msra.mxu0 0.0
  %3561 = vmatprep.subr.mxu0 0.0
  %3562 = vmatpush1.msra.mxu0 0.0
  %3563 = vmatprep.subr.mxu0 0.0
  %3564 = vmatpush1.msra.mxu0 0.0
  %3565 = vmatprep.subr.mxu0 0.0
  %3566 = vmatpush1.msra.mxu0 0.0
  %3567 = vmatprep.subr.mxu0 0.0
  %3568 = vmatpush1.msra.mxu0 0.0
  %3569 = vmatprep.subr.mxu0 0.0
  %3570 = vmatpush1.msra.mxu0 0.0
  %3571 = vmatprep.subr.mxu0 0.0
  %3572 = vmatpush1.msra.mxu0 0.0
  %3573 = vmatprep.subr.mxu0 0.0
  %3574 = vmatpush1.msra.mxu0 0.0
  %3575 = vmatprep.subr.mxu0 0.0
  %3576 = vmatpush1.msra.mxu0 0.0
  %3577 = vmatprep.subr.mxu0 0.0
  %3578 = vmatpush1.msra.mxu0 0.0
  %3579 = vmatprep.subr.mxu0 0.0
  %3580 = vmatpush1.msra.mxu0 0.0
  %3581 = vmatprep.subr.mxu0 0.0
  %3582 = vmatpush1.msra.mxu0 0.0
  %3583 = vmatprep.subr.mxu0 0.0
  %3584 = vmatpush1.msra.mxu0 0.0
  %3585 = vmatprep.subr.mxu0 0.0
  %3586 = vmatpush1.msra.mxu0 0.0
  %3587 = vmatprep.mubr.f32.mxu0 0.0
  %3588 = vmatmul.mubr.f32.gmra.mrb[0].mxu0 %v3441
  %v3589 = vpop.f32.mrb[0].mxu0
  %v3590 = vadd.f32 0.0, %v3589
  %v3591 = vpop.f32.mrb[0].mxu0
  %3592 = vmatprep.mubr.f32.mxu0 0.0
  %3593 = vmatmul.mubr.f32.gmra.mrb[0].mxu0 %v3444
  %v3594 = vpop.f32.mrb[0].mxu0
  %v3595 = vadd.f32 0.0, %v3594
  %v3596 = vpop.f32.mrb[0].mxu0
  %3597 = vdwg.mxu0
  %v3598 = vadd.f32 %v3430, %v3590
  %v3599 = vadd.f32 %v3435, %v3595
  %v3600 = vsub.f32 0.0, %v3598
  %v3601 = vsub.f32 0.0, %v3599
  %v3602 = vmul.f32 %v3600, 1.442695
  %v3603 = vpow.pop %v3602
  %v3604 = vmul.f32 %v3601, 1.442695
  %v3605 = vpow.pop %v3604
  %v3606 = vadd.f32 %v3603, 1.0
  %v3607 = vadd.f32 %v3605, 1.0
  %v3608 = vrcp.pop %v3606
  %v3609 = vmul.f32 1.0, %v3608
  %v3610 = vrcp.pop %v3607
  %v3611 = vmul.f32 1.0, %v3610
  %v3612 = vtanh.pop %v3521
  %v3613 = vtanh.pop %v3522
  %v3614 = vmul.f32 %v3612, %v3609
  %v3615 = vmul.f32 %v3613, %v3611
  %v3616 = vadd.f32 %v3248, %v3614
  %v3617 = vadd.f32 %v3249, %v3615
  %v3618 = vadd.f32 %v3614, %v3272
  %v3619 = vadd.f32 %v3615, %v3273
  %3620 = vst.msk [vmem:[#allocation2 + $0x8] sm:$0xff] %vm34, %v3618
  %3621 = vst.msk [vmem:[#allocation2 + $0x10] sm:$0xff] %vm34, %v3619
  %v3622 = vld [vmem:[%s1139] sm:$0xff]
  %v3623 = vld [vmem:[%s1139 + $0x8] sm:$0xff]
  %v3624 = vld [vmem:[%s1139 + $0x10] sm:$0xff]
  %v3625 = vld [vmem:[%s1139 + $0x18] sm:$0xff]
  %v3626 = vld [vmem:[%s1144] sm:$0xff]
  %v3627 = vld [vmem:[%s1144 + $0x8] sm:$0xff]
  %v3628 = vld [vmem:[%s1144 + $0x10] sm:$0xff]
  %v3629 = vld [vmem:[%s1144 + $0x18] sm:$0xff]
  %v3630 = vld [vmem:[%s1149] sm:$0xff]
  %v3631 = vld [vmem:[%s1149 + $0x8] sm:$0xff]
  %v3632 = vld [vmem:[%s1149 + $0x10] sm:$0xff]
  %v3633 = vld [vmem:[%s1149 + $0x18] sm:$0xff]
  %v3634 = vld [vmem:[%s1154] sm:$0xff]
  %v3635 = vld [vmem:[%s1154 + $0x8] sm:$0xff]
  %v3636 = vld [vmem:[%s1154 + $0x10] sm:$0xff]
  %v3637 = vld [vmem:[%s1154 + $0x18] sm:$0xff]
  %v3638 = vld [vmem:[%s5 + $0x3] sm:$0x1]
  %v3639 = vld [vmem:[%s6 + $0x3] sm:$0x1]
  %v3640 = vld [vmem:[#allocation2 + $0x8] sm:$0xff]
  %v3641 = vld [vmem:[#allocation2 + $0x10] sm:$0xff]
  %v3642 = vlaneseq
  %v3643 = vshrl.u32 %v3642, 7
  %v3644 = vsub.s32 0, %v3643
  %v3645 = vrot.slane %v3638, %v3644
  %v3647 = vsel %vm34, %v3640, 0
  %v3650 = vsel %vm34, %v3641, 0
  %3652 = vmatprep.subr.mxu0 0.0
  %3653 = vmatpush1.msra.mxu0 %v3626
  %3654 = vmatprep.subr.mxu0 0.0
  %3655 = vmatpush1.msra.mxu0 %v3627
  %3656 = vmatprep.subr.mxu0 0.0
  %3657 = vmatpush1.msra.mxu0 %v3628
  %3658 = vmatprep.subr.mxu0 0.0
  %3659 = vmatpush1.msra.mxu0 %v3629
  %3660 = vmatprep.subr.mxu0 0.0
  %3661 = vmatpush1.msra.mxu0 0.0
  %3662 = vmatprep.subr.mxu0 0.0
  %3663 = vmatpush1.msra.mxu0 0.0
  %3664 = vmatprep.subr.mxu0 0.0
  %3665 = vmatpush1.msra.mxu0 0.0
  %3666 = vmatprep.subr.mxu0 0.0
  %3667 = vmatpush1.msra.mxu0 0.0
  %3668 = vmatprep.subr.mxu0 0.0
  %3669 = vmatpush1.msra.mxu0 0.0
  %3670 = vmatprep.subr.mxu0 0.0
  %3671 = vmatpush1.msra.mxu0 0.0
  %3672 = vmatprep.subr.mxu0 0.0
  %3673 = vmatpush1.msra.mxu0 0.0
  %3674 = vmatprep.subr.mxu0 0.0
  %3675 = vmatpush1.msra.mxu0 0.0
  %3676 = vmatprep.subr.mxu0 0.0
  %3677 = vmatpush1.msra.mxu0 0.0
  %3678 = vmatprep.subr.mxu0 0.0
  %3679 = vmatpush1.msra.mxu0 0.0
  %3680 = vmatprep.subr.mxu0 0.0
  %3681 = vmatpush1.msra.mxu0 0.0
  %3682 = vmatprep.subr.mxu0 0.0
  %3683 = vmatpush1.msra.mxu0 0.0
  %3684 = vmatprep.subr.mxu0 0.0
  %3685 = vmatpush1.msra.mxu0 0.0
  %3686 = vmatprep.subr.mxu0 0.0
  %3687 = vmatpush1.msra.mxu0 0.0
  %3688 = vmatprep.subr.mxu0 0.0
  %3689 = vmatpush1.msra.mxu0 0.0
  %3690 = vmatprep.subr.mxu0 0.0
  %3691 = vmatpush1.msra.mxu0 0.0
  %3692 = vmatprep.subr.mxu0 0.0
  %3693 = vmatpush1.msra.mxu0 0.0
  %3694 = vmatprep.subr.mxu0 0.0
  %3695 = vmatpush1.msra.mxu0 0.0
  %3696 = vmatprep.subr.mxu0 0.0
  %3697 = vmatpush1.msra.mxu0 0.0
  %3698 = vmatprep.subr.mxu0 0.0
  %3699 = vmatpush1.msra.mxu0 0.0
  %3700 = vmatprep.subr.mxu0 0.0
  %3701 = vmatpush1.msra.mxu0 0.0
  %3702 = vmatprep.subr.mxu0 0.0
  %3703 = vmatpush1.msra.mxu0 0.0
  %3704 = vmatprep.subr.mxu0 0.0
  %3705 = vmatpush1.msra.mxu0 0.0
  %3706 = vmatprep.subr.mxu0 0.0
  %3707 = vmatpush1.msra.mxu0 0.0
  %3708 = vmatprep.subr.mxu0 0.0
  %3709 = vmatpush1.msra.mxu0 0.0
  %3710 = vmatprep.subr.mxu0 0.0
  %3711 = vmatpush1.msra.mxu0 0.0
  %3712 = vmatprep.subr.mxu0 0.0
  %3713 = vmatpush1.msra.mxu0 0.0
  %3714 = vmatprep.subr.mxu0 0.0
  %3715 = vmatpush1.msra.mxu0 0.0
  %3716 = vmatprep.mubr.f32.mxu0 0.0
  %3717 = vmatmul.mubr.f32.gmra.mrb[0].mxu0 %v3647
  %v3718 = vpop.f32.mrb[0].mxu0
  %v3719 = vadd.f32 %v3645, %v3718
  %v3720 = vpop.f32.mrb[0].mxu0
  %3721 = vmatprep.mubr.f32.mxu0 0.0
  %3722 = vmatmul.mubr.f32.gmra.mrb[0].mxu0 %v3650
  %v3723 = vpop.f32.mrb[0].mxu0
  %v3724 = vadd.f32 %v3645, %v3723
  %v3725 = vpop.f32.mrb[0].mxu0
  %3726 = vdwg.mxu0
  %v3727 = vlaneseq
  %v3728 = vshrl.u32 %v3727, 7
  %v3729 = vsub.s32 0, %v3728
  %v3730 = vrot.slane %v3639, %v3729
  %3731 = vmatprep.subr.mxu0 0.0
  %3732 = vmatpush1.msra.mxu0 %v3634
  %3733 = vmatprep.subr.mxu0 0.0
  %3734 = vmatpush1.msra.mxu0 %v3635
  %3735 = vmatprep.subr.mxu0 0.0
  %3736 = vmatpush1.msra.mxu0 %v3636
  %3737 = vmatprep.subr.mxu0 0.0
  %3738 = vmatpush1.msra.mxu0 %v3637
  %3739 = vmatprep.subr.mxu0 0.0
  %3740 = vmatpush1.msra.mxu0 0.0
  %3741 = vmatprep.subr.mxu0 0.0
  %3742 = vmatpush1.msra.mxu0 0.0
  %3743 = vmatprep.subr.mxu0 0.0
  %3744 = vmatpush1.msra.mxu0 0.0
  %3745 = vmatprep.subr.mxu0 0.0
  %3746 = vmatpush1.msra.mxu0 0.0
  %3747 = vmatprep.subr.mxu0 0.0
  %3748 = vmatpush1.msra.mxu0 0.0
  %3749 = vmatprep.subr.mxu0 0.0
  %3750 = vmatpush1.msra.mxu0 0.0
  %3751 = vmatprep.subr.mxu0 0.0
  %3752 = vmatpush1.msra.mxu0 0.0
  %3753 = vmatprep.subr.mxu0 0.0
  %3754 = vmatpush1.msra.mxu0 0.0
  %3755 = vmatprep.subr.mxu0 0.0
  %3756 = vmatpush1.msra.mxu0 0.0
  %3757 = vmatprep.subr.mxu0 0.0
  %3758 = vmatpush1.msra.mxu0 0.0
  %3759 = vmatprep.subr.mxu0 0.0
  %3760 = vmatpush1.msra.mxu0 0.0
  %3761 = vmatprep.subr.mxu0 0.0
  %3762 = vmatpush1.msra.mxu0 0.0
  %3763 = vmatprep.subr.mxu0 0.0
  %3764 = vmatpush1.msra.mxu0 0.0
  %3765 = vmatprep.subr.mxu0 0.0
  %3766 = vmatpush1.msra.mxu0 0.0
  %3767 = vmatprep.subr.mxu0 0.0
  %3768 = vmatpush1.msra.mxu0 0.0
  %3769 = vmatprep.subr.mxu0 0.0
  %3770 = vmatpush1.msra.mxu0 0.0
  %3771 = vmatprep.subr.mxu0 0.0
  %3772 = vmatpush1.msra.mxu0 0.0
  %3773 = vmatprep.subr.mxu0 0.0
  %3774 = vmatpush1.msra.mxu0 0.0
  %3775 = vmatprep.subr.mxu0 0.0
  %3776 = vmatpush1.msra.mxu0 0.0
  %3777 = vmatprep.subr.mxu0 0.0
  %3778 = vmatpush1.msra.mxu0 0.0
  %3779 = vmatprep.subr.mxu0 0.0
  %3780 = vmatpush1.msra.mxu0 0.0
  %3781 = vmatprep.subr.mxu0 0.0
  %3782 = vmatpush1.msra.mxu0 0.0
  %3783 = vmatprep.subr.mxu0 0.0
  %3784 = vmatpush1.msra.mxu0 0.0
  %3785 = vmatprep.subr.mxu0 0.0
  %3786 = vmatpush1.msra.mxu0 0.0
  %3787 = vmatprep.subr.mxu0 0.0
  %3788 = vmatpush1.msra.mxu0 0.0
  %3789 = vmatprep.subr.mxu0 0.0
  %3790 = vmatpush1.msra.mxu0 0.0
  %3791 = vmatprep.subr.mxu0 0.0
  %3792 = vmatpush1.msra.mxu0 0.0
  %3793 = vmatprep.subr.mxu0 0.0
  %3794 = vmatpush1.msra.mxu0 0.0
  %3795 = vmatprep.mubr.f32.mxu0 0.0
  %3796 = vmatmul.mubr.f32.gmra.mrb[0].mxu0 %v3647
  %v3797 = vpop.f32.mrb[0].mxu0
  %v3798 = vadd.f32 %v3730, %v3797
  %v3799 = vpop.f32.mrb[0].mxu0
  %3800 = vmatprep.mubr.f32.mxu0 0.0
  %3801 = vmatmul.mubr.f32.gmra.mrb[0].mxu0 %v3650
  %v3802 = vpop.f32.mrb[0].mxu0
  %v3803 = vadd.f32 %v3730, %v3802
  %v3804 = vpop.f32.mrb[0].mxu0
  %3805 = vdwg.mxu0
  %v3806 = vld [vmem:[#allocation2] sm:$0xff]
  %v3807 = vld [vmem:[#allocation2 + $0x8] sm:$0xff]
  %v3809 = vsel %vm34, %v3806, 0
  %v3812 = vsel %vm34, %v3807, 0
  %3814 = vmatprep.subr.mxu0 0.0
  %3815 = vmatpush1.msra.mxu0 %v3622
  %3816 = vmatprep.subr.mxu0 0.0
  %3817 = vmatpush1.msra.mxu0 %v3623
  %3818 = vmatprep.subr.mxu0 0.0
  %3819 = vmatpush1.msra.mxu0 %v3624
  %3820 = vmatprep.subr.mxu0 0.0
  %3821 = vmatpush1.msra.mxu0 %v3625
  %3822 = vmatprep.subr.mxu0 0.0
  %3823 = vmatpush1.msra.mxu0 0.0
  %3824 = vmatprep.subr.mxu0 0.0
  %3825 = vmatpush1.msra.mxu0 0.0
  %3826 = vmatprep.subr.mxu0 0.0
  %3827 = vmatpush1.msra.mxu0 0.0
  %3828 = vmatprep.subr.mxu0 0.0
  %3829 = vmatpush1.msra.mxu0 0.0
  %3830 = vmatprep.subr.mxu0 0.0
  %3831 = vmatpush1.msra.mxu0 0.0
  %3832 = vmatprep.subr.mxu0 0.0
  %3833 = vmatpush1.msra.mxu0 0.0
  %3834 = vmatprep.subr.mxu0 0.0
  %3835 = vmatpush1.msra.mxu0 0.0
  %3836 = vmatprep.subr.mxu0 0.0
  %3837 = vmatpush1.msra.mxu0 0.0
  %3838 = vmatprep.subr.mxu0 0.0
  %3839 = vmatpush1.msra.mxu0 0.0
  %3840 = vmatprep.subr.mxu0 0.0
  %3841 = vmatpush1.msra.mxu0 0.0
  %3842 = vmatprep.subr.mxu0 0.0
  %3843 = vmatpush1.msra.mxu0 0.0
  %3844 = vmatprep.subr.mxu0 0.0
  %3845 = vmatpush1.msra.mxu0 0.0
  %3846 = vmatprep.subr.mxu0 0.0
  %3847 = vmatpush1.msra.mxu0 0.0
  %3848 = vmatprep.subr.mxu0 0.0
  %3849 = vmatpush1.msra.mxu0 0.0
  %3850 = vmatprep.subr.mxu0 0.0
  %3851 = vmatpush1.msra.mxu0 0.0
  %3852 = vmatprep.subr.mxu0 0.0
  %3853 = vmatpush1.msra.mxu0 0.0
  %3854 = vmatprep.subr.mxu0 0.0
  %3855 = vmatpush1.msra.mxu0 0.0
  %3856 = vmatprep.subr.mxu0 0.0
  %3857 = vmatpush1.msra.mxu0 0.0
  %3858 = vmatprep.subr.mxu0 0.0
  %3859 = vmatpush1.msra.mxu0 0.0
  %3860 = vmatprep.subr.mxu0 0.0
  %3861 = vmatpush1.msra.mxu0 0.0
  %3862 = vmatprep.subr.mxu0 0.0
  %3863 = vmatpush1.msra.mxu0 0.0
  %3864 = vmatprep.subr.mxu0 0.0
  %3865 = vmatpush1.msra.mxu0 0.0
  %3866 = vmatprep.subr.mxu0 0.0
  %3867 = vmatpush1.msra.mxu0 0.0
  %3868 = vmatprep.subr.mxu0 0.0
  %3869 = vmatpush1.msra.mxu0 0.0
  %3870 = vmatprep.subr.mxu0 0.0
  %3871 = vmatpush1.msra.mxu0 0.0
  %3872 = vmatprep.subr.mxu0 0.0
  %3873 = vmatpush1.msra.mxu0 0.0
  %3874 = vmatprep.subr.mxu0 0.0
  %3875 = vmatpush1.msra.mxu0 0.0
  %3876 = vmatprep.subr.mxu0 0.0
  %3877 = vmatpush1.msra.mxu0 0.0
  %3878 = vmatprep.mubr.f32.mxu0 0.0
  %3879 = vmatmul.mubr.f32.gmra.mrb[0].mxu0 %v3809
  %v3880 = vpop.f32.mrb[0].mxu0
  %v3881 = vadd.f32 0.0, %v3880
  %v3882 = vpop.f32.mrb[0].mxu0
  %3883 = vmatprep.mubr.f32.mxu0 0.0
  %3884 = vmatmul.mubr.f32.gmra.mrb[0].mxu0 %v3812
  %v3885 = vpop.f32.mrb[0].mxu0
  %v3886 = vadd.f32 0.0, %v3885
  %v3887 = vpop.f32.mrb[0].mxu0
  %3888 = vdwg.mxu0
  %v3889 = vadd.f32 %v3719, %v3881
  %v3890 = vadd.f32 %v3724, %v3886
  %3891 = vmatprep.subr.mxu0 0.0
  %3892 = vmatpush1.msra.mxu0 %v3630
  %3893 = vmatprep.subr.mxu0 0.0
  %3894 = vmatpush1.msra.mxu0 %v3631
  %3895 = vmatprep.subr.mxu0 0.0
  %3896 = vmatpush1.msra.mxu0 %v3632
  %3897 = vmatprep.subr.mxu0 0.0
  %3898 = vmatpush1.msra.mxu0 %v3633
  %3899 = vmatprep.subr.mxu0 0.0
  %3900 = vmatpush1.msra.mxu0 0.0
  %3901 = vmatprep.subr.mxu0 0.0
  %3902 = vmatpush1.msra.mxu0 0.0
  %3903 = vmatprep.subr.mxu0 0.0
  %3904 = vmatpush1.msra.mxu0 0.0
  %3905 = vmatprep.subr.mxu0 0.0
  %3906 = vmatpush1.msra.mxu0 0.0
  %3907 = vmatprep.subr.mxu0 0.0
  %3908 = vmatpush1.msra.mxu0 0.0
  %3909 = vmatprep.subr.mxu0 0.0
  %3910 = vmatpush1.msra.mxu0 0.0
  %3911 = vmatprep.subr.mxu0 0.0
  %3912 = vmatpush1.msra.mxu0 0.0
  %3913 = vmatprep.subr.mxu0 0.0
  %3914 = vmatpush1.msra.mxu0 0.0
  %3915 = vmatprep.subr.mxu0 0.0
  %3916 = vmatpush1.msra.mxu0 0.0
  %3917 = vmatprep.subr.mxu0 0.0
  %3918 = vmatpush1.msra.mxu0 0.0
  %3919 = vmatprep.subr.mxu0 0.0
  %3920 = vmatpush1.msra.mxu0 0.0
  %3921 = vmatprep.subr.mxu0 0.0
  %3922 = vmatpush1.msra.mxu0 0.0
  %3923 = vmatprep.subr.mxu0 0.0
  %3924 = vmatpush1.msra.mxu0 0.0
  %3925 = vmatprep.subr.mxu0 0.0
  %3926 = vmatpush1.msra.mxu0 0.0
  %3927 = vmatprep.subr.mxu0 0.0
  %3928 = vmatpush1.msra.mxu0 0.0
  %3929 = vmatprep.subr.mxu0 0.0
  %3930 = vmatpush1.msra.mxu0 0.0
  %3931 = vmatprep.subr.mxu0 0.0
  %3932 = vmatpush1.msra.mxu0 0.0
  %3933 = vmatprep.subr.mxu0 0.0
  %3934 = vmatpush1.msra.mxu0 0.0
  %3935 = vmatprep.subr.mxu0 0.0
  %3936 = vmatpush1.msra.mxu0 0.0
  %3937 = vmatprep.subr.mxu0 0.0
  %3938 = vmatpush1.msra.mxu0 0.0
  %3939 = vmatprep.subr.mxu0 0.0
  %3940 = vmatpush1.msra.mxu0 0.0
  %3941 = vmatprep.subr.mxu0 0.0
  %3942 = vmatpush1.msra.mxu0 0.0
  %3943 = vmatprep.subr.mxu0 0.0
  %3944 = vmatpush1.msra.mxu0 0.0
  %3945 = vmatprep.subr.mxu0 0.0
  %3946 = vmatpush1.msra.mxu0 0.0
  %3947 = vmatprep.subr.mxu0 0.0
  %3948 = vmatpush1.msra.mxu0 0.0
  %3949 = vmatprep.subr.mxu0 0.0
  %3950 = vmatpush1.msra.mxu0 0.0
  %3951 = vmatprep.subr.mxu0 0.0
  %3952 = vmatpush1.msra.mxu0 0.0
  %3953 = vmatprep.subr.mxu0 0.0
  %3954 = vmatpush1.msra.mxu0 0.0
  %3955 = vmatprep.mubr.f32.mxu0 0.0
  %3956 = vmatmul.mubr.f32.gmra.mrb[0].mxu0 %v3809
  %v3957 = vpop.f32.mrb[0].mxu0
  %v3958 = vadd.f32 0.0, %v3957
  %v3959 = vpop.f32.mrb[0].mxu0
  %3960 = vmatprep.mubr.f32.mxu0 0.0
  %3961 = vmatmul.mubr.f32.gmra.mrb[0].mxu0 %v3812
  %v3962 = vpop.f32.mrb[0].mxu0
  %v3963 = vadd.f32 0.0, %v3962
  %v3964 = vpop.f32.mrb[0].mxu0
  %3965 = vdwg.mxu0
  %v3966 = vadd.f32 %v3798, %v3958
  %v3967 = vadd.f32 %v3803, %v3963
  %v3968 = vsub.f32 0.0, %v3966
  %v3969 = vsub.f32 0.0, %v3967
  %v3970 = vmul.f32 %v3968, 1.442695
  %v3971 = vpow.pop %v3970
  %v3972 = vmul.f32 %v3969, 1.442695
  %v3973 = vpow.pop %v3972
  %v3974 = vadd.f32 %v3971, 1.0
  %v3975 = vadd.f32 %v3973, 1.0
  %v3976 = vrcp.pop %v3974
  %v3977 = vmul.f32 1.0, %v3976
  %v3978 = vrcp.pop %v3975
  %v3979 = vmul.f32 1.0, %v3978
  %v3980 = vtanh.pop %v3889
  %v3981 = vtanh.pop %v3890
  %v3982 = vmul.f32 %v3980, %v3977
  %v3983 = vmul.f32 %v3981, %v3979
  %v3984 = vadd.f32 %v3616, %v3982
  %v3985 = vadd.f32 %v3617, %v3983
  %v3986 = vadd.f32 %v3982, %v3640
  %v3987 = vadd.f32 %v3983, %v3641
  %3988 = vst.msk [vmem:[#allocation2 + $0x8] sm:$0xff] %vm34, %v3986
  %3989 = vst.msk [vmem:[#allocation2 + $0x10] sm:$0xff] %vm34, %v3987
  %v3990 = vld [vmem:[%s1511] sm:$0xff]
  %v3991 = vld [vmem:[%s1511 + $0x8] sm:$0xff]
  %v3992 = vld [vmem:[%s1511 + $0x10] sm:$0xff]
  %v3993 = vld [vmem:[%s1511 + $0x18] sm:$0xff]
  %v3994 = vld [vmem:[%s1516] sm:$0xff]
  %v3995 = vld [vmem:[%s1516 + $0x8] sm:$0xff]
  %v3996 = vld [vmem:[%s1516 + $0x10] sm:$0xff]
  %v3997 = vld [vmem:[%s1516 + $0x18] sm:$0xff]
  %v3998 = vld [vmem:[%s5 + $0x4] sm:$0x1]
  %v3999 = vld [vmem:[%s6 + $0x4] sm:$0x1]
  %v4000 = vld [vmem:[#allocation2 + $0x8] sm:$0xff]
  %v4001 = vld [vmem:[#allocation2 + $0x10] sm:$0xff]
  %v4002 = vlaneseq
  %v4003 = vshrl.u32 %v4002, 7
  %v4004 = vsub.s32 0, %v4003
  %v4005 = vrot.slane %v3998, %v4004
  %v4007 = vsel %vm34, %v4000, 0
  %v4010 = vsel %vm34, %v4001, 0
  %4012 = vmatprep.subr.mxu0 0.0
  %4013 = vmatpush1.msra.mxu0 %v3990
  %4014 = vmatprep.subr.mxu0 0.0
  %4015 = vmatpush1.msra.mxu0 %v3991
  %4016 = vmatprep.subr.mxu0 0.0
  %4017 = vmatpush1.msra.mxu0 %v3992
  %4018 = vmatprep.subr.mxu0 0.0
  %4019 = vmatpush1.msra.mxu0 %v3993
  %4020 = vmatprep.subr.mxu0 0.0
  %4021 = vmatpush1.msra.mxu0 0.0
  %4022 = vmatprep.subr.mxu0 0.0
  %4023 = vmatpush1.msra.mxu0 0.0
  %4024 = vmatprep.subr.mxu0 0.0
  %4025 = vmatpush1.msra.mxu0 0.0
  %4026 = vmatprep.subr.mxu0 0.0
  %4027 = vmatpush1.msra.mxu0 0.0
  %4028 = vmatprep.subr.mxu0 0.0
  %4029 = vmatpush1.msra.mxu0 0.0
  %4030 = vmatprep.subr.mxu0 0.0
  %4031 = vmatpush1.msra.mxu0 0.0
  %4032 = vmatprep.subr.mxu0 0.0
  %4033 = vmatpush1.msra.mxu0 0.0
  %4034 = vmatprep.subr.mxu0 0.0
  %4035 = vmatpush1.msra.mxu0 0.0
  %4036 = vmatprep.subr.mxu0 0.0
  %4037 = vmatpush1.msra.mxu0 0.0
  %4038 = vmatprep.subr.mxu0 0.0
  %4039 = vmatpush1.msra.mxu0 0.0
  %4040 = vmatprep.subr.mxu0 0.0
  %4041 = vmatpush1.msra.mxu0 0.0
  %4042 = vmatprep.subr.mxu0 0.0
  %4043 = vmatpush1.msra.mxu0 0.0
  %4044 = vmatprep.subr.mxu0 0.0
  %4045 = vmatpush1.msra.mxu0 0.0
  %4046 = vmatprep.subr.mxu0 0.0
  %4047 = vmatpush1.msra.mxu0 0.0
  %4048 = vmatprep.subr.mxu0 0.0
  %4049 = vmatpush1.msra.mxu0 0.0
  %4050 = vmatprep.subr.mxu0 0.0
  %4051 = vmatpush1.msra.mxu0 0.0
  %4052 = vmatprep.subr.mxu0 0.0
  %4053 = vmatpush1.msra.mxu0 0.0
  %4054 = vmatprep.subr.mxu0 0.0
  %4055 = vmatpush1.msra.mxu0 0.0
  %4056 = vmatprep.subr.mxu0 0.0
  %4057 = vmatpush1.msra.mxu0 0.0
  %4058 = vmatprep.subr.mxu0 0.0
  %4059 = vmatpush1.msra.mxu0 0.0
  %4060 = vmatprep.subr.mxu0 0.0
  %4061 = vmatpush1.msra.mxu0 0.0
  %4062 = vmatprep.subr.mxu0 0.0
  %4063 = vmatpush1.msra.mxu0 0.0
  %4064 = vmatprep.subr.mxu0 0.0
  %4065 = vmatpush1.msra.mxu0 0.0
  %4066 = vmatprep.subr.mxu0 0.0
  %4067 = vmatpush1.msra.mxu0 0.0
  %4068 = vmatprep.subr.mxu0 0.0
  %4069 = vmatpush1.msra.mxu0 0.0
  %4070 = vmatprep.subr.mxu0 0.0
  %4071 = vmatpush1.msra.mxu0 0.0
  %4072 = vmatprep.subr.mxu0 0.0
  %4073 = vmatpush1.msra.mxu0 0.0
  %4074 = vmatprep.subr.mxu0 0.0
  %4075 = vmatpush1.msra.mxu0 0.0
  %4076 = vmatprep.mubr.f32.mxu0 0.0
  %4077 = vmatmul.mubr.f32.gmra.mrb[0].mxu0 %v4007
  %v4078 = vpop.f32.mrb[0].mxu0
  %v4079 = vadd.f32 %v4005, %v4078
  %v4080 = vpop.f32.mrb[0].mxu0
  %4081 = vmatprep.mubr.f32.mxu0 0.0
  %4082 = vmatmul.mubr.f32.gmra.mrb[0].mxu0 %v4010
  %v4083 = vpop.f32.mrb[0].mxu0
  %v4084 = vadd.f32 %v4005, %v4083
  %v4085 = vpop.f32.mrb[0].mxu0
  %4086 = vdwg.mxu0
  %v4087 = vlaneseq
  %v4088 = vshrl.u32 %v4087, 7
  %v4089 = vsub.s32 0, %v4088
  %v4090 = vrot.slane %v3999, %v4089
  %4091 = vmatprep.subr.mxu0 0.0
  %4092 = vmatpush1.msra.mxu0 %v3994
  %4093 = vmatprep.subr.mxu0 0.0
  %4094 = vmatpush1.msra.mxu0 %v3995
  %4095 = vmatprep.subr.mxu0 0.0
  %4096 = vmatpush1.msra.mxu0 %v3996
  %4097 = vmatprep.subr.mxu0 0.0
  %4098 = vmatpush1.msra.mxu0 %v3997
  %4099 = vmatprep.subr.mxu0 0.0
  %4100 = vmatpush1.msra.mxu0 0.0
  %4101 = vmatprep.subr.mxu0 0.0
  %4102 = vmatpush1.msra.mxu0 0.0
  %4103 = vmatprep.subr.mxu0 0.0
  %4104 = vmatpush1.msra.mxu0 0.0
  %4105 = vmatprep.subr.mxu0 0.0
  %4106 = vmatpush1.msra.mxu0 0.0
  %4107 = vmatprep.subr.mxu0 0.0
  %4108 = vmatpush1.msra.mxu0 0.0
  %4109 = vmatprep.subr.mxu0 0.0
  %4110 = vmatpush1.msra.mxu0 0.0
  %4111 = vmatprep.subr.mxu0 0.0
  %4112 = vmatpush1.msra.mxu0 0.0
  %4113 = vmatprep.subr.mxu0 0.0
  %4114 = vmatpush1.msra.mxu0 0.0
  %4115 = vmatprep.subr.mxu0 0.0
  %4116 = vmatpush1.msra.mxu0 0.0
  %4117 = vmatprep.subr.mxu0 0.0
  %4118 = vmatpush1.msra.mxu0 0.0
  %4119 = vmatprep.subr.mxu0 0.0
  %4120 = vmatpush1.msra.mxu0 0.0
  %4121 = vmatprep.subr.mxu0 0.0
  %4122 = vmatpush1.msra.mxu0 0.0
  %4123 = vmatprep.subr.mxu0 0.0
  %4124 = vmatpush1.msra.mxu0 0.0
  %4125 = vmatprep.subr.mxu0 0.0
  %4126 = vmatpush1.msra.mxu0 0.0
  %4127 = vmatprep.subr.mxu0 0.0
  %4128 = vmatpush1.msra.mxu0 0.0
  %4129 = vmatprep.subr.mxu0 0.0
  %4130 = vmatpush1.msra.mxu0 0.0
  %4131 = vmatprep.subr.mxu0 0.0
  %4132 = vmatpush1.msra.mxu0 0.0
  %4133 = vmatprep.subr.mxu0 0.0
  %4134 = vmatpush1.msra.mxu0 0.0
  %4135 = vmatprep.subr.mxu0 0.0
  %4136 = vmatpush1.msra.mxu0 0.0
  %4137 = vmatprep.subr.mxu0 0.0
  %4138 = vmatpush1.msra.mxu0 0.0
  %4139 = vmatprep.subr.mxu0 0.0
  %4140 = vmatpush1.msra.mxu0 0.0
  %4141 = vmatprep.subr.mxu0 0.0
  %4142 = vmatpush1.msra.mxu0 0.0
  %4143 = vmatprep.subr.mxu0 0.0
  %4144 = vmatpush1.msra.mxu0 0.0
  %4145 = vmatprep.subr.mxu0 0.0
  %4146 = vmatpush1.msra.mxu0 0.0
  %4147 = vmatprep.subr.mxu0 0.0
  %4148 = vmatpush1.msra.mxu0 0.0
  %4149 = vmatprep.subr.mxu0 0.0
  %4150 = vmatpush1.msra.mxu0 0.0
  %4151 = vmatprep.subr.mxu0 0.0
  %4152 = vmatpush1.msra.mxu0 0.0
  %4153 = vmatprep.subr.mxu0 0.0
  %4154 = vmatpush1.msra.mxu0 0.0
  %4155 = vmatprep.mubr.f32.mxu0 0.0
  %4156 = vmatmul.mubr.f32.gmra.mrb[0].mxu0 %v4007
  %v4157 = vpop.f32.mrb[0].mxu0
  %v4158 = vadd.f32 %v4090, %v4157
  %v4159 = vpop.f32.mrb[0].mxu0
  %4160 = vmatprep.mubr.f32.mxu0 0.0
  %4161 = vmatmul.mubr.f32.gmra.mrb[0].mxu0 %v4010
  %v4162 = vpop.f32.mrb[0].mxu0
  %v4163 = vadd.f32 %v4090, %v4162
  %v4164 = vpop.f32.mrb[0].mxu0
  %4165 = vdwg.mxu0
  %v4166 = vsub.f32 0.0, %v4158
  %v4167 = vsub.f32 0.0, %v4163
  %v4168 = vmul.f32 %v4166, 1.442695
  %v4169 = vpow.pop %v4168
  %v4170 = vmul.f32 %v4167, 1.442695
  %v4171 = vpow.pop %v4170
  %v4172 = vadd.f32 %v4169, 1.0
  %v4173 = vadd.f32 %v4171, 1.0
  %v4174 = vrcp.pop %v4172
  %v4175 = vmul.f32 1.0, %v4174
  %v4176 = vrcp.pop %v4173
  %v4177 = vmul.f32 1.0, %v4176
  %v4178 = vtanh.pop %v4079
  %v4179 = vtanh.pop %v4084
  %v4180 = vmul.f32 %v4178, %v4175
  %v4181 = vmul.f32 %v4179, %v4177
  %v4182 = vadd.f32 %v3984, %v4180
  %v4183 = vadd.f32 %v3985, %v4181
  %v4184 = vadd.f32 %v4180, %v4000
  %v4185 = vadd.f32 %v4181, %v4001
  %4186 = vst.msk [vmem:[#allocation2 + $0x8] sm:$0xff] %vm34, %v4184
  %4187 = vst.msk [vmem:[#allocation2 + $0x10] sm:$0xff] %vm34, %v4185
  %v4188 = vld [vmem:[%s1711] sm:$0xff]
  %v4189 = vld [vmem:[%s1711 + $0x8] sm:$0xff]
  %v4190 = vld [vmem:[%s1711 + $0x10] sm:$0xff]
  %v4191 = vld [vmem:[%s1711 + $0x18] sm:$0xff]
  %v4192 = vld [vmem:[%s1716] sm:$0xff]
  %v4193 = vld [vmem:[%s1716 + $0x8] sm:$0xff]
  %v4194 = vld [vmem:[%s1716 + $0x10] sm:$0xff]
  %v4195 = vld [vmem:[%s1716 + $0x18] sm:$0xff]
  %v4196 = vld [vmem:[%s5 + $0x5] sm:$0x1]
  %v4197 = vld [vmem:[%s6 + $0x5] sm:$0x1]
  %v4198 = vld [vmem:[#allocation2 + $0x8] sm:$0xff]
  %v4199 = vld [vmem:[#allocation2 + $0x10] sm:$0xff]
  %v4200 = vlaneseq
  %v4201 = vshrl.u32 %v4200, 7
  %v4202 = vsub.s32 0, %v4201
  %v4203 = vrot.slane %v4196, %v4202
  %v4205 = vsel %vm34, %v4198, 0
  %v4208 = vsel %vm34, %v4199, 0
  %4210 = vmatprep.subr.mxu0 0.0
  %4211 = vmatpush1.msra.mxu0 %v4188
  %4212 = vmatprep.subr.mxu0 0.0
  %4213 = vmatpush1.msra.mxu0 %v4189
  %4214 = vmatprep.subr.mxu0 0.0
  %4215 = vmatpush1.msra.mxu0 %v4190
  %4216 = vmatprep.subr.mxu0 0.0
  %4217 = vmatpush1.msra.mxu0 %v4191
  %4218 = vmatprep.subr.mxu0 0.0
  %4219 = vmatpush1.msra.mxu0 0.0
  %4220 = vmatprep.subr.mxu0 0.0
  %4221 = vmatpush1.msra.mxu0 0.0
  %4222 = vmatprep.subr.mxu0 0.0
  %4223 = vmatpush1.msra.mxu0 0.0
  %4224 = vmatprep.subr.mxu0 0.0
  %4225 = vmatpush1.msra.mxu0 0.0
  %4226 = vmatprep.subr.mxu0 0.0
  %4227 = vmatpush1.msra.mxu0 0.0
  %4228 = vmatprep.subr.mxu0 0.0
  %4229 = vmatpush1.msra.mxu0 0.0
  %4230 = vmatprep.subr.mxu0 0.0
  %4231 = vmatpush1.msra.mxu0 0.0
  %4232 = vmatprep.subr.mxu0 0.0
  %4233 = vmatpush1.msra.mxu0 0.0
  %4234 = vmatprep.subr.mxu0 0.0
  %4235 = vmatpush1.msra.mxu0 0.0
  %4236 = vmatprep.subr.mxu0 0.0
  %4237 = vmatpush1.msra.mxu0 0.0
  %4238 = vmatprep.subr.mxu0 0.0
  %4239 = vmatpush1.msra.mxu0 0.0
  %4240 = vmatprep.subr.mxu0 0.0
  %4241 = vmatpush1.msra.mxu0 0.0
  %4242 = vmatprep.subr.mxu0 0.0
  %4243 = vmatpush1.msra.mxu0 0.0
  %4244 = vmatprep.subr.mxu0 0.0
  %4245 = vmatpush1.msra.mxu0 0.0
  %4246 = vmatprep.subr.mxu0 0.0
  %4247 = vmatpush1.msra.mxu0 0.0
  %4248 = vmatprep.subr.mxu0 0.0
  %4249 = vmatpush1.msra.mxu0 0.0
  %4250 = vmatprep.subr.mxu0 0.0
  %4251 = vmatpush1.msra.mxu0 0.0
  %4252 = vmatprep.subr.mxu0 0.0
  %4253 = vmatpush1.msra.mxu0 0.0
  %4254 = vmatprep.subr.mxu0 0.0
  %4255 = vmatpush1.msra.mxu0 0.0
  %4256 = vmatprep.subr.mxu0 0.0
  %4257 = vmatpush1.msra.mxu0 0.0
  %4258 = vmatprep.subr.mxu0 0.0
  %4259 = vmatpush1.msra.mxu0 0.0
  %4260 = vmatprep.subr.mxu0 0.0
  %4261 = vmatpush1.msra.mxu0 0.0
  %4262 = vmatprep.subr.mxu0 0.0
  %4263 = vmatpush1.msra.mxu0 0.0
  %4264 = vmatprep.subr.mxu0 0.0
  %4265 = vmatpush1.msra.mxu0 0.0
  %4266 = vmatprep.subr.mxu0 0.0
  %4267 = vmatpush1.msra.mxu0 0.0
  %4268 = vmatprep.subr.mxu0 0.0
  %4269 = vmatpush1.msra.mxu0 0.0
  %4270 = vmatprep.subr.mxu0 0.0
  %4271 = vmatpush1.msra.mxu0 0.0
  %4272 = vmatprep.subr.mxu0 0.0
  %4273 = vmatpush1.msra.mxu0 0.0
  %4274 = vmatprep.mubr.f32.mxu0 0.0
  %4275 = vmatmul.mubr.f32.gmra.mrb[0].mxu0 %v4205
  %v4276 = vpop.f32.mrb[0].mxu0
  %v4277 = vadd.f32 %v4203, %v4276
  %v4278 = vpop.f32.mrb[0].mxu0
  %4279 = vmatprep.mubr.f32.mxu0 0.0
  %4280 = vmatmul.mubr.f32.gmra.mrb[0].mxu0 %v4208
  %v4281 = vpop.f32.mrb[0].mxu0
  %v4282 = vadd.f32 %v4203, %v4281
  %v4283 = vpop.f32.mrb[0].mxu0
  %4284 = vdwg.mxu0
  %v4285 = vlaneseq
  %v4286 = vshrl.u32 %v4285, 7
  %v4287 = vsub.s32 0, %v4286
  %v4288 = vrot.slane %v4197, %v4287
  %4289 = vmatprep.subr.mxu0 0.0
  %4290 = vmatpush1.msra.mxu0 %v4192
  %4291 = vmatprep.subr.mxu0 0.0
  %4292 = vmatpush1.msra.mxu0 %v4193
  %4293 = vmatprep.subr.mxu0 0.0
  %4294 = vmatpush1.msra.mxu0 %v4194
  %4295 = vmatprep.subr.mxu0 0.0
  %4296 = vmatpush1.msra.mxu0 %v4195
  %4297 = vmatprep.subr.mxu0 0.0
  %4298 = vmatpush1.msra.mxu0 0.0
  %4299 = vmatprep.subr.mxu0 0.0
  %4300 = vmatpush1.msra.mxu0 0.0
  %4301 = vmatprep.subr.mxu0 0.0
  %4302 = vmatpush1.msra.mxu0 0.0
  %4303 = vmatprep.subr.mxu0 0.0
  %4304 = vmatpush1.msra.mxu0 0.0
  %4305 = vmatprep.subr.mxu0 0.0
  %4306 = vmatpush1.msra.mxu0 0.0
  %4307 = vmatprep.subr.mxu0 0.0
  %4308 = vmatpush1.msra.mxu0 0.0
  %4309 = vmatprep.subr.mxu0 0.0
  %4310 = vmatpush1.msra.mxu0 0.0
  %4311 = vmatprep.subr.mxu0 0.0
  %4312 = vmatpush1.msra.mxu0 0.0
  %4313 = vmatprep.subr.mxu0 0.0
  %4314 = vmatpush1.msra.mxu0 0.0
  %4315 = vmatprep.subr.mxu0 0.0
  %4316 = vmatpush1.msra.mxu0 0.0
  %4317 = vmatprep.subr.mxu0 0.0
  %4318 = vmatpush1.msra.mxu0 0.0
  %4319 = vmatprep.subr.mxu0 0.0
  %4320 = vmatpush1.msra.mxu0 0.0
  %4321 = vmatprep.subr.mxu0 0.0
  %4322 = vmatpush1.msra.mxu0 0.0
  %4323 = vmatprep.subr.mxu0 0.0
  %4324 = vmatpush1.msra.mxu0 0.0
  %4325 = vmatprep.subr.mxu0 0.0
  %4326 = vmatpush1.msra.mxu0 0.0
  %4327 = vmatprep.subr.mxu0 0.0
  %4328 = vmatpush1.msra.mxu0 0.0
  %4329 = vmatprep.subr.mxu0 0.0
  %4330 = vmatpush1.msra.mxu0 0.0
  %4331 = vmatprep.subr.mxu0 0.0
  %4332 = vmatpush1.msra.mxu0 0.0
  %4333 = vmatprep.subr.mxu0 0.0
  %4334 = vmatpush1.msra.mxu0 0.0
  %4335 = vmatprep.subr.mxu0 0.0
  %4336 = vmatpush1.msra.mxu0 0.0
  %4337 = vmatprep.subr.mxu0 0.0
  %4338 = vmatpush1.msra.mxu0 0.0
  %4339 = vmatprep.subr.mxu0 0.0
  %4340 = vmatpush1.msra.mxu0 0.0
  %4341 = vmatprep.subr.mxu0 0.0
  %4342 = vmatpush1.msra.mxu0 0.0
  %4343 = vmatprep.subr.mxu0 0.0
  %4344 = vmatpush1.msra.mxu0 0.0
  %4345 = vmatprep.subr.mxu0 0.0
  %4346 = vmatpush1.msra.mxu0 0.0
  %4347 = vmatprep.subr.mxu0 0.0
  %4348 = vmatpush1.msra.mxu0 0.0
  %4349 = vmatprep.subr.mxu0 0.0
  %4350 = vmatpush1.msra.mxu0 0.0
  %4351 = vmatprep.subr.mxu0 0.0
  %4352 = vmatpush1.msra.mxu0 0.0
  %4353 = vmatprep.mubr.f32.mxu0 0.0
  %4354 = vmatmul.mubr.f32.gmra.mrb[0].mxu0 %v4205
  %v4355 = vpop.f32.mrb[0].mxu0
  %v4356 = vadd.f32 %v4288, %v4355
  %v4357 = vpop.f32.mrb[0].mxu0
  %4358 = vmatprep.mubr.f32.mxu0 0.0
  %4359 = vmatmul.mubr.f32.gmra.mrb[0].mxu0 %v4208
  %v4360 = vpop.f32.mrb[0].mxu0
  %v4361 = vadd.f32 %v4288, %v4360
  %v4362 = vpop.f32.mrb[0].mxu0
  %4363 = vdwg.mxu0
  %v4364 = vsub.f32 0.0, %v4356
  %v4365 = vsub.f32 0.0, %v4361
  %v4366 = vmul.f32 %v4364, 1.442695
  %v4367 = vpow.pop %v4366
  %v4368 = vmul.f32 %v4365, 1.442695
  %v4369 = vpow.pop %v4368
  %v4370 = vadd.f32 %v4367, 1.0
  %v4371 = vadd.f32 %v4369, 1.0
  %v4372 = vrcp.pop %v4370
  %v4373 = vmul.f32 1.0, %v4372
  %v4374 = vrcp.pop %v4371
  %v4375 = vmul.f32 1.0, %v4374
  %v4376 = vtanh.pop %v4277
  %v4377 = vtanh.pop %v4282
  %v4378 = vmul.f32 %v4376, %v4373
  %v4379 = vmul.f32 %v4377, %v4375
  %v4380 = vadd.f32 %v4182, %v4378
  %v4381 = vadd.f32 %v4183, %v4379
  %v4382 = vadd.f32 %v4378, %v4198
  %v4383 = vadd.f32 %v4379, %v4199
  %4384 = vst.msk [vmem:[#allocation2 + $0x8] sm:$0xff] %vm34, %v4382
  %4385 = vst.msk [vmem:[#allocation2 + $0x10] sm:$0xff] %vm34, %v4383
  %v4386 = vld [vmem:[%s1911] sm:$0xff]
  %v4387 = vld [vmem:[%s1911 + $0x8] sm:$0xff]
  %v4388 = vld [vmem:[%s1911 + $0x10] sm:$0xff]
  %v4389 = vld [vmem:[%s1911 + $0x18] sm:$0xff]
  %v4390 = vld [vmem:[%s1916] sm:$0xff]
  %v4391 = vld [vmem:[%s1916 + $0x8] sm:$0xff]
  %v4392 = vld [vmem:[%s1916 + $0x10] sm:$0xff]
  %v4393 = vld [vmem:[%s1916 + $0x18] sm:$0xff]
  %v4394 = vld [vmem:[%s5 + $0x6] sm:$0x1]
  %v4395 = vld [vmem:[%s6 + $0x6] sm:$0x1]
  %v4396 = vld [vmem:[#allocation2 + $0x8] sm:$0xff]
  %v4397 = vld [vmem:[#allocation2 + $0x10] sm:$0xff]
  %v4398 = vlaneseq
  %v4399 = vshrl.u32 %v4398, 7
  %v4400 = vsub.s32 0, %v4399
  %v4401 = vrot.slane %v4394, %v4400
  %v4403 = vsel %vm34, %v4396, 0
  %v4406 = vsel %vm34, %v4397, 0
  %4408 = vmatprep.subr.mxu0 0.0
  %4409 = vmatpush1.msra.mxu0 %v4386
  %4410 = vmatprep.subr.mxu0 0.0
  %4411 = vmatpush1.msra.mxu0 %v4387
  %4412 = vmatprep.subr.mxu0 0.0
  %4413 = vmatpush1.msra.mxu0 %v4388
  %4414 = vmatprep.subr.mxu0 0.0
  %4415 = vmatpush1.msra.mxu0 %v4389
  %4416 = vmatprep.subr.mxu0 0.0
  %4417 = vmatpush1.msra.mxu0 0.0
  %4418 = vmatprep.subr.mxu0 0.0
  %4419 = vmatpush1.msra.mxu0 0.0
  %4420 = vmatprep.subr.mxu0 0.0
  %4421 = vmatpush1.msra.mxu0 0.0
  %4422 = vmatprep.subr.mxu0 0.0
  %4423 = vmatpush1.msra.mxu0 0.0
  %4424 = vmatprep.subr.mxu0 0.0
  %4425 = vmatpush1.msra.mxu0 0.0
  %4426 = vmatprep.subr.mxu0 0.0
  %4427 = vmatpush1.msra.mxu0 0.0
  %4428 = vmatprep.subr.mxu0 0.0
  %4429 = vmatpush1.msra.mxu0 0.0
  %4430 = vmatprep.subr.mxu0 0.0
  %4431 = vmatpush1.msra.mxu0 0.0
  %4432 = vmatprep.subr.mxu0 0.0
  %4433 = vmatpush1.msra.mxu0 0.0
  %4434 = vmatprep.subr.mxu0 0.0
  %4435 = vmatpush1.msra.mxu0 0.0
  %4436 = vmatprep.subr.mxu0 0.0
  %4437 = vmatpush1.msra.mxu0 0.0
  %4438 = vmatprep.subr.mxu0 0.0
  %4439 = vmatpush1.msra.mxu0 0.0
  %4440 = vmatprep.subr.mxu0 0.0
  %4441 = vmatpush1.msra.mxu0 0.0
  %4442 = vmatprep.subr.mxu0 0.0
  %4443 = vmatpush1.msra.mxu0 0.0
  %4444 = vmatprep.subr.mxu0 0.0
  %4445 = vmatpush1.msra.mxu0 0.0
  %4446 = vmatprep.subr.mxu0 0.0
  %4447 = vmatpush1.msra.mxu0 0.0
  %4448 = vmatprep.subr.mxu0 0.0
  %4449 = vmatpush1.msra.mxu0 0.0
  %4450 = vmatprep.subr.mxu0 0.0
  %4451 = vmatpush1.msra.mxu0 0.0
  %4452 = vmatprep.subr.mxu0 0.0
  %4453 = vmatpush1.msra.mxu0 0.0
  %4454 = vmatprep.subr.mxu0 0.0
  %4455 = vmatpush1.msra.mxu0 0.0
  %4456 = vmatprep.subr.mxu0 0.0
  %4457 = vmatpush1.msra.mxu0 0.0
  %4458 = vmatprep.subr.mxu0 0.0
  %4459 = vmatpush1.msra.mxu0 0.0
  %4460 = vmatprep.subr.mxu0 0.0
  %4461 = vmatpush1.msra.mxu0 0.0
  %4462 = vmatprep.subr.mxu0 0.0
  %4463 = vmatpush1.msra.mxu0 0.0
  %4464 = vmatprep.subr.mxu0 0.0
  %4465 = vmatpush1.msra.mxu0 0.0
  %4466 = vmatprep.subr.mxu0 0.0
  %4467 = vmatpush1.msra.mxu0 0.0
  %4468 = vmatprep.subr.mxu0 0.0
  %4469 = vmatpush1.msra.mxu0 0.0
  %4470 = vmatprep.subr.mxu0 0.0
  %4471 = vmatpush1.msra.mxu0 0.0
  %4472 = vmatprep.mubr.f32.mxu0 0.0
  %4473 = vmatmul.mubr.f32.gmra.mrb[0].mxu0 %v4403
  %v4474 = vpop.f32.mrb[0].mxu0
  %v4475 = vadd.f32 %v4401, %v4474
  %v4476 = vpop.f32.mrb[0].mxu0
  %4477 = vmatprep.mubr.f32.mxu0 0.0
  %4478 = vmatmul.mubr.f32.gmra.mrb[0].mxu0 %v4406
  %v4479 = vpop.f32.mrb[0].mxu0
  %v4480 = vadd.f32 %v4401, %v4479
  %v4481 = vpop.f32.mrb[0].mxu0
  %4482 = vdwg.mxu0
  %v4483 = vlaneseq
  %v4484 = vshrl.u32 %v4483, 7
  %v4485 = vsub.s32 0, %v4484
  %v4486 = vrot.slane %v4395, %v4485
  %4487 = vmatprep.subr.mxu0 0.0
  %4488 = vmatpush1.msra.mxu0 %v4390
  %4489 = vmatprep.subr.mxu0 0.0
  %4490 = vmatpush1.msra.mxu0 %v4391
  %4491 = vmatprep.subr.mxu0 0.0
  %4492 = vmatpush1.msra.mxu0 %v4392
  %4493 = vmatprep.subr.mxu0 0.0
  %4494 = vmatpush1.msra.mxu0 %v4393
  %4495 = vmatprep.subr.mxu0 0.0
  %4496 = vmatpush1.msra.mxu0 0.0
  %4497 = vmatprep.subr.mxu0 0.0
  %4498 = vmatpush1.msra.mxu0 0.0
  %4499 = vmatprep.subr.mxu0 0.0
  %4500 = vmatpush1.msra.mxu0 0.0
  %4501 = vmatprep.subr.mxu0 0.0
  %4502 = vmatpush1.msra.mxu0 0.0
  %4503 = vmatprep.subr.mxu0 0.0
  %4504 = vmatpush1.msra.mxu0 0.0
  %4505 = vmatprep.subr.mxu0 0.0
  %4506 = vmatpush1.msra.mxu0 0.0
  %4507 = vmatprep.subr.mxu0 0.0
  %4508 = vmatpush1.msra.mxu0 0.0
  %4509 = vmatprep.subr.mxu0 0.0
  %4510 = vmatpush1.msra.mxu0 0.0
  %4511 = vmatprep.subr.mxu0 0.0
  %4512 = vmatpush1.msra.mxu0 0.0
  %4513 = vmatprep.subr.mxu0 0.0
  %4514 = vmatpush1.msra.mxu0 0.0
  %4515 = vmatprep.subr.mxu0 0.0
  %4516 = vmatpush1.msra.mxu0 0.0
  %4517 = vmatprep.subr.mxu0 0.0
  %4518 = vmatpush1.msra.mxu0 0.0
  %4519 = vmatprep.subr.mxu0 0.0
  %4520 = vmatpush1.msra.mxu0 0.0
  %4521 = vmatprep.subr.mxu0 0.0
  %4522 = vmatpush1.msra.mxu0 0.0
  %4523 = vmatprep.subr.mxu0 0.0
  %4524 = vmatpush1.msra.mxu0 0.0
  %4525 = vmatprep.subr.mxu0 0.0
  %4526 = vmatpush1.msra.mxu0 0.0
  %4527 = vmatprep.subr.mxu0 0.0
  %4528 = vmatpush1.msra.mxu0 0.0
  %4529 = vmatprep.subr.mxu0 0.0
  %4530 = vmatpush1.msra.mxu0 0.0
  %4531 = vmatprep.subr.mxu0 0.0
  %4532 = vmatpush1.msra.mxu0 0.0
  %4533 = vmatprep.subr.mxu0 0.0
  %4534 = vmatpush1.msra.mxu0 0.0
  %4535 = vmatprep.subr.mxu0 0.0
  %4536 = vmatpush1.msra.mxu0 0.0
  %4537 = vmatprep.subr.mxu0 0.0
  %4538 = vmatpush1.msra.mxu0 0.0
  %4539 = vmatprep.subr.mxu0 0.0
  %4540 = vmatpush1.msra.mxu0 0.0
  %4541 = vmatprep.subr.mxu0 0.0
  %4542 = vmatpush1.msra.mxu0 0.0
  %4543 = vmatprep.subr.mxu0 0.0
  %4544 = vmatpush1.msra.mxu0 0.0
  %4545 = vmatprep.subr.mxu0 0.0
  %4546 = vmatpush1.msra.mxu0 0.0
  %4547 = vmatprep.subr.mxu0 0.0
  %4548 = vmatpush1.msra.mxu0 0.0
  %4549 = vmatprep.subr.mxu0 0.0
  %4550 = vmatpush1.msra.mxu0 0.0
  %4551 = vmatprep.mubr.f32.mxu0 0.0
  %4552 = vmatmul.mubr.f32.gmra.mrb[0].mxu0 %v4403
  %v4553 = vpop.f32.mrb[0].mxu0
  %v4554 = vadd.f32 %v4486, %v4553
  %v4555 = vpop.f32.mrb[0].mxu0
  %4556 = vmatprep.mubr.f32.mxu0 0.0
  %4557 = vmatmul.mubr.f32.gmra.mrb[0].mxu0 %v4406
  %v4558 = vpop.f32.mrb[0].mxu0
  %v4559 = vadd.f32 %v4486, %v4558
  %v4560 = vpop.f32.mrb[0].mxu0
  %4561 = vdwg.mxu0
  %v4562 = vsub.f32 0.0, %v4554
  %v4563 = vsub.f32 0.0, %v4559
  %v4564 = vmul.f32 %v4562, 1.442695
  %v4565 = vpow.pop %v4564
  %v4566 = vmul.f32 %v4563, 1.442695
  %v4567 = vpow.pop %v4566
  %v4568 = vadd.f32 %v4565, 1.0
  %v4569 = vadd.f32 %v4567, 1.0
  %v4570 = vrcp.pop %v4568
  %v4571 = vmul.f32 1.0, %v4570
  %v4572 = vrcp.pop %v4569
  %v4573 = vmul.f32 1.0, %v4572
  %v4574 = vtanh.pop %v4475
  %v4575 = vtanh.pop %v4480
  %v4576 = vmul.f32 %v4574, %v4571
  %v4577 = vmul.f32 %v4575, %v4573
  %v4578 = vadd.f32 %v4380, %v4576
  %v4579 = vadd.f32 %v4381, %v4577
  %v4580 = vadd.f32 %v4576, %v4396
  %v4581 = vadd.f32 %v4577, %v4397
  %4582 = vst.msk [vmem:[#allocation2 + $0x8] sm:$0xff] %vm34, %v4580
  %4583 = vst.msk [vmem:[#allocation2 + $0x10] sm:$0xff] %vm34, %v4581
  %v4584 = vld [vmem:[%s2111] sm:$0xff]
  %v4585 = vld [vmem:[%s2111 + $0x8] sm:$0xff]
  %v4586 = vld [vmem:[%s2111 + $0x10] sm:$0xff]
  %v4587 = vld [vmem:[%s2111 + $0x18] sm:$0xff]
  %v4588 = vld [vmem:[%s2116] sm:$0xff]
  %v4589 = vld [vmem:[%s2116 + $0x8] sm:$0xff]
  %v4590 = vld [vmem:[%s2116 + $0x10] sm:$0xff]
  %v4591 = vld [vmem:[%s2116 + $0x18] sm:$0xff]
  %v4592 = vld [vmem:[%s5 + $0x7] sm:$0x1]
  %v4593 = vld [vmem:[%s6 + $0x7] sm:$0x1]
  %v4594 = vld [vmem:[#allocation2 + $0x8] sm:$0xff]
  %v4595 = vld [vmem:[#allocation2 + $0x10] sm:$0xff]
  %v4596 = vlaneseq
  %v4597 = vshrl.u32 %v4596, 7
  %v4598 = vsub.s32 0, %v4597
  %v4599 = vrot.slane %v4592, %v4598
  %v4601 = vsel %vm34, %v4594, 0
  %v4604 = vsel %vm34, %v4595, 0
  %4606 = vmatprep.subr.mxu0 0.0
  %4607 = vmatpush1.msra.mxu0 %v4584
  %4608 = vmatprep.subr.mxu0 0.0
  %4609 = vmatpush1.msra.mxu0 %v4585
  %4610 = vmatprep.subr.mxu0 0.0
  %4611 = vmatpush1.msra.mxu0 %v4586
  %4612 = vmatprep.subr.mxu0 0.0
  %4613 = vmatpush1.msra.mxu0 %v4587
  %4614 = vmatprep.subr.mxu0 0.0
  %4615 = vmatpush1.msra.mxu0 0.0
  %4616 = vmatprep.subr.mxu0 0.0
  %4617 = vmatpush1.msra.mxu0 0.0
  %4618 = vmatprep.subr.mxu0 0.0
  %4619 = vmatpush1.msra.mxu0 0.0
  %4620 = vmatprep.subr.mxu0 0.0
  %4621 = vmatpush1.msra.mxu0 0.0
  %4622 = vmatprep.subr.mxu0 0.0
  %4623 = vmatpush1.msra.mxu0 0.0
  %4624 = vmatprep.subr.mxu0 0.0
  %4625 = vmatpush1.msra.mxu0 0.0
  %4626 = vmatprep.subr.mxu0 0.0
  %4627 = vmatpush1.msra.mxu0 0.0
  %4628 = vmatprep.subr.mxu0 0.0
  %4629 = vmatpush1.msra.mxu0 0.0
  %4630 = vmatprep.subr.mxu0 0.0
  %4631 = vmatpush1.msra.mxu0 0.0
  %4632 = vmatprep.subr.mxu0 0.0
  %4633 = vmatpush1.msra.mxu0 0.0
  %4634 = vmatprep.subr.mxu0 0.0
  %4635 = vmatpush1.msra.mxu0 0.0
  %4636 = vmatprep.subr.mxu0 0.0
  %4637 = vmatpush1.msra.mxu0 0.0
  %4638 = vmatprep.subr.mxu0 0.0
  %4639 = vmatpush1.msra.mxu0 0.0
  %4640 = vmatprep.subr.mxu0 0.0
  %4641 = vmatpush1.msra.mxu0 0.0
  %4642 = vmatprep.subr.mxu0 0.0
  %4643 = vmatpush1.msra.mxu0 0.0
  %4644 = vmatprep.subr.mxu0 0.0
  %4645 = vmatpush1.msra.mxu0 0.0
  %4646 = vmatprep.subr.mxu0 0.0
  %4647 = vmatpush1.msra.mxu0 0.0
  %4648 = vmatprep.subr.mxu0 0.0
  %4649 = vmatpush1.msra.mxu0 0.0
  %4650 = vmatprep.subr.mxu0 0.0
  %4651 = vmatpush1.msra.mxu0 0.0
  %4652 = vmatprep.subr.mxu0 0.0
  %4653 = vmatpush1.msra.mxu0 0.0
  %4654 = vmatprep.subr.mxu0 0.0
  %4655 = vmatpush1.msra.mxu0 0.0
  %4656 = vmatprep.subr.mxu0 0.0
  %4657 = vmatpush1.msra.mxu0 0.0
  %4658 = vmatprep.subr.mxu0 0.0
  %4659 = vmatpush1.msra.mxu0 0.0
  %4660 = vmatprep.subr.mxu0 0.0
  %4661 = vmatpush1.msra.mxu0 0.0
  %4662 = vmatprep.subr.mxu0 0.0
  %4663 = vmatpush1.msra.mxu0 0.0
  %4664 = vmatprep.subr.mxu0 0.0
  %4665 = vmatpush1.msra.mxu0 0.0
  %4666 = vmatprep.subr.mxu0 0.0
  %4667 = vmatpush1.msra.mxu0 0.0
  %4668 = vmatprep.subr.mxu0 0.0
  %4669 = vmatpush1.msra.mxu0 0.0
  %4670 = vmatprep.mubr.f32.mxu0 0.0
  %4671 = vmatmul.mubr.f32.gmra.mrb[0].mxu0 %v4601
  %v4672 = vpop.f32.mrb[0].mxu0
  %v4673 = vadd.f32 %v4599, %v4672
  %v4674 = vpop.f32.mrb[0].mxu0
  %4675 = vmatprep.mubr.f32.mxu0 0.0
  %4676 = vmatmul.mubr.f32.gmra.mrb[0].mxu0 %v4604
  %v4677 = vpop.f32.mrb[0].mxu0
  %v4678 = vadd.f32 %v4599, %v4677
  %v4679 = vpop.f32.mrb[0].mxu0
  %4680 = vdwg.mxu0
  %v4681 = vlaneseq
  %v4682 = vshrl.u32 %v4681, 7
  %v4683 = vsub.s32 0, %v4682
  %v4684 = vrot.slane %v4593, %v4683
  %4685 = vmatprep.subr.mxu0 0.0
  %4686 = vmatpush1.msra.mxu0 %v4588
  %4687 = vmatprep.subr.mxu0 0.0
  %4688 = vmatpush1.msra.mxu0 %v4589
  %4689 = vmatprep.subr.mxu0 0.0
  %4690 = vmatpush1.msra.mxu0 %v4590
  %4691 = vmatprep.subr.mxu0 0.0
  %4692 = vmatpush1.msra.mxu0 %v4591
  %4693 = vmatprep.subr.mxu0 0.0
  %4694 = vmatpush1.msra.mxu0 0.0
  %4695 = vmatprep.subr.mxu0 0.0
  %4696 = vmatpush1.msra.mxu0 0.0
  %4697 = vmatprep.subr.mxu0 0.0
  %4698 = vmatpush1.msra.mxu0 0.0
  %4699 = vmatprep.subr.mxu0 0.0
  %4700 = vmatpush1.msra.mxu0 0.0
  %4701 = vmatprep.subr.mxu0 0.0
  %4702 = vmatpush1.msra.mxu0 0.0
  %4703 = vmatprep.subr.mxu0 0.0
  %4704 = vmatpush1.msra.mxu0 0.0
  %4705 = vmatprep.subr.mxu0 0.0
  %4706 = vmatpush1.msra.mxu0 0.0
  %4707 = vmatprep.subr.mxu0 0.0
  %4708 = vmatpush1.msra.mxu0 0.0
  %4709 = vmatprep.subr.mxu0 0.0
  %4710 = vmatpush1.msra.mxu0 0.0
  %4711 = vmatprep.subr.mxu0 0.0
  %4712 = vmatpush1.msra.mxu0 0.0
  %4713 = vmatprep.subr.mxu0 0.0
  %4714 = vmatpush1.msra.mxu0 0.0
  %4715 = vmatprep.subr.mxu0 0.0
  %4716 = vmatpush1.msra.mxu0 0.0
  %4717 = vmatprep.subr.mxu0 0.0
  %4718 = vmatpush1.msra.mxu0 0.0
  %4719 = vmatprep.subr.mxu0 0.0
  %4720 = vmatpush1.msra.mxu0 0.0
  %4721 = vmatprep.subr.mxu0 0.0
  %4722 = vmatpush1.msra.mxu0 0.0
  %4723 = vmatprep.subr.mxu0 0.0
  %4724 = vmatpush1.msra.mxu0 0.0
  %4725 = vmatprep.subr.mxu0 0.0
  %4726 = vmatpush1.msra.mxu0 0.0
  %4727 = vmatprep.subr.mxu0 0.0
  %4728 = vmatpush1.msra.mxu0 0.0
  %4729 = vmatprep.subr.mxu0 0.0
  %4730 = vmatpush1.msra.mxu0 0.0
  %4731 = vmatprep.subr.mxu0 0.0
  %4732 = vmatpush1.msra.mxu0 0.0
  %4733 = vmatprep.subr.mxu0 0.0
  %4734 = vmatpush1.msra.mxu0 0.0
  %4735 = vmatprep.subr.mxu0 0.0
  %4736 = vmatpush1.msra.mxu0 0.0
  %4737 = vmatprep.subr.mxu0 0.0
  %4738 = vmatpush1.msra.mxu0 0.0
  %4739 = vmatprep.subr.mxu0 0.0
  %4740 = vmatpush1.msra.mxu0 0.0
  %4741 = vmatprep.subr.mxu0 0.0
  %4742 = vmatpush1.msra.mxu0 0.0
  %4743 = vmatprep.subr.mxu0 0.0
  %4744 = vmatpush1.msra.mxu0 0.0
  %4745 = vmatprep.subr.mxu0 0.0
  %4746 = vmatpush1.msra.mxu0 0.0
  %4747 = vmatprep.subr.mxu0 0.0
  %4748 = vmatpush1.msra.mxu0 0.0
  %4749 = vmatprep.mubr.f32.mxu0 0.0
  %4750 = vmatmul.mubr.f32.gmra.mrb[0].mxu0 %v4601
  %v4751 = vpop.f32.mrb[0].mxu0
  %v4752 = vadd.f32 %v4684, %v4751
  %v4753 = vpop.f32.mrb[0].mxu0
  %4754 = vmatprep.mubr.f32.mxu0 0.0
  %4755 = vmatmul.mubr.f32.gmra.mrb[0].mxu0 %v4604
  %v4756 = vpop.f32.mrb[0].mxu0
  %v4757 = vadd.f32 %v4684, %v4756
  %v4758 = vpop.f32.mrb[0].mxu0
  %4759 = vdwg.mxu0
  %v4760 = vsub.f32 0.0, %v4752
  %v4761 = vsub.f32 0.0, %v4757
  %v4762 = vmul.f32 %v4760, 1.442695
  %v4763 = vpow.pop %v4762
  %v4764 = vmul.f32 %v4761, 1.442695
  %v4765 = vpow.pop %v4764
  %v4766 = vadd.f32 %v4763, 1.0
  %v4767 = vadd.f32 %v4765, 1.0
  %v4768 = vrcp.pop %v4766
  %v4769 = vmul.f32 1.0, %v4768
  %v4770 = vrcp.pop %v4767
  %v4771 = vmul.f32 1.0, %v4770
  %v4772 = vtanh.pop %v4673
  %v4773 = vtanh.pop %v4678
  %v4774 = vmul.f32 %v4772, %v4769
  %v4775 = vmul.f32 %v4773, %v4771
  %v4776 = vadd.f32 %v4578, %v4774
  %v4777 = vadd.f32 %v4579, %v4775
  %v4778 = vadd.f32 %v4774, %v4594
  %v4779 = vadd.f32 %v4775, %v4595
  %4780 = vst.msk [vmem:[#allocation2 + $0x8] sm:$0xff] %vm34, %v4778
  %4781 = vst.msk [vmem:[#allocation2 + $0x10] sm:$0xff] %vm34, %v4779
  %v4782 = vld [vmem:[%s2311] sm:$0xff]
  %v4783 = vld [vmem:[%s2311 + $0x8] sm:$0xff]
  %v4784 = vld [vmem:[%s2311 + $0x10] sm:$0xff]
  %v4785 = vld [vmem:[%s2311 + $0x18] sm:$0xff]
  %v4786 = vld [vmem:[%s2316] sm:$0xff]
  %v4787 = vld [vmem:[%s2316 + $0x8] sm:$0xff]
  %v4788 = vld [vmem:[%s2316 + $0x10] sm:$0xff]
  %v4789 = vld [vmem:[%s2316 + $0x18] sm:$0xff]
  %v4790 = vld [vmem:[%s5 + $0x8] sm:$0x1]
  %v4791 = vld [vmem:[%s6 + $0x8] sm:$0x1]
  %v4792 = vld [vmem:[#allocation2 + $0x8] sm:$0xff]
  %v4793 = vld [vmem:[#allocation2 + $0x10] sm:$0xff]
  %v4794 = vlaneseq
  %v4795 = vshrl.u32 %v4794, 7
  %v4796 = vsub.s32 0, %v4795
  %v4797 = vrot.slane %v4790, %v4796
  %v4799 = vsel %vm34, %v4792, 0
  %v4802 = vsel %vm34, %v4793, 0
  %4804 = vmatprep.subr.mxu0 0.0
  %4805 = vmatpush1.msra.mxu0 %v4782
  %4806 = vmatprep.subr.mxu0 0.0
  %4807 = vmatpush1.msra.mxu0 %v4783
  %4808 = vmatprep.subr.mxu0 0.0
  %4809 = vmatpush1.msra.mxu0 %v4784
  %4810 = vmatprep.subr.mxu0 0.0
  %4811 = vmatpush1.msra.mxu0 %v4785
  %4812 = vmatprep.subr.mxu0 0.0
  %4813 = vmatpush1.msra.mxu0 0.0
  %4814 = vmatprep.subr.mxu0 0.0
  %4815 = vmatpush1.msra.mxu0 0.0
  %4816 = vmatprep.subr.mxu0 0.0
  %4817 = vmatpush1.msra.mxu0 0.0
  %4818 = vmatprep.subr.mxu0 0.0
  %4819 = vmatpush1.msra.mxu0 0.0
  %4820 = vmatprep.subr.mxu0 0.0
  %4821 = vmatpush1.msra.mxu0 0.0
  %4822 = vmatprep.subr.mxu0 0.0
  %4823 = vmatpush1.msra.mxu0 0.0
  %4824 = vmatprep.subr.mxu0 0.0
  %4825 = vmatpush1.msra.mxu0 0.0
  %4826 = vmatprep.subr.mxu0 0.0
  %4827 = vmatpush1.msra.mxu0 0.0
  %4828 = vmatprep.subr.mxu0 0.0
  %4829 = vmatpush1.msra.mxu0 0.0
  %4830 = vmatprep.subr.mxu0 0.0
  %4831 = vmatpush1.msra.mxu0 0.0
  %4832 = vmatprep.subr.mxu0 0.0
  %4833 = vmatpush1.msra.mxu0 0.0
  %4834 = vmatprep.subr.mxu0 0.0
  %4835 = vmatpush1.msra.mxu0 0.0
  %4836 = vmatprep.subr.mxu0 0.0
  %4837 = vmatpush1.msra.mxu0 0.0
  %4838 = vmatprep.subr.mxu0 0.0
  %4839 = vmatpush1.msra.mxu0 0.0
  %4840 = vmatprep.subr.mxu0 0.0
  %4841 = vmatpush1.msra.mxu0 0.0
  %4842 = vmatprep.subr.mxu0 0.0
  %4843 = vmatpush1.msra.mxu0 0.0
  %4844 = vmatprep.subr.mxu0 0.0
  %4845 = vmatpush1.msra.mxu0 0.0
  %4846 = vmatprep.subr.mxu0 0.0
  %4847 = vmatpush1.msra.mxu0 0.0
  %4848 = vmatprep.subr.mxu0 0.0
  %4849 = vmatpush1.msra.mxu0 0.0
  %4850 = vmatprep.subr.mxu0 0.0
  %4851 = vmatpush1.msra.mxu0 0.0
  %4852 = vmatprep.subr.mxu0 0.0
  %4853 = vmatpush1.msra.mxu0 0.0
  %4854 = vmatprep.subr.mxu0 0.0
  %4855 = vmatpush1.msra.mxu0 0.0
  %4856 = vmatprep.subr.mxu0 0.0
  %4857 = vmatpush1.msra.mxu0 0.0
  %4858 = vmatprep.subr.mxu0 0.0
  %4859 = vmatpush1.msra.mxu0 0.0
  %4860 = vmatprep.subr.mxu0 0.0
  %4861 = vmatpush1.msra.mxu0 0.0
  %4862 = vmatprep.subr.mxu0 0.0
  %4863 = vmatpush1.msra.mxu0 0.0
  %4864 = vmatprep.subr.mxu0 0.0
  %4865 = vmatpush1.msra.mxu0 0.0
  %4866 = vmatprep.subr.mxu0 0.0
  %4867 = vmatpush1.msra.mxu0 0.0
  %4868 = vmatprep.mubr.f32.mxu0 0.0
  %4869 = vmatmul.mubr.f32.gmra.mrb[0].mxu0 %v4799
  %v4870 = vpop.f32.mrb[0].mxu0
  %v4871 = vadd.f32 %v4797, %v4870
  %v4872 = vpop.f32.mrb[0].mxu0
  %4873 = vmatprep.mubr.f32.mxu0 0.0
  %4874 = vmatmul.mubr.f32.gmra.mrb[0].mxu0 %v4802
  %v4875 = vpop.f32.mrb[0].mxu0
  %v4876 = vadd.f32 %v4797, %v4875
  %v4877 = vpop.f32.mrb[0].mxu0
  %4878 = vdwg.mxu0
  %v4879 = vlaneseq
  %v4880 = vshrl.u32 %v4879, 7
  %v4881 = vsub.s32 0, %v4880
  %v4882 = vrot.slane %v4791, %v4881
  %4883 = vmatprep.subr.mxu0 0.0
  %4884 = vmatpush1.msra.mxu0 %v4786
  %4885 = vmatprep.subr.mxu0 0.0
  %4886 = vmatpush1.msra.mxu0 %v4787
  %4887 = vmatprep.subr.mxu0 0.0
  %4888 = vmatpush1.msra.mxu0 %v4788
  %4889 = vmatprep.subr.mxu0 0.0
  %4890 = vmatpush1.msra.mxu0 %v4789
  %4891 = vmatprep.subr.mxu0 0.0
  %4892 = vmatpush1.msra.mxu0 0.0
  %4893 = vmatprep.subr.mxu0 0.0
  %4894 = vmatpush1.msra.mxu0 0.0
  %4895 = vmatprep.subr.mxu0 0.0
  %4896 = vmatpush1.msra.mxu0 0.0
  %4897 = vmatprep.subr.mxu0 0.0
  %4898 = vmatpush1.msra.mxu0 0.0
  %4899 = vmatprep.subr.mxu0 0.0
  %4900 = vmatpush1.msra.mxu0 0.0
  %4901 = vmatprep.subr.mxu0 0.0
  %4902 = vmatpush1.msra.mxu0 0.0
  %4903 = vmatprep.subr.mxu0 0.0
  %4904 = vmatpush1.msra.mxu0 0.0
  %4905 = vmatprep.subr.mxu0 0.0
  %4906 = vmatpush1.msra.mxu0 0.0
  %4907 = vmatprep.subr.mxu0 0.0
  %4908 = vmatpush1.msra.mxu0 0.0
  %4909 = vmatprep.subr.mxu0 0.0
  %4910 = vmatpush1.msra.mxu0 0.0
  %4911 = vmatprep.subr.mxu0 0.0
  %4912 = vmatpush1.msra.mxu0 0.0
  %4913 = vmatprep.subr.mxu0 0.0
  %4914 = vmatpush1.msra.mxu0 0.0
  %4915 = vmatprep.subr.mxu0 0.0
  %4916 = vmatpush1.msra.mxu0 0.0
  %4917 = vmatprep.subr.mxu0 0.0
  %4918 = vmatpush1.msra.mxu0 0.0
  %4919 = vmatprep.subr.mxu0 0.0
  %4920 = vmatpush1.msra.mxu0 0.0
  %4921 = vmatprep.subr.mxu0 0.0
  %4922 = vmatpush1.msra.mxu0 0.0
  %4923 = vmatprep.subr.mxu0 0.0
  %4924 = vmatpush1.msra.mxu0 0.0
  %4925 = vmatprep.subr.mxu0 0.0
  %4926 = vmatpush1.msra.mxu0 0.0
  %4927 = vmatprep.subr.mxu0 0.0
  %4928 = vmatpush1.msra.mxu0 0.0
  %4929 = vmatprep.subr.mxu0 0.0
  %4930 = vmatpush1.msra.mxu0 0.0
  %4931 = vmatprep.subr.mxu0 0.0
  %4932 = vmatpush1.msra.mxu0 0.0
  %4933 = vmatprep.subr.mxu0 0.0
  %4934 = vmatpush1.msra.mxu0 0.0
  %4935 = vmatprep.subr.mxu0 0.0
  %4936 = vmatpush1.msra.mxu0 0.0
  %4937 = vmatprep.subr.mxu0 0.0
  %4938 = vmatpush1.msra.mxu0 0.0
  %4939 = vmatprep.subr.mxu0 0.0
  %4940 = vmatpush1.msra.mxu0 0.0
  %4941 = vmatprep.subr.mxu0 0.0
  %4942 = vmatpush1.msra.mxu0 0.0
  %4943 = vmatprep.subr.mxu0 0.0
  %4944 = vmatpush1.msra.mxu0 0.0
  %4945 = vmatprep.subr.mxu0 0.0
  %4946 = vmatpush1.msra.mxu0 0.0
  %4947 = vmatprep.mubr.f32.mxu0 0.0
  %4948 = vmatmul.mubr.f32.gmra.mrb[0].mxu0 %v4799
  %v4949 = vpop.f32.mrb[0].mxu0
  %v4950 = vadd.f32 %v4882, %v4949
  %v4951 = vpop.f32.mrb[0].mxu0
  %4952 = vmatprep.mubr.f32.mxu0 0.0
  %4953 = vmatmul.mubr.f32.gmra.mrb[0].mxu0 %v4802
  %v4954 = vpop.f32.mrb[0].mxu0
  %v4955 = vadd.f32 %v4882, %v4954
  %v4956 = vpop.f32.mrb[0].mxu0
  %4957 = vdwg.mxu0
  %v4958 = vsub.f32 0.0, %v4950
  %v4959 = vsub.f32 0.0, %v4955
  %v4960 = vmul.f32 %v4958, 1.442695
  %v4961 = vpow.pop %v4960
  %v4962 = vmul.f32 %v4959, 1.442695
  %v4963 = vpow.pop %v4962
  %v4964 = vadd.f32 %v4961, 1.0
  %v4965 = vadd.f32 %v4963, 1.0
  %v4966 = vrcp.pop %v4964
  %v4967 = vmul.f32 1.0, %v4966
  %v4968 = vrcp.pop %v4965
  %v4969 = vmul.f32 1.0, %v4968
  %v4970 = vtanh.pop %v4871
  %v4971 = vtanh.pop %v4876
  %v4972 = vmul.f32 %v4970, %v4967
  %v4973 = vmul.f32 %v4971, %v4969
  %v4974 = vadd.f32 %v4776, %v4972
  %v4975 = vadd.f32 %v4777, %v4973
  %v4976 = vmul.f32 %v4974, %v2511
  %v4977 = vmul.f32 %v4975, %v2511
  %v4978 = vsel %vm34, %v4976, 0.0
  %4979 = vadd.xlane.f32.xlu0 %v4978
  %v4980 = vpop.xlane.xlu0 %4979
  %v4981 = vsel %vm34, %v4977, 0.0
  %4982 = vadd.xlane.f32.xlu0 %v4981
  %v4983 = vpop.xlane.xlu0 %4982
  %v4984 = vadd.f32 %v4980, %v2525
  %v4985 = vadd.f32 %v4983, %v2525
  %4986 = vst.msk [vmem:[%s9 + $0x10] sm:$0xff] %vm2529, %v4984
  %4987 = vst.msk [vmem:[%s9 + $0x18] sm:$0xff] %vm2529, %v4985
  // Predicated region
  $region38: #{ar_discriminator_forward.1} parent=0 // pred_check
    _
  $region39: #{ar_discriminator_forward.1} parent=0 // pred_check_branch
    %4989 = sbr.rel (0) target = $region41
  $region40: #{ar_discriminator_forward.1} parent=0 // pred_region
    _
  $region41: #{ar_discriminator_forward.1} parent=0 // pred_fallthru
    _
  // Predicated region
  $region42: #{ar_discriminator_forward.1} parent=0 // pred_check
    _
  $region43: #{ar_discriminator_forward.1} parent=0 // pred_check_branch
    %4991 = sbr.rel (0) target = $region45
  $region44: #{ar_discriminator_forward.1} parent=0 // pred_region
    _
  $region45: #{ar_discriminator_forward.1} parent=0 // pred_fallthru
    _

</llo_original>
